<compile_context>
chip_gen: v7x
topology: tpu7x:2x2x1
jax: 0.10.0
libtpu: 0.0.40
codegen_flags: <defaults>
</compile_context>

<pallas_src>
import numpy as np

import jax
import jax.numpy as jnp
from jax import lax
from jax.experimental import pallas as pl
from jax.experimental.pallas import tpu as pltpu

# ----------------------------- configuration ------------------------------
EMB_DIM = 32
VOCAB = 100
CONV_HIDDEN = 8          # per-kernel-size conv channels; sentence vec = 3*CONV_HIDDEN
LSTM_HIDDEN = 16
LSTM_LAYER = 1
BIDIRECTIONAL = True
N_HOP = 1
DROPOUT = 0.0            # forward/eval: no-op

B = 2                    # batch (articles)
MAX_N = 5                # max sentences per article (encoder "time")
SENT_LEN = 10            # words per sentence
NT = 3                   # target length
SENT_NUMS = [5, 4]

NUM_DIR = 2 if BIDIRECTIONAL else 1
ENC_OUT_DIM = LSTM_HIDDEN * NUM_DIR
NQ = NT + 1
C3 = 3 * CONV_HIDDEN

assert LSTM_LAYER == 1 and BIDIRECTIONAL
# TODO(synk): multi-layer LSTM stacks would extend the unrolled recurrences in-kernel.

# derived static sizes for the fused conv stage
NS = B * MAX_N                                  # total (padded) sentences = 10
SELW = (NS - 1) * SENT_LEN + 1                  # selector width, covers column n*L
NLC = SELW + (SENT_LEN - 3)                     # conv rows computed (max shift p = L-3)
IDS_PAD = ((NLC + 4 + 7) // 8) * 8              # padded flat word-id rows (max tap j = 4)

# constant row selector: output row m = t*B + b (time-major)  <-  flat sentence
# n = b*MAX_N + t; a one at column n*L picks conv position p when applied to a
# p-shifted slice of the conv activations.
_SEL0 = np.zeros((NS, SELW), np.float32)
for _m in range(NS):
    _b, _t = _m % B, _m // B
    _SEL0[_m, (_b * MAX_N + _t) * SENT_LEN] = 1.0


# ----------------------------- kernel helpers ------------------------------
def _sigmoid(x):
    # exact: sigma(x) = 0.5*(tanh(x/2)+1) -> one wide EUP tanh, no approx reciprocal.
    return 0.5 * (jnp.tanh(0.5 * x) + 1.0)


# ----------------------------- fused Pallas kernel --------------------------
def fused_ptrext_kernel(
        lens_ref, tgt_ref,                                        # SMEM scalars
        ids_ref, emb_ref, wsh_ref, bconv_ref, sel_ref,            # conv stage
        wihc_ref, whhbd_ref, bcat_ref, eh0_ref, ec0_ref,          # bi-LSTM encoder
        wihp_ref, whhp_ref, bp_ref, ph0_ref, pc0_ref, pi_ref,     # pointer LSTM
        awm_ref, awq_ref, av_ref, hwm_ref, hwq_ref, hv_ref,       # attention params
        out_ref,                                                  # [B*NQ, MAX_N]
        enc_scr):                                                 # VMEM scratch [T*B, 2H]
    H = LSTM_HIDDEN
    L = SENT_LEN
    T = MAX_N

    # ---------------- stage 1: ConvSentEncoder (all sentences, all k fused) --------
    ids = ids_ref[...]                                                   # [IDS_PAD, 1] i32
    vcol = lax.broadcasted_iota(jnp.int32, (IDS_PAD, VOCAB), 1)
    onehot = (ids == vcol).astype(jnp.float32)                           # [IDS_PAD, V]
    emb = jnp.dot(onehot, emb_ref[...], preferred_element_type=jnp.float32)

    acc = jnp.zeros((NLC, C3), jnp.float32)
    for j in range(5):                                  # k=3/4/5 fused: 5 shifted matmuls
        acc = acc + jnp.dot(emb[j:j + NLC, :], wsh_ref[j],
                            preferred_element_type=jnp.float32)
    relu = jnp.maximum(acc + bconv_ref[...], 0.0)                        # [NLC, 3C]

    sel0 = sel_ref[...]                                                  # [NS, SELW]
    colg = lax.broadcasted_iota(jnp.int32, (1, C3), 1)
    pooled = None
    for p in range(L - 3 + 1):                          # max-over-time, 8 shifted selectors
        v = jnp.dot(sel0, relu[p:p + SELW, :], preferred_element_type=jnp.float32)
        top_valid = L - 3 - p                           # largest kernel group still valid
        if top_valid < 2:                               # zero groups whose window overruns
            v = jnp.where(colg < (top_valid + 1) * CONV_HIDDEN, v, 0.0)  # relu>=0 -> safe
        pooled = v if pooled is None else jnp.maximum(pooled, v)
    # pooled: [NS, 3C], time-major (row = t*B + b)

    # ---------------- stage 2: bidirectional LSTM encoder (packed-seq semantics) ----
    gx = jnp.dot(pooled, wihc_ref[...], preferred_element_type=jnp.float32) + bcat_ref[...]
    whh_bd = whhbd_ref[...]                                              # [2H, 8H] blockdiag

    blens = jnp.concatenate(
        [jnp.zeros((1, 1), jnp.int32) + lens_ref[b] for b in range(B)], axis=0)   # [B, 1]

    zeros_bh = jnp.zeros((B, H), jnp.float32)
    h_f = eh0_ref[0:1, :] + zeros_bh
    c_f = ec0_ref[0:1, :] + zeros_bh
    h_b = eh0_ref[1:2, :] + zeros_bh
    c_b = ec0_ref[1:2, :] + zeros_bh

    outs_f = [None] * T
    outs_b = [None] * T
    for s in range(T):                                                   # fully unrolled
        tb = T - 1 - s
        h_cat = jnp.concatenate([h_f, h_b], axis=1)                      # [B, 2H]
        g = jnp.concatenate([gx[s * B:(s + 1) * B, 0:4 * H],
                             gx[tb * B:(tb + 1) * B, 4 * H:8 * H]], axis=1)
        g = g + jnp.dot(h_cat, whh_bd, preferred_element_type=jnp.float32)  # [B, 8H]
        sg = _sigmoid(g)                                                 # one wide tanh
        tg = jnp.tanh(g)                                                 # one wide tanh
        c_f_new = sg[:, H:2 * H] * c_f + sg[:, 0:H] * tg[:, 2 * H:3 * H]
        h_f_new = sg[:, 3 * H:4 * H] * jnp.tanh(c_f_new)
        c_b_new = sg[:, 5 * H:6 * H] * c_b + sg[:, 4 * H:5 * H] * tg[:, 6 * H:7 * H]
        h_b_new = sg[:, 7 * H:8 * H] * jnp.tanh(c_b_new)

        m_f = (blens > s).astype(jnp.float32)                            # [B, 1]
        m_b = (blens > tb).astype(jnp.float32)
        h_f = m_f * h_f_new + (1.0 - m_f) * h_f
        c_f = m_f * c_f_new + (1.0 - m_f) * c_f
        h_b = m_b * h_b_new + (1.0 - m_b) * h_b
        c_b = m_b * c_b_new + (1.0 - m_b) * c_b
        outs_f[s] = h_f * m_f
        outs_b[tb] = h_b * m_b

    enc_tm = jnp.concatenate(
        [jnp.concatenate([outs_f[t], outs_b[t]], axis=1) for t in range(T)], axis=0)
    enc_scr[...] = enc_tm                               # [T*B, 2H] time-major, for gather

    # ---------------- stage 3: LSTMPointerNet --------------------------------------
    De = ENC_OUT_DIM
    init_row = pi_ref[...]                                               # [1, De]
    rows = [init_row for _ in range(B)]                                  # step 0: init_i
    for j in range(NT):
        for b in range(B):
            idx = tgt_ref[b * NT + j] * B + b                            # time-major row
            rows.append(enc_scr[pl.ds(idx, 1), :])                       # dynamic gather
    x_all = jnp.concatenate(rows, axis=0)                                # [NQ*B, De]
    gxp = jnp.dot(x_all, wihp_ref[...], preferred_element_type=jnp.float32) + bp_ref[...]

    whh_p = whhp_ref[...]
    h = jnp.zeros((B, H), jnp.float32) + ph0_ref[...]
    c = jnp.zeros((B, H), jnp.float32) + pc0_ref[...]
    q_steps = []
    for j in range(NQ):                                                  # unrolled decoder
        g = gxp[j * B:(j + 1) * B, :] + jnp.dot(h, whh_p,
                                                preferred_element_type=jnp.float32)
        sg = _sigmoid(g)
        c = sg[:, H:2 * H] * c + sg[:, 0:H] * jnp.tanh(g[:, 2 * H:3 * H])
        h = sg[:, 3 * H:4 * H] * jnp.tanh(c)
        q_steps.append(h)                                                # [B, H]

    # attention features, batch-major via static row re-ordering (no selector matmuls)
    enc_bm = jnp.concatenate(
        [enc_tm[t * B + b:t * B + b + 1, :] for b in range(B) for t in range(T)], axis=0)
    attn_feat = jnp.dot(enc_bm, awm_ref[...], preferred_element_type=jnp.float32)  # [B*T,H]
    hop_feat = jnp.dot(enc_bm, hwm_ref[...], preferred_element_type=jnp.float32)

    av = av_ref[...]                                                     # [1, H]
    hv = hv_ref[...]
    pos = lax.broadcasted_iota(jnp.int32, (NQ, T), 1)
    neg = jnp.float32(-1e18)

    def batched_score(qw, feat, v):
        # score[q, s] = v . tanh(feat[s] + qw[q]) for all (q, s) in one shot.
        t3 = jnp.tanh(qw[:, None, :] + feat[None, :, :])                 # [NQ, T, H]
        return jnp.sum(t3 * v[None, :, :], axis=-1)                      # [NQ, T]

    out_rows = []
    for b in range(B):                                                   # static, B = 2
        af_b = attn_feat[b * T:(b + 1) * T, :]                           # [T, H]
        hf_b = hop_feat[b * T:(b + 1) * T, :]
        q_b = jnp.concatenate([q_steps[j][b:b + 1, :] for j in range(NQ)], axis=0)
        valid = pos < lens_ref[b]                                        # [NQ, T]
        for _ in range(N_HOP):                                           # masked glimpses
            qw = jnp.dot(q_b, hwq_ref[...], preferred_element_type=jnp.float32)
            score = batched_score(qw, hf_b, hv)
            score = jnp.where(valid, score, neg)
            score = score - jnp.max(score, axis=-1, keepdims=True)
            e = jnp.exp(score)
            prob = e / jnp.sum(e, axis=-1, keepdims=True)                # exact normalize
            q_b = jnp.dot(prob, hf_b, preferred_element_type=jnp.float32)
        qw = jnp.dot(q_b, awq_ref[...], preferred_element_type=jnp.float32)
        out_rows.append(batched_score(qw, af_b, av))                     # unmasked (matches ref)
    out_ref[...] = jnp.concatenate(out_rows, axis=0)                     # ONE [B*NQ, T] store


# ----------------------------- parameter packing (one-time) -----------------
def prepare_params(params):
    """One-time packing of weights into the kernel-ready layout: transposes, bias sums,
    fwd|bwd concatenation, block-diagonal w_hh, fused per-shift conv weights."""
    H = LSTM_HIDDEN
    C = CONV_HIDDEN
    E = EMB_DIM

    shift_blocks = []
    for j in range(5):
        cols = []
        for g, k in enumerate((3, 4, 5)):
            w = params['convs'][g]['w']                                  # [C, E, k]
            cols.append(w[:, :, j].T if j < k else jnp.zeros((E, C), jnp.float32))
        shift_blocks.append(jnp.concatenate(cols, axis=1))               # [E, 3C]
    w_shift = jnp.stack(shift_blocks, axis=0)                            # [5, E, 3C]
    b_conv = jnp.concatenate([params['convs'][g]['b'] for g in range(3)]).reshape(1, C3)

    wf = params['enc_lstm'][0]['fwd']
    wb = params['enc_lstm'][0]['bwd']
    wih_cat = jnp.concatenate([wf['w_ih'].T, wb['w_ih'].T], axis=1)      # [Din, 8H]
    b_cat = jnp.concatenate([wf['b_ih'] + wf['b_hh'],
                             wb['b_ih'] + wb['b_hh']]).reshape(1, 8 * H)
    zhh = jnp.zeros((H, 4 * H), jnp.float32)
    whh_bd = jnp.concatenate(
        [jnp.concatenate([wf['w_hh'].T, zhh], axis=1),
         jnp.concatenate([zhh, wb['w_hh'].T], axis=1)], axis=0)          # [2H, 8H]

    wp = params['ptr_lstm'][0]
    return dict(
        emb=params['embedding'],
        w_shift=w_shift, b_conv=b_conv, sel0=jnp.asarray(_SEL0),
        wih_cat=wih_cat, whh_bd=whh_bd, b_cat=b_cat,
        eh0=params['enc_init_h'], ec0=params['enc_init_c'],
        wih_p=wp['w_ih'].T, whh_p=wp['w_hh'].T,
        b_p=(wp['b_ih'] + wp['b_hh']).reshape(1, 4 * H),
        ph0=params['ptr_init_h'], pc0=params['ptr_init_c'],
        pi=params['ptr_init_i'].reshape(1, ENC_OUT_DIM),
        awm=params['attn_wm'], awq=params['attn_wq'], av=params['attn_v'].reshape(1, H),
        hwm=params['hop_wm'], hwq=params['hop_wq'], hv=params['hop_v'].reshape(1, H),
    )


# ----------------------------- forward wrapper -------------------------------
_VMEM = pl.BlockSpec(memory_space=pltpu.MemorySpace.VMEM)
_SMEM = pl.BlockSpec(memory_space=pltpu.MemorySpace.SMEM)


@jax.jit
def ptr_extract_summ_forward(prep, article_words, sent_nums, target):
    """article_words: [B, MAX_N, L] int32 (padded); sent_nums: [B]; target: [B, NT]."""
    flat = article_words.astype(jnp.int32).reshape(-1)
    ids = jnp.concatenate(
        [flat, jnp.zeros((IDS_PAD - flat.shape[0],), jnp.int32)]).reshape(IDS_PAD, 1)
    lens = sent_nums.astype(jnp.int32).reshape(B)
    tgt = target.astype(jnp.int32).reshape(B * NT)

    out = pl.pallas_call(
        fused_ptrext_kernel,
        out_shape=jax.ShapeDtypeStruct((B * NQ, MAX_N), jnp.float32),
        in_specs=[_SMEM, _SMEM] + [_VMEM] * 22,
        out_specs=_VMEM,
        scratch_shapes=[pltpu.VMEM((MAX_N * B, ENC_OUT_DIM), jnp.float32)],
    )(lens, tgt, ids,
      prep['emb'], prep['w_shift'], prep['b_conv'], prep['sel0'],
      prep['wih_cat'], prep['whh_bd'], prep['b_cat'], prep['eh0'], prep['ec0'],
      prep['wih_p'], prep['whh_p'], prep['b_p'], prep['ph0'], prep['pc0'], prep['pi'],
      prep['awm'], prep['awq'], prep['av'], prep['hwm'], prep['hwq'], prep['hv'])
    return out.reshape(B, NQ, MAX_N)


# ----------------------------- parameters -----------------------------------
def init_params(key):
    keys = iter(jax.random.split(key, 64))

    def u(shape, scale=0.1):
        return jax.random.uniform(next(keys), shape, jnp.float32, -scale, scale)

    H = LSTM_HIDDEN
    params = {}
    emb = u((VOCAB, EMB_DIM))
    params['embedding'] = emb.at[0].set(0.0)                  # padding_idx=0

    params['convs'] = [{'w': u((CONV_HIDDEN, EMB_DIM, k)), 'b': u((CONV_HIDDEN,))}
                       for k in (3, 4, 5)]

    enc_in = 3 * CONV_HIDDEN
    enc_lstm = []
    for l in range(LSTM_LAYER):
        in_dim = enc_in if l == 0 else H * NUM_DIR
        layer = {}
        for dname in (('fwd', 'bwd') if BIDIRECTIONAL else ('fwd',)):
            layer[dname] = {'w_ih': u((4 * H, in_dim)), 'w_hh': u((4 * H, H)),
                            'b_ih': u((4 * H,)), 'b_hh': u((4 * H,))}
        enc_lstm.append(layer)
    params['enc_lstm'] = enc_lstm
    params['enc_init_h'] = u((LSTM_LAYER * NUM_DIR, H), 1e-2)
    params['enc_init_c'] = u((LSTM_LAYER * NUM_DIR, H), 1e-2)

    ptr_lstm_w = []
    for l in range(LSTM_LAYER):
        in_dim = ENC_OUT_DIM if l == 0 else H
        ptr_lstm_w.append({'w_ih': u((4 * H, in_dim)), 'w_hh': u((4 * H, H)),
                           'b_ih': u((4 * H,)), 'b_hh': u((4 * H,))})
    params['ptr_lstm'] = ptr_lstm_w
    params['ptr_init_h'] = u((LSTM_LAYER, H), 1e-2)
    params['ptr_init_c'] = u((LSTM_LAYER, H), 1e-2)
    params['ptr_init_i'] = u((ENC_OUT_DIM,), 1e-1)
    params['attn_wm'] = u((ENC_OUT_DIM, H))
    params['attn_wq'] = u((H, H))
    params['attn_v'] = u((H,))
    params['hop_wm'] = u((ENC_OUT_DIM, H))
    params['hop_wq'] = u((H, H))
    params['hop_v'] = u((H,))
    return params


# ----------------------------- main ------------------------------------------
if __name__ == "__main__":
    key = jax.random.PRNGKey(0)
    pkey, wkey = jax.random.split(key)
    params = init_params(pkey)
    prep = prepare_params(params)        # one-time weight packing, hoisted out of forward

    article_words = jax.random.randint(wkey, (B, MAX_N, SENT_LEN), 1, VOCAB,
                                       dtype=jnp.int32)
    sent_nums = jnp.array(SENT_NUMS, dtype=jnp.int32)
    target = jnp.array([[0, 2, 4], [1, 3, 0]], dtype=jnp.int32)   # [B, NT]

    out = ptr_extract_summ_forward(prep, article_words, sent_nums, target)
    out = jax.block_until_ready(out)

    assert out.shape == (B, NT + 1, MAX_N), out.shape
    assert bool(jnp.all(jnp.isfinite(out)))
    print("KERNEL_OK")
</pallas_src>

<mosaic_0001>
module attributes {stable_mosaic.version = 11 : i64} {
  func.func @fused_ptrext_kernel(%arg0: memref<2xi32, #tpu.memory_space<smem>>, %arg1: memref<6xi32, #tpu.memory_space<smem>>, %arg2: memref<104x1xi32, #tpu.memory_space<vmem>>, %arg3: memref<100x32xf32, #tpu.memory_space<vmem>>, %arg4: memref<5x32x24xf32, #tpu.memory_space<vmem>>, %arg5: memref<1x24xf32, #tpu.memory_space<vmem>>, %arg6: memref<10x91xf32, #tpu.memory_space<vmem>>, %arg7: memref<24x128xf32, #tpu.memory_space<vmem>>, %arg8: memref<32x128xf32, #tpu.memory_space<vmem>>, %arg9: memref<1x128xf32, #tpu.memory_space<vmem>>, %arg10: memref<2x16xf32, #tpu.memory_space<vmem>>, %arg11: memref<2x16xf32, #tpu.memory_space<vmem>>, %arg12: memref<32x64xf32, #tpu.memory_space<vmem>>, %arg13: memref<16x64xf32, #tpu.memory_space<vmem>>, %arg14: memref<1x64xf32, #tpu.memory_space<vmem>>, %arg15: memref<1x16xf32, #tpu.memory_space<vmem>>, %arg16: memref<1x16xf32, #tpu.memory_space<vmem>>, %arg17: memref<1x32xf32, #tpu.memory_space<vmem>>, %arg18: memref<32x16xf32, #tpu.memory_space<vmem>>, %arg19: memref<16x16xf32, #tpu.memory_space<vmem>>, %arg20: memref<1x16xf32, #tpu.memory_space<vmem>>, %arg21: memref<32x16xf32, #tpu.memory_space<vmem>>, %arg22: memref<16x16xf32, #tpu.memory_space<vmem>>, %arg23: memref<1x16xf32, #tpu.memory_space<vmem>>, %arg24: memref<8x5xf32, #tpu.memory_space<vmem>>, %arg25: memref<10x32xf32, #tpu.memory_space<vmem>>) attributes {dimension_semantics = [], scalar_prefetch = 0 : i64, scratch_operands = 1 : i64, tpu.core_type = #tpu.core_type<tc>} {
    %c0 = arith.constant 0 : index
    %c0_0 = arith.constant 0 : index
    %0 = vector.load %arg2[%c0, %c0_0] : memref<104x1xi32, #tpu.memory_space<vmem>>, vector<104x1xi32>
    %1 = tpu.iota {dimensions = array<i32: 1>} : vector<104x100xi32>
    %2 = vector.broadcast %0 : vector<104x1xi32> to vector<104x100xi32>
    %3 = arith.cmpi eq, %2, %1 : vector<104x100xi32>
    %4 = arith.extui %3 : vector<104x100xi1> to vector<104x100xi32>
    %5 = arith.sitofp %4 : vector<104x100xi32> to vector<104x100xf32>
    %c0_1 = arith.constant 0 : index
    %c0_2 = arith.constant 0 : index
    %6 = vector.load %arg3[%c0_1, %c0_2] : memref<100x32xf32, #tpu.memory_space<vmem>>, vector<100x32xf32>
    %cst = arith.constant dense<0.000000e+00> : vector<104x32xf32>
    %7 = tpu.matmul %5, %6, %cst {dimension_numbers = #tpu.dot_dimension_numbers<[1], [0], [0], [1], [0, 0, 1, 1], [], []>} : vector<104x100xf32>, vector<100x32xf32>, vector<104x32xf32> -> vector<104x32xf32>
    %cst_3 = arith.constant 0.000000e+00 : f32
    %8 = vector.broadcast %cst_3 : f32 to vector<98x24xf32>
    %9 = vector.extract_strided_slice %7 {offsets = [0, 0], sizes = [98, 32], strides = [1, 1]} : vector<104x32xf32> to vector<98x32xf32>
    %c0_4 = arith.constant 0 : index
    %c0_5 = arith.constant 0 : index
    %c0_6 = arith.constant 0 : index
    %10 = vector.load %arg4[%c0_4, %c0_5, %c0_6] : memref<5x32x24xf32, #tpu.memory_space<vmem>>, vector<1x32x24xf32>
    %11 = vector.shape_cast %10 : vector<1x32x24xf32> to vector<32x24xf32>
    %cst_7 = arith.constant dense<0.000000e+00> : vector<98x24xf32>
    %12 = tpu.matmul %9, %11, %cst_7 {dimension_numbers = #tpu.dot_dimension_numbers<[1], [0], [0], [1], [0, 0, 1, 1], [], []>} : vector<98x32xf32>, vector<32x24xf32>, vector<98x24xf32> -> vector<98x24xf32>
    %13 = arith.addf %8, %12 : vector<98x24xf32>
    %14 = vector.extract_strided_slice %7 {offsets = [1, 0], sizes = [98, 32], strides = [1, 1]} : vector<104x32xf32> to vector<98x32xf32>
    %c1 = arith.constant 1 : index
    %c0_8 = arith.constant 0 : index
    %c0_9 = arith.constant 0 : index
    %15 = vector.load %arg4[%c1, %c0_8, %c0_9] : memref<5x32x24xf32, #tpu.memory_space<vmem>>, vector<1x32x24xf32>
    %16 = vector.shape_cast %15 : vector<1x32x24xf32> to vector<32x24xf32>
    %cst_10 = arith.constant dense<0.000000e+00> : vector<98x24xf32>
    %17 = tpu.matmul %14, %16, %cst_10 {dimension_numbers = #tpu.dot_dimension_numbers<[1], [0], [0], [1], [0, 0, 1, 1], [], []>} : vector<98x32xf32>, vector<32x24xf32>, vector<98x24xf32> -> vector<98x24xf32>
    %18 = arith.addf %13, %17 : vector<98x24xf32>
    %19 = vector.extract_strided_slice %7 {offsets = [2, 0], sizes = [98, 32], strides = [1, 1]} : vector<104x32xf32> to vector<98x32xf32>
    %c2 = arith.constant 2 : index
    %c0_11 = arith.constant 0 : index
    %c0_12 = arith.constant 0 : index
    %20 = vector.load %arg4[%c2, %c0_11, %c0_12] : memref<5x32x24xf32, #tpu.memory_space<vmem>>, vector<1x32x24xf32>
    %21 = vector.shape_cast %20 : vector<1x32x24xf32> to vector<32x24xf32>
    %cst_13 = arith.constant dense<0.000000e+00> : vector<98x24xf32>
    %22 = tpu.matmul %19, %21, %cst_13 {dimension_numbers = #tpu.dot_dimension_numbers<[1], [0], [0], [1], [0, 0, 1, 1], [], []>} : vector<98x32xf32>, vector<32x24xf32>, vector<98x24xf32> -> vector<98x24xf32>
    %23 = arith.addf %18, %22 : vector<98x24xf32>
    %24 = vector.extract_strided_slice %7 {offsets = [3, 0], sizes = [98, 32], strides = [1, 1]} : vector<104x32xf32> to vector<98x32xf32>
    %c3 = arith.constant 3 : index
    %c0_14 = arith.constant 0 : index
    %c0_15 = arith.constant 0 : index
    %25 = vector.load %arg4[%c3, %c0_14, %c0_15] : memref<5x32x24xf32, #tpu.memory_space<vmem>>, vector<1x32x24xf32>
    %26 = vector.shape_cast %25 : vector<1x32x24xf32> to vector<32x24xf32>
    %cst_16 = arith.constant dense<0.000000e+00> : vector<98x24xf32>
    %27 = tpu.matmul %24, %26, %cst_16 {dimension_numbers = #tpu.dot_dimension_numbers<[1], [0], [0], [1], [0, 0, 1, 1], [], []>} : vector<98x32xf32>, vector<32x24xf32>, vector<98x24xf32> -> vector<98x24xf32>
    %28 = arith.addf %23, %27 : vector<98x24xf32>
    %29 = vector.extract_strided_slice %7 {offsets = [4, 0], sizes = [98, 32], strides = [1, 1]} : vector<104x32xf32> to vector<98x32xf32>
    %c4 = arith.constant 4 : index
    %c0_17 = arith.constant 0 : index
    %c0_18 = arith.constant 0 : index
    %30 = vector.load %arg4[%c4, %c0_17, %c0_18] : memref<5x32x24xf32, #tpu.memory_space<vmem>>, vector<1x32x24xf32>
    %31 = vector.shape_cast %30 : vector<1x32x24xf32> to vector<32x24xf32>
    %cst_19 = arith.constant dense<0.000000e+00> : vector<98x24xf32>
    %32 = tpu.matmul %29, %31, %cst_19 {dimension_numbers = #tpu.dot_dimension_numbers<[1], [0], [0], [1], [0, 0, 1, 1], [], []>} : vector<98x32xf32>, vector<32x24xf32>, vector<98x24xf32> -> vector<98x24xf32>
    %33 = arith.addf %28, %32 : vector<98x24xf32>
    %c0_20 = arith.constant 0 : index
    %c0_21 = arith.constant 0 : index
    %34 = vector.load %arg5[%c0_20, %c0_21] : memref<1x24xf32, #tpu.memory_space<vmem>>, vector<1x24xf32>
    %35 = vector.broadcast %34 : vector<1x24xf32> to vector<98x24xf32>
    %36 = arith.addf %33, %35 : vector<98x24xf32>
    %cst_22 = arith.constant 0.000000e+00 : f32
    %37 = vector.broadcast %cst_22 : f32 to vector<98x24xf32>
    %38 = arith.maximumf %36, %37 : vector<98x24xf32>
    %c0_23 = arith.constant 0 : index
    %c0_24 = arith.constant 0 : index
    %39 = vector.load %arg6[%c0_23, %c0_24] : memref<10x91xf32, #tpu.memory_space<vmem>>, vector<10x91xf32>
    %40 = tpu.iota {dimensions = array<i32: 1>} : vector<1x24xi32>
    %41 = vector.extract_strided_slice %38 {offsets = [0, 0], sizes = [91, 24], strides = [1, 1]} : vector<98x24xf32> to vector<91x24xf32>
    %cst_25 = arith.constant dense<0.000000e+00> : vector<10x24xf32>
    %42 = tpu.matmul %39, %41, %cst_25 {dimension_numbers = #tpu.dot_dimension_numbers<[1], [0], [0], [1], [0, 0, 1, 1], [], []>} : vector<10x91xf32>, vector<91x24xf32>, vector<10x24xf32> -> vector<10x24xf32>
    %43 = vector.extract_strided_slice %38 {offsets = [1, 0], sizes = [91, 24], strides = [1, 1]} : vector<98x24xf32> to vector<91x24xf32>
    %cst_26 = arith.constant dense<0.000000e+00> : vector<10x24xf32>
    %44 = tpu.matmul %39, %43, %cst_26 {dimension_numbers = #tpu.dot_dimension_numbers<[1], [0], [0], [1], [0, 0, 1, 1], [], []>} : vector<10x91xf32>, vector<91x24xf32>, vector<10x24xf32> -> vector<10x24xf32>
    %45 = arith.maximumf %42, %44 : vector<10x24xf32>
    %46 = vector.extract_strided_slice %38 {offsets = [2, 0], sizes = [91, 24], strides = [1, 1]} : vector<98x24xf32> to vector<91x24xf32>
    %cst_27 = arith.constant dense<0.000000e+00> : vector<10x24xf32>
    %47 = tpu.matmul %39, %46, %cst_27 {dimension_numbers = #tpu.dot_dimension_numbers<[1], [0], [0], [1], [0, 0, 1, 1], [], []>} : vector<10x91xf32>, vector<91x24xf32>, vector<10x24xf32> -> vector<10x24xf32>
    %48 = arith.maximumf %45, %47 : vector<10x24xf32>
    %49 = vector.extract_strided_slice %38 {offsets = [3, 0], sizes = [91, 24], strides = [1, 1]} : vector<98x24xf32> to vector<91x24xf32>
    %cst_28 = arith.constant dense<0.000000e+00> : vector<10x24xf32>
    %50 = tpu.matmul %39, %49, %cst_28 {dimension_numbers = #tpu.dot_dimension_numbers<[1], [0], [0], [1], [0, 0, 1, 1], [], []>} : vector<10x91xf32>, vector<91x24xf32>, vector<10x24xf32> -> vector<10x24xf32>
    %51 = arith.maximumf %48, %50 : vector<10x24xf32>
    %52 = vector.extract_strided_slice %38 {offsets = [4, 0], sizes = [91, 24], strides = [1, 1]} : vector<98x24xf32> to vector<91x24xf32>
    %cst_29 = arith.constant dense<0.000000e+00> : vector<10x24xf32>
    %53 = tpu.matmul %39, %52, %cst_29 {dimension_numbers = #tpu.dot_dimension_numbers<[1], [0], [0], [1], [0, 0, 1, 1], [], []>} : vector<10x91xf32>, vector<91x24xf32>, vector<10x24xf32> -> vector<10x24xf32>
    %54 = arith.maximumf %51, %53 : vector<10x24xf32>
    %55 = vector.extract_strided_slice %38 {offsets = [5, 0], sizes = [91, 24], strides = [1, 1]} : vector<98x24xf32> to vector<91x24xf32>
    %cst_30 = arith.constant dense<0.000000e+00> : vector<10x24xf32>
    %56 = tpu.matmul %39, %55, %cst_30 {dimension_numbers = #tpu.dot_dimension_numbers<[1], [0], [0], [1], [0, 0, 1, 1], [], []>} : vector<10x91xf32>, vector<91x24xf32>, vector<10x24xf32> -> vector<10x24xf32>
    %57 = arith.maximumf %54, %56 : vector<10x24xf32>
    %58 = vector.extract_strided_slice %38 {offsets = [6, 0], sizes = [91, 24], strides = [1, 1]} : vector<98x24xf32> to vector<91x24xf32>
    %cst_31 = arith.constant dense<0.000000e+00> : vector<10x24xf32>
    %59 = tpu.matmul %39, %58, %cst_31 {dimension_numbers = #tpu.dot_dimension_numbers<[1], [0], [0], [1], [0, 0, 1, 1], [], []>} : vector<10x91xf32>, vector<91x24xf32>, vector<10x24xf32> -> vector<10x24xf32>
    %c16_i32 = arith.constant 16 : i32
    %60 = vector.broadcast %c16_i32 : i32 to vector<1x24xi32>
    %61 = arith.cmpi slt, %40, %60 : vector<1x24xi32>
    %cst_32 = arith.constant 0.000000e+00 : f32
    %62 = vector.shape_cast %61 : vector<1x24xi1> to vector<1x24xi1>
    %63 = vector.broadcast %62 : vector<1x24xi1> to vector<10x24xi1>
    %64 = vector.broadcast %cst_32 : f32 to vector<10x24xf32>
    %65 = arith.select %63, %59, %64 : vector<10x24xi1>, vector<10x24xf32>
    %66 = arith.maximumf %57, %65 : vector<10x24xf32>
    %67 = vector.extract_strided_slice %38 {offsets = [7, 0], sizes = [91, 24], strides = [1, 1]} : vector<98x24xf32> to vector<91x24xf32>
    %cst_33 = arith.constant dense<0.000000e+00> : vector<10x24xf32>
    %68 = tpu.matmul %39, %67, %cst_33 {dimension_numbers = #tpu.dot_dimension_numbers<[1], [0], [0], [1], [0, 0, 1, 1], [], []>} : vector<10x91xf32>, vector<91x24xf32>, vector<10x24xf32> -> vector<10x24xf32>
    %c8_i32 = arith.constant 8 : i32
    %69 = vector.broadcast %c8_i32 : i32 to vector<1x24xi32>
    %70 = arith.cmpi slt, %40, %69 : vector<1x24xi32>
    %cst_34 = arith.constant 0.000000e+00 : f32
    %71 = vector.shape_cast %70 : vector<1x24xi1> to vector<1x24xi1>
    %72 = vector.broadcast %71 : vector<1x24xi1> to vector<10x24xi1>
    %73 = vector.broadcast %cst_34 : f32 to vector<10x24xf32>
    %74 = arith.select %72, %68, %73 : vector<10x24xi1>, vector<10x24xf32>
    %75 = arith.maximumf %66, %74 : vector<10x24xf32>
    %c0_35 = arith.constant 0 : index
    %c0_36 = arith.constant 0 : index
    %76 = vector.load %arg7[%c0_35, %c0_36] : memref<24x128xf32, #tpu.memory_space<vmem>>, vector<24x128xf32>
    %cst_37 = arith.constant dense<0.000000e+00> : vector<10x128xf32>
    %77 = tpu.matmul %75, %76, %cst_37 {dimension_numbers = #tpu.dot_dimension_numbers<[1], [0], [0], [1], [0, 0, 1, 1], [], []>} : vector<10x24xf32>, vector<24x128xf32>, vector<10x128xf32> -> vector<10x128xf32>
    %c0_38 = arith.constant 0 : index
    %c0_39 = arith.constant 0 : index
    %78 = vector.load %arg9[%c0_38, %c0_39] : memref<1x128xf32, #tpu.memory_space<vmem>>, vector<1x128xf32>
    %79 = vector.broadcast %78 : vector<1x128xf32> to vector<10x128xf32>
    %80 = arith.addf %77, %79 : vector<10x128xf32>
    %c0_40 = arith.constant 0 : index
    %c0_41 = arith.constant 0 : index
    %81 = vector.load %arg8[%c0_40, %c0_41] : memref<32x128xf32, #tpu.memory_space<vmem>>, vector<32x128xf32>
    %c0_i32 = arith.constant 0 : i32
    %82 = vector.broadcast %c0_i32 : i32 to vector<1x1xi32>
    %c0_42 = arith.constant 0 : index
    %83 = memref.load %arg0[%c0_42] : memref<2xi32, #tpu.memory_space<smem>>
    %84 = vector.broadcast %83 : i32 to vector<1x1xi32>
    %85 = arith.addi %82, %84 : vector<1x1xi32>
    %c0_i32_43 = arith.constant 0 : i32
    %86 = vector.broadcast %c0_i32_43 : i32 to vector<1x1xi32>
    %c1_44 = arith.constant 1 : index
    %87 = memref.load %arg0[%c1_44] : memref<2xi32, #tpu.memory_space<smem>>
    %88 = vector.broadcast %87 : i32 to vector<1x1xi32>
    %89 = arith.addi %86, %88 : vector<1x1xi32>
    %90 = tpu.concatenate %85, %89 in 0 : vector<1x1xi32>, vector<1x1xi32> -> vector<2x1xi32>
    %cst_45 = arith.constant 0.000000e+00 : f32
    %91 = vector.broadcast %cst_45 : f32 to vector<2x16xf32>
    %c0_46 = arith.constant 0 : index
    %c0_47 = arith.constant 0 : index
    %92 = vector.load %arg10[%c0_46, %c0_47] : memref<2x16xf32, #tpu.memory_space<vmem>>, vector<1x16xf32>
    %93 = vector.broadcast %92 : vector<1x16xf32> to vector<2x16xf32>
    %94 = arith.addf %93, %91 : vector<2x16xf32>
    %c0_48 = arith.constant 0 : index
    %c0_49 = arith.constant 0 : index
    %95 = vector.load %arg11[%c0_48, %c0_49] : memref<2x16xf32, #tpu.memory_space<vmem>>, vector<1x16xf32>
    %96 = vector.broadcast %95 : vector<1x16xf32> to vector<2x16xf32>
    %97 = arith.addf %96, %91 : vector<2x16xf32>
    %c1_50 = arith.constant 1 : index
    %c0_51 = arith.constant 0 : index
    %98 = vector.load %arg10[%c1_50, %c0_51] : memref<2x16xf32, #tpu.memory_space<vmem>>, vector<1x16xf32>
    %99 = vector.broadcast %98 : vector<1x16xf32> to vector<2x16xf32>
    %100 = arith.addf %99, %91 : vector<2x16xf32>
    %c1_52 = arith.constant 1 : index
    %c0_53 = arith.constant 0 : index
    %101 = vector.load %arg11[%c1_52, %c0_53] : memref<2x16xf32, #tpu.memory_space<vmem>>, vector<1x16xf32>
    %102 = vector.broadcast %101 : vector<1x16xf32> to vector<2x16xf32>
    %103 = arith.addf %102, %91 : vector<2x16xf32>
    %104 = tpu.concatenate %94, %100 in 1 : vector<2x16xf32>, vector<2x16xf32> -> vector<2x32xf32>
    %105 = vector.extract_strided_slice %80 {offsets = [0, 0], sizes = [2, 64], strides = [1, 1]} : vector<10x128xf32> to vector<2x64xf32>
    %106 = vector.extract_strided_slice %80 {offsets = [8, 64], sizes = [2, 64], strides = [1, 1]} : vector<10x128xf32> to vector<2x64xf32>
    %107 = tpu.concatenate %105, %106 in 1 : vector<2x64xf32>, vector<2x64xf32> -> vector<2x128xf32>
    %cst_54 = arith.constant dense<0.000000e+00> : vector<2x128xf32>
    %108 = tpu.matmul %104, %81, %cst_54 {dimension_numbers = #tpu.dot_dimension_numbers<[1], [0], [0], [1], [0, 0, 1, 1], [], []>} : vector<2x32xf32>, vector<32x128xf32>, vector<2x128xf32> -> vector<2x128xf32>
    %109 = arith.addf %107, %108 : vector<2x128xf32>
    %cst_55 = arith.constant 5.000000e-01 : f32
    %110 = vector.broadcast %cst_55 : f32 to vector<2x128xf32>
    %111 = arith.mulf %110, %109 : vector<2x128xf32>
    %112 = math.tanh %111 : vector<2x128xf32>
    %cst_56 = arith.constant 1.000000e+00 : f32
    %113 = vector.broadcast %cst_56 : f32 to vector<2x128xf32>
    %114 = arith.addf %112, %113 : vector<2x128xf32>
    %cst_57 = arith.constant 5.000000e-01 : f32
    %115 = vector.broadcast %cst_57 : f32 to vector<2x128xf32>
    %116 = arith.mulf %115, %114 : vector<2x128xf32>
    %117 = math.tanh %109 : vector<2x128xf32>
    %118 = vector.extract_strided_slice %116 {offsets = [0, 16], sizes = [2, 16], strides = [1, 1]} : vector<2x128xf32> to vector<2x16xf32>
    %119 = arith.mulf %118, %97 : vector<2x16xf32>
    %120 = vector.extract_strided_slice %116 {offsets = [0, 0], sizes = [2, 16], strides = [1, 1]} : vector<2x128xf32> to vector<2x16xf32>
    %121 = vector.extract_strided_slice %117 {offsets = [0, 32], sizes = [2, 16], strides = [1, 1]} : vector<2x128xf32> to vector<2x16xf32>
    %122 = arith.mulf %120, %121 : vector<2x16xf32>
    %123 = arith.addf %119, %122 : vector<2x16xf32>
    %124 = vector.extract_strided_slice %116 {offsets = [0, 48], sizes = [2, 16], strides = [1, 1]} : vector<2x128xf32> to vector<2x16xf32>
    %125 = math.tanh %123 : vector<2x16xf32>
    %126 = arith.mulf %124, %125 : vector<2x16xf32>
    %127 = vector.extract_strided_slice %116 {offsets = [0, 80], sizes = [2, 16], strides = [1, 1]} : vector<2x128xf32> to vector<2x16xf32>
    %128 = arith.mulf %127, %103 : vector<2x16xf32>
    %129 = vector.extract_strided_slice %116 {offsets = [0, 64], sizes = [2, 16], strides = [1, 1]} : vector<2x128xf32> to vector<2x16xf32>
    %130 = vector.extract_strided_slice %117 {offsets = [0, 96], sizes = [2, 16], strides = [1, 1]} : vector<2x128xf32> to vector<2x16xf32>
    %131 = arith.mulf %129, %130 : vector<2x16xf32>
    %132 = arith.addf %128, %131 : vector<2x16xf32>
    %133 = vector.extract_strided_slice %116 {offsets = [0, 112], sizes = [2, 16], strides = [1, 1]} : vector<2x128xf32> to vector<2x16xf32>
    %134 = math.tanh %132 : vector<2x16xf32>
    %135 = arith.mulf %133, %134 : vector<2x16xf32>
    %c0_i32_58 = arith.constant 0 : i32
    %136 = vector.broadcast %c0_i32_58 : i32 to vector<2x1xi32>
    %137 = arith.cmpi sgt, %90, %136 : vector<2x1xi32>
    %138 = arith.extui %137 : vector<2x1xi1> to vector<2x1xi32>
    %139 = arith.sitofp %138 : vector<2x1xi32> to vector<2x1xf32>
    %c4_i32 = arith.constant 4 : i32
    %140 = vector.broadcast %c4_i32 : i32 to vector<2x1xi32>
    %141 = arith.cmpi sgt, %90, %140 : vector<2x1xi32>
    %142 = arith.extui %141 : vector<2x1xi1> to vector<2x1xi32>
    %143 = arith.sitofp %142 : vector<2x1xi32> to vector<2x1xf32>
    %144 = vector.broadcast %139 : vector<2x1xf32> to vector<2x16xf32>
    %145 = arith.mulf %144, %126 : vector<2x16xf32>
    %cst_59 = arith.constant 1.000000e+00 : f32
    %146 = vector.broadcast %cst_59 : f32 to vector<2x1xf32>
    %147 = arith.subf %146, %139 : vector<2x1xf32>
    %148 = vector.broadcast %147 : vector<2x1xf32> to vector<2x16xf32>
    %149 = arith.mulf %148, %94 : vector<2x16xf32>
    %150 = arith.addf %145, %149 : vector<2x16xf32>
    %151 = vector.broadcast %139 : vector<2x1xf32> to vector<2x16xf32>
    %152 = arith.mulf %151, %123 : vector<2x16xf32>
    %cst_60 = arith.constant 1.000000e+00 : f32
    %153 = vector.broadcast %cst_60 : f32 to vector<2x1xf32>
    %154 = arith.subf %153, %139 : vector<2x1xf32>
    %155 = vector.broadcast %154 : vector<2x1xf32> to vector<2x16xf32>
    %156 = arith.mulf %155, %97 : vector<2x16xf32>
    %157 = arith.addf %152, %156 : vector<2x16xf32>
    %158 = vector.broadcast %143 : vector<2x1xf32> to vector<2x16xf32>
    %159 = arith.mulf %158, %135 : vector<2x16xf32>
    %cst_61 = arith.constant 1.000000e+00 : f32
    %160 = vector.broadcast %cst_61 : f32 to vector<2x1xf32>
    %161 = arith.subf %160, %143 : vector<2x1xf32>
    %162 = vector.broadcast %161 : vector<2x1xf32> to vector<2x16xf32>
    %163 = arith.mulf %162, %100 : vector<2x16xf32>
    %164 = arith.addf %159, %163 : vector<2x16xf32>
    %165 = vector.broadcast %143 : vector<2x1xf32> to vector<2x16xf32>
    %166 = arith.mulf %165, %132 : vector<2x16xf32>
    %cst_62 = arith.constant 1.000000e+00 : f32
    %167 = vector.broadcast %cst_62 : f32 to vector<2x1xf32>
    %168 = arith.subf %167, %143 : vector<2x1xf32>
    %169 = vector.broadcast %168 : vector<2x1xf32> to vector<2x16xf32>
    %170 = arith.mulf %169, %103 : vector<2x16xf32>
    %171 = arith.addf %166, %170 : vector<2x16xf32>
    %172 = vector.broadcast %139 : vector<2x1xf32> to vector<2x16xf32>
    %173 = arith.mulf %150, %172 : vector<2x16xf32>
    %174 = vector.broadcast %143 : vector<2x1xf32> to vector<2x16xf32>
    %175 = arith.mulf %164, %174 : vector<2x16xf32>
    %176 = tpu.concatenate %150, %164 in 1 : vector<2x16xf32>, vector<2x16xf32> -> vector<2x32xf32>
    %177 = vector.extract_strided_slice %80 {offsets = [2, 0], sizes = [2, 64], strides = [1, 1]} : vector<10x128xf32> to vector<2x64xf32>
    %178 = vector.extract_strided_slice %80 {offsets = [6, 64], sizes = [2, 64], strides = [1, 1]} : vector<10x128xf32> to vector<2x64xf32>
    %179 = tpu.concatenate %177, %178 in 1 : vector<2x64xf32>, vector<2x64xf32> -> vector<2x128xf32>
    %cst_63 = arith.constant dense<0.000000e+00> : vector<2x128xf32>
    %180 = tpu.matmul %176, %81, %cst_63 {dimension_numbers = #tpu.dot_dimension_numbers<[1], [0], [0], [1], [0, 0, 1, 1], [], []>} : vector<2x32xf32>, vector<32x128xf32>, vector<2x128xf32> -> vector<2x128xf32>
    %181 = arith.addf %179, %180 : vector<2x128xf32>
    %cst_64 = arith.constant 5.000000e-01 : f32
    %182 = vector.broadcast %cst_64 : f32 to vector<2x128xf32>
    %183 = arith.mulf %182, %181 : vector<2x128xf32>
    %184 = math.tanh %183 : vector<2x128xf32>
    %cst_65 = arith.constant 1.000000e+00 : f32
    %185 = vector.broadcast %cst_65 : f32 to vector<2x128xf32>
    %186 = arith.addf %184, %185 : vector<2x128xf32>
    %cst_66 = arith.constant 5.000000e-01 : f32
    %187 = vector.broadcast %cst_66 : f32 to vector<2x128xf32>
    %188 = arith.mulf %187, %186 : vector<2x128xf32>
    %189 = math.tanh %181 : vector<2x128xf32>
    %190 = vector.extract_strided_slice %188 {offsets = [0, 16], sizes = [2, 16], strides = [1, 1]} : vector<2x128xf32> to vector<2x16xf32>
    %191 = arith.mulf %190, %157 : vector<2x16xf32>
    %192 = vector.extract_strided_slice %188 {offsets = [0, 0], sizes = [2, 16], strides = [1, 1]} : vector<2x128xf32> to vector<2x16xf32>
    %193 = vector.extract_strided_slice %189 {offsets = [0, 32], sizes = [2, 16], strides = [1, 1]} : vector<2x128xf32> to vector<2x16xf32>
    %194 = arith.mulf %192, %193 : vector<2x16xf32>
    %195 = arith.addf %191, %194 : vector<2x16xf32>
    %196 = vector.extract_strided_slice %188 {offsets = [0, 48], sizes = [2, 16], strides = [1, 1]} : vector<2x128xf32> to vector<2x16xf32>
    %197 = math.tanh %195 : vector<2x16xf32>
    %198 = arith.mulf %196, %197 : vector<2x16xf32>
    %199 = vector.extract_strided_slice %188 {offsets = [0, 80], sizes = [2, 16], strides = [1, 1]} : vector<2x128xf32> to vector<2x16xf32>
    %200 = arith.mulf %199, %171 : vector<2x16xf32>
    %201 = vector.extract_strided_slice %188 {offsets = [0, 64], sizes = [2, 16], strides = [1, 1]} : vector<2x128xf32> to vector<2x16xf32>
    %202 = vector.extract_strided_slice %189 {offsets = [0, 96], sizes = [2, 16], strides = [1, 1]} : vector<2x128xf32> to vector<2x16xf32>
    %203 = arith.mulf %201, %202 : vector<2x16xf32>
    %204 = arith.addf %200, %203 : vector<2x16xf32>
    %205 = vector.extract_strided_slice %188 {offsets = [0, 112], sizes = [2, 16], strides = [1, 1]} : vector<2x128xf32> to vector<2x16xf32>
    %206 = math.tanh %204 : vector<2x16xf32>
    %207 = arith.mulf %205, %206 : vector<2x16xf32>
    %c1_i32 = arith.constant 1 : i32
    %208 = vector.broadcast %c1_i32 : i32 to vector<2x1xi32>
    %209 = arith.cmpi sgt, %90, %208 : vector<2x1xi32>
    %210 = arith.extui %209 : vector<2x1xi1> to vector<2x1xi32>
    %211 = arith.sitofp %210 : vector<2x1xi32> to vector<2x1xf32>
    %c3_i32 = arith.constant 3 : i32
    %212 = vector.broadcast %c3_i32 : i32 to vector<2x1xi32>
    %213 = arith.cmpi sgt, %90, %212 : vector<2x1xi32>
    %214 = arith.extui %213 : vector<2x1xi1> to vector<2x1xi32>
    %215 = arith.sitofp %214 : vector<2x1xi32> to vector<2x1xf32>
    %216 = vector.broadcast %211 : vector<2x1xf32> to vector<2x16xf32>
    %217 = arith.mulf %216, %198 : vector<2x16xf32>
    %cst_67 = arith.constant 1.000000e+00 : f32
    %218 = vector.broadcast %cst_67 : f32 to vector<2x1xf32>
    %219 = arith.subf %218, %211 : vector<2x1xf32>
    %220 = vector.broadcast %219 : vector<2x1xf32> to vector<2x16xf32>
    %221 = arith.mulf %220, %150 : vector<2x16xf32>
    %222 = arith.addf %217, %221 : vector<2x16xf32>
    %223 = vector.broadcast %211 : vector<2x1xf32> to vector<2x16xf32>
    %224 = arith.mulf %223, %195 : vector<2x16xf32>
    %cst_68 = arith.constant 1.000000e+00 : f32
    %225 = vector.broadcast %cst_68 : f32 to vector<2x1xf32>
    %226 = arith.subf %225, %211 : vector<2x1xf32>
    %227 = vector.broadcast %226 : vector<2x1xf32> to vector<2x16xf32>
    %228 = arith.mulf %227, %157 : vector<2x16xf32>
    %229 = arith.addf %224, %228 : vector<2x16xf32>
    %230 = vector.broadcast %215 : vector<2x1xf32> to vector<2x16xf32>
    %231 = arith.mulf %230, %207 : vector<2x16xf32>
    %cst_69 = arith.constant 1.000000e+00 : f32
    %232 = vector.broadcast %cst_69 : f32 to vector<2x1xf32>
    %233 = arith.subf %232, %215 : vector<2x1xf32>
    %234 = vector.broadcast %233 : vector<2x1xf32> to vector<2x16xf32>
    %235 = arith.mulf %234, %164 : vector<2x16xf32>
    %236 = arith.addf %231, %235 : vector<2x16xf32>
    %237 = vector.broadcast %215 : vector<2x1xf32> to vector<2x16xf32>
    %238 = arith.mulf %237, %204 : vector<2x16xf32>
    %cst_70 = arith.constant 1.000000e+00 : f32
    %239 = vector.broadcast %cst_70 : f32 to vector<2x1xf32>
    %240 = arith.subf %239, %215 : vector<2x1xf32>
    %241 = vector.broadcast %240 : vector<2x1xf32> to vector<2x16xf32>
    %242 = arith.mulf %241, %171 : vector<2x16xf32>
    %243 = arith.addf %238, %242 : vector<2x16xf32>
    %244 = vector.broadcast %211 : vector<2x1xf32> to vector<2x16xf32>
    %245 = arith.mulf %222, %244 : vector<2x16xf32>
    %246 = vector.broadcast %215 : vector<2x1xf32> to vector<2x16xf32>
    %247 = arith.mulf %236, %246 : vector<2x16xf32>
    %248 = tpu.concatenate %222, %236 in 1 : vector<2x16xf32>, vector<2x16xf32> -> vector<2x32xf32>
    %249 = vector.extract_strided_slice %80 {offsets = [4, 0], sizes = [2, 64], strides = [1, 1]} : vector<10x128xf32> to vector<2x64xf32>
    %250 = vector.extract_strided_slice %80 {offsets = [4, 64], sizes = [2, 64], strides = [1, 1]} : vector<10x128xf32> to vector<2x64xf32>
    %251 = tpu.concatenate %249, %250 in 1 : vector<2x64xf32>, vector<2x64xf32> -> vector<2x128xf32>
    %cst_71 = arith.constant dense<0.000000e+00> : vector<2x128xf32>
    %252 = tpu.matmul %248, %81, %cst_71 {dimension_numbers = #tpu.dot_dimension_numbers<[1], [0], [0], [1], [0, 0, 1, 1], [], []>} : vector<2x32xf32>, vector<32x128xf32>, vector<2x128xf32> -> vector<2x128xf32>
    %253 = arith.addf %251, %252 : vector<2x128xf32>
    %cst_72 = arith.constant 5.000000e-01 : f32
    %254 = vector.broadcast %cst_72 : f32 to vector<2x128xf32>
    %255 = arith.mulf %254, %253 : vector<2x128xf32>
    %256 = math.tanh %255 : vector<2x128xf32>
    %cst_73 = arith.constant 1.000000e+00 : f32
    %257 = vector.broadcast %cst_73 : f32 to vector<2x128xf32>
    %258 = arith.addf %256, %257 : vector<2x128xf32>
    %cst_74 = arith.constant 5.000000e-01 : f32
    %259 = vector.broadcast %cst_74 : f32 to vector<2x128xf32>
    %260 = arith.mulf %259, %258 : vector<2x128xf32>
    %261 = math.tanh %253 : vector<2x128xf32>
    %262 = vector.extract_strided_slice %260 {offsets = [0, 16], sizes = [2, 16], strides = [1, 1]} : vector<2x128xf32> to vector<2x16xf32>
    %263 = arith.mulf %262, %229 : vector<2x16xf32>
    %264 = vector.extract_strided_slice %260 {offsets = [0, 0], sizes = [2, 16], strides = [1, 1]} : vector<2x128xf32> to vector<2x16xf32>
    %265 = vector.extract_strided_slice %261 {offsets = [0, 32], sizes = [2, 16], strides = [1, 1]} : vector<2x128xf32> to vector<2x16xf32>
    %266 = arith.mulf %264, %265 : vector<2x16xf32>
    %267 = arith.addf %263, %266 : vector<2x16xf32>
    %268 = vector.extract_strided_slice %260 {offsets = [0, 48], sizes = [2, 16], strides = [1, 1]} : vector<2x128xf32> to vector<2x16xf32>
    %269 = math.tanh %267 : vector<2x16xf32>
    %270 = arith.mulf %268, %269 : vector<2x16xf32>
    %271 = vector.extract_strided_slice %260 {offsets = [0, 80], sizes = [2, 16], strides = [1, 1]} : vector<2x128xf32> to vector<2x16xf32>
    %272 = arith.mulf %271, %243 : vector<2x16xf32>
    %273 = vector.extract_strided_slice %260 {offsets = [0, 64], sizes = [2, 16], strides = [1, 1]} : vector<2x128xf32> to vector<2x16xf32>
    %274 = vector.extract_strided_slice %261 {offsets = [0, 96], sizes = [2, 16], strides = [1, 1]} : vector<2x128xf32> to vector<2x16xf32>
    %275 = arith.mulf %273, %274 : vector<2x16xf32>
    %276 = arith.addf %272, %275 : vector<2x16xf32>
    %277 = vector.extract_strided_slice %260 {offsets = [0, 112], sizes = [2, 16], strides = [1, 1]} : vector<2x128xf32> to vector<2x16xf32>
    %278 = math.tanh %276 : vector<2x16xf32>
    %279 = arith.mulf %277, %278 : vector<2x16xf32>
    %c2_i32 = arith.constant 2 : i32
    %280 = vector.broadcast %c2_i32 : i32 to vector<2x1xi32>
    %281 = arith.cmpi sgt, %90, %280 : vector<2x1xi32>
    %282 = arith.extui %281 : vector<2x1xi1> to vector<2x1xi32>
    %283 = arith.sitofp %282 : vector<2x1xi32> to vector<2x1xf32>
    %c2_i32_75 = arith.constant 2 : i32
    %284 = vector.broadcast %c2_i32_75 : i32 to vector<2x1xi32>
    %285 = arith.cmpi sgt, %90, %284 : vector<2x1xi32>
    %286 = arith.extui %285 : vector<2x1xi1> to vector<2x1xi32>
    %287 = arith.sitofp %286 : vector<2x1xi32> to vector<2x1xf32>
    %288 = vector.broadcast %283 : vector<2x1xf32> to vector<2x16xf32>
    %289 = arith.mulf %288, %270 : vector<2x16xf32>
    %cst_76 = arith.constant 1.000000e+00 : f32
    %290 = vector.broadcast %cst_76 : f32 to vector<2x1xf32>
    %291 = arith.subf %290, %283 : vector<2x1xf32>
    %292 = vector.broadcast %291 : vector<2x1xf32> to vector<2x16xf32>
    %293 = arith.mulf %292, %222 : vector<2x16xf32>
    %294 = arith.addf %289, %293 : vector<2x16xf32>
    %295 = vector.broadcast %283 : vector<2x1xf32> to vector<2x16xf32>
    %296 = arith.mulf %295, %267 : vector<2x16xf32>
    %cst_77 = arith.constant 1.000000e+00 : f32
    %297 = vector.broadcast %cst_77 : f32 to vector<2x1xf32>
    %298 = arith.subf %297, %283 : vector<2x1xf32>
    %299 = vector.broadcast %298 : vector<2x1xf32> to vector<2x16xf32>
    %300 = arith.mulf %299, %229 : vector<2x16xf32>
    %301 = arith.addf %296, %300 : vector<2x16xf32>
    %302 = vector.broadcast %287 : vector<2x1xf32> to vector<2x16xf32>
    %303 = arith.mulf %302, %279 : vector<2x16xf32>
    %cst_78 = arith.constant 1.000000e+00 : f32
    %304 = vector.broadcast %cst_78 : f32 to vector<2x1xf32>
    %305 = arith.subf %304, %287 : vector<2x1xf32>
    %306 = vector.broadcast %305 : vector<2x1xf32> to vector<2x16xf32>
    %307 = arith.mulf %306, %236 : vector<2x16xf32>
    %308 = arith.addf %303, %307 : vector<2x16xf32>
    %309 = vector.broadcast %287 : vector<2x1xf32> to vector<2x16xf32>
    %310 = arith.mulf %309, %276 : vector<2x16xf32>
    %cst_79 = arith.constant 1.000000e+00 : f32
    %311 = vector.broadcast %cst_79 : f32 to vector<2x1xf32>
    %312 = arith.subf %311, %287 : vector<2x1xf32>
    %313 = vector.broadcast %312 : vector<2x1xf32> to vector<2x16xf32>
    %314 = arith.mulf %313, %243 : vector<2x16xf32>
    %315 = arith.addf %310, %314 : vector<2x16xf32>
    %316 = vector.broadcast %283 : vector<2x1xf32> to vector<2x16xf32>
    %317 = arith.mulf %294, %316 : vector<2x16xf32>
    %318 = vector.broadcast %287 : vector<2x1xf32> to vector<2x16xf32>
    %319 = arith.mulf %308, %318 : vector<2x16xf32>
    %320 = tpu.concatenate %294, %308 in 1 : vector<2x16xf32>, vector<2x16xf32> -> vector<2x32xf32>
    %321 = vector.extract_strided_slice %80 {offsets = [6, 0], sizes = [2, 64], strides = [1, 1]} : vector<10x128xf32> to vector<2x64xf32>
    %322 = vector.extract_strided_slice %80 {offsets = [2, 64], sizes = [2, 64], strides = [1, 1]} : vector<10x128xf32> to vector<2x64xf32>
    %323 = tpu.concatenate %321, %322 in 1 : vector<2x64xf32>, vector<2x64xf32> -> vector<2x128xf32>
    %cst_80 = arith.constant dense<0.000000e+00> : vector<2x128xf32>
    %324 = tpu.matmul %320, %81, %cst_80 {dimension_numbers = #tpu.dot_dimension_numbers<[1], [0], [0], [1], [0, 0, 1, 1], [], []>} : vector<2x32xf32>, vector<32x128xf32>, vector<2x128xf32> -> vector<2x128xf32>
    %325 = arith.addf %323, %324 : vector<2x128xf32>
    %cst_81 = arith.constant 5.000000e-01 : f32
    %326 = vector.broadcast %cst_81 : f32 to vector<2x128xf32>
    %327 = arith.mulf %326, %325 : vector<2x128xf32>
    %328 = math.tanh %327 : vector<2x128xf32>
    %cst_82 = arith.constant 1.000000e+00 : f32
    %329 = vector.broadcast %cst_82 : f32 to vector<2x128xf32>
    %330 = arith.addf %328, %329 : vector<2x128xf32>
    %cst_83 = arith.constant 5.000000e-01 : f32
    %331 = vector.broadcast %cst_83 : f32 to vector<2x128xf32>
    %332 = arith.mulf %331, %330 : vector<2x128xf32>
    %333 = math.tanh %325 : vector<2x128xf32>
    %334 = vector.extract_strided_slice %332 {offsets = [0, 16], sizes = [2, 16], strides = [1, 1]} : vector<2x128xf32> to vector<2x16xf32>
    %335 = arith.mulf %334, %301 : vector<2x16xf32>
    %336 = vector.extract_strided_slice %332 {offsets = [0, 0], sizes = [2, 16], strides = [1, 1]} : vector<2x128xf32> to vector<2x16xf32>
    %337 = vector.extract_strided_slice %333 {offsets = [0, 32], sizes = [2, 16], strides = [1, 1]} : vector<2x128xf32> to vector<2x16xf32>
    %338 = arith.mulf %336, %337 : vector<2x16xf32>
    %339 = arith.addf %335, %338 : vector<2x16xf32>
    %340 = vector.extract_strided_slice %332 {offsets = [0, 48], sizes = [2, 16], strides = [1, 1]} : vector<2x128xf32> to vector<2x16xf32>
    %341 = math.tanh %339 : vector<2x16xf32>
    %342 = arith.mulf %340, %341 : vector<2x16xf32>
    %343 = vector.extract_strided_slice %332 {offsets = [0, 80], sizes = [2, 16], strides = [1, 1]} : vector<2x128xf32> to vector<2x16xf32>
    %344 = arith.mulf %343, %315 : vector<2x16xf32>
    %345 = vector.extract_strided_slice %332 {offsets = [0, 64], sizes = [2, 16], strides = [1, 1]} : vector<2x128xf32> to vector<2x16xf32>
    %346 = vector.extract_strided_slice %333 {offsets = [0, 96], sizes = [2, 16], strides = [1, 1]} : vector<2x128xf32> to vector<2x16xf32>
    %347 = arith.mulf %345, %346 : vector<2x16xf32>
    %348 = arith.addf %344, %347 : vector<2x16xf32>
    %349 = vector.extract_strided_slice %332 {offsets = [0, 112], sizes = [2, 16], strides = [1, 1]} : vector<2x128xf32> to vector<2x16xf32>
    %350 = math.tanh %348 : vector<2x16xf32>
    %351 = arith.mulf %349, %350 : vector<2x16xf32>
    %c3_i32_84 = arith.constant 3 : i32
    %352 = vector.broadcast %c3_i32_84 : i32 to vector<2x1xi32>
    %353 = arith.cmpi sgt, %90, %352 : vector<2x1xi32>
    %354 = arith.extui %353 : vector<2x1xi1> to vector<2x1xi32>
    %355 = arith.sitofp %354 : vector<2x1xi32> to vector<2x1xf32>
    %c1_i32_85 = arith.constant 1 : i32
    %356 = vector.broadcast %c1_i32_85 : i32 to vector<2x1xi32>
    %357 = arith.cmpi sgt, %90, %356 : vector<2x1xi32>
    %358 = arith.extui %357 : vector<2x1xi1> to vector<2x1xi32>
    %359 = arith.sitofp %358 : vector<2x1xi32> to vector<2x1xf32>
    %360 = vector.broadcast %355 : vector<2x1xf32> to vector<2x16xf32>
    %361 = arith.mulf %360, %342 : vector<2x16xf32>
    %cst_86 = arith.constant 1.000000e+00 : f32
    %362 = vector.broadcast %cst_86 : f32 to vector<2x1xf32>
    %363 = arith.subf %362, %355 : vector<2x1xf32>
    %364 = vector.broadcast %363 : vector<2x1xf32> to vector<2x16xf32>
    %365 = arith.mulf %364, %294 : vector<2x16xf32>
    %366 = arith.addf %361, %365 : vector<2x16xf32>
    %367 = vector.broadcast %355 : vector<2x1xf32> to vector<2x16xf32>
    %368 = arith.mulf %367, %339 : vector<2x16xf32>
    %cst_87 = arith.constant 1.000000e+00 : f32
    %369 = vector.broadcast %cst_87 : f32 to vector<2x1xf32>
    %370 = arith.subf %369, %355 : vector<2x1xf32>
    %371 = vector.broadcast %370 : vector<2x1xf32> to vector<2x16xf32>
    %372 = arith.mulf %371, %301 : vector<2x16xf32>
    %373 = arith.addf %368, %372 : vector<2x16xf32>
    %374 = vector.broadcast %359 : vector<2x1xf32> to vector<2x16xf32>
    %375 = arith.mulf %374, %351 : vector<2x16xf32>
    %cst_88 = arith.constant 1.000000e+00 : f32
    %376 = vector.broadcast %cst_88 : f32 to vector<2x1xf32>
    %377 = arith.subf %376, %359 : vector<2x1xf32>
    %378 = vector.broadcast %377 : vector<2x1xf32> to vector<2x16xf32>
    %379 = arith.mulf %378, %308 : vector<2x16xf32>
    %380 = arith.addf %375, %379 : vector<2x16xf32>
    %381 = vector.broadcast %359 : vector<2x1xf32> to vector<2x16xf32>
    %382 = arith.mulf %381, %348 : vector<2x16xf32>
    %cst_89 = arith.constant 1.000000e+00 : f32
    %383 = vector.broadcast %cst_89 : f32 to vector<2x1xf32>
    %384 = arith.subf %383, %359 : vector<2x1xf32>
    %385 = vector.broadcast %384 : vector<2x1xf32> to vector<2x16xf32>
    %386 = arith.mulf %385, %315 : vector<2x16xf32>
    %387 = arith.addf %382, %386 : vector<2x16xf32>
    %388 = vector.broadcast %355 : vector<2x1xf32> to vector<2x16xf32>
    %389 = arith.mulf %366, %388 : vector<2x16xf32>
    %390 = vector.broadcast %359 : vector<2x1xf32> to vector<2x16xf32>
    %391 = arith.mulf %380, %390 : vector<2x16xf32>
    %392 = tpu.concatenate %366, %380 in 1 : vector<2x16xf32>, vector<2x16xf32> -> vector<2x32xf32>
    %393 = vector.extract_strided_slice %80 {offsets = [8, 0], sizes = [2, 64], strides = [1, 1]} : vector<10x128xf32> to vector<2x64xf32>
    %394 = vector.extract_strided_slice %80 {offsets = [0, 64], sizes = [2, 64], strides = [1, 1]} : vector<10x128xf32> to vector<2x64xf32>
    %395 = tpu.concatenate %393, %394 in 1 : vector<2x64xf32>, vector<2x64xf32> -> vector<2x128xf32>
    %cst_90 = arith.constant dense<0.000000e+00> : vector<2x128xf32>
    %396 = tpu.matmul %392, %81, %cst_90 {dimension_numbers = #tpu.dot_dimension_numbers<[1], [0], [0], [1], [0, 0, 1, 1], [], []>} : vector<2x32xf32>, vector<32x128xf32>, vector<2x128xf32> -> vector<2x128xf32>
    %397 = arith.addf %395, %396 : vector<2x128xf32>
    %cst_91 = arith.constant 5.000000e-01 : f32
    %398 = vector.broadcast %cst_91 : f32 to vector<2x128xf32>
    %399 = arith.mulf %398, %397 : vector<2x128xf32>
    %400 = math.tanh %399 : vector<2x128xf32>
    %cst_92 = arith.constant 1.000000e+00 : f32
    %401 = vector.broadcast %cst_92 : f32 to vector<2x128xf32>
    %402 = arith.addf %400, %401 : vector<2x128xf32>
    %cst_93 = arith.constant 5.000000e-01 : f32
    %403 = vector.broadcast %cst_93 : f32 to vector<2x128xf32>
    %404 = arith.mulf %403, %402 : vector<2x128xf32>
    %405 = math.tanh %397 : vector<2x128xf32>
    %406 = vector.extract_strided_slice %404 {offsets = [0, 16], sizes = [2, 16], strides = [1, 1]} : vector<2x128xf32> to vector<2x16xf32>
    %407 = arith.mulf %406, %373 : vector<2x16xf32>
    %408 = vector.extract_strided_slice %404 {offsets = [0, 0], sizes = [2, 16], strides = [1, 1]} : vector<2x128xf32> to vector<2x16xf32>
    %409 = vector.extract_strided_slice %405 {offsets = [0, 32], sizes = [2, 16], strides = [1, 1]} : vector<2x128xf32> to vector<2x16xf32>
    %410 = arith.mulf %408, %409 : vector<2x16xf32>
    %411 = arith.addf %407, %410 : vector<2x16xf32>
    %412 = vector.extract_strided_slice %404 {offsets = [0, 48], sizes = [2, 16], strides = [1, 1]} : vector<2x128xf32> to vector<2x16xf32>
    %413 = math.tanh %411 : vector<2x16xf32>
    %414 = arith.mulf %412, %413 : vector<2x16xf32>
    %415 = vector.extract_strided_slice %404 {offsets = [0, 80], sizes = [2, 16], strides = [1, 1]} : vector<2x128xf32> to vector<2x16xf32>
    %416 = arith.mulf %415, %387 : vector<2x16xf32>
    %417 = vector.extract_strided_slice %404 {offsets = [0, 64], sizes = [2, 16], strides = [1, 1]} : vector<2x128xf32> to vector<2x16xf32>
    %418 = vector.extract_strided_slice %405 {offsets = [0, 96], sizes = [2, 16], strides = [1, 1]} : vector<2x128xf32> to vector<2x16xf32>
    %419 = arith.mulf %417, %418 : vector<2x16xf32>
    %420 = arith.addf %416, %419 : vector<2x16xf32>
    %421 = vector.extract_strided_slice %404 {offsets = [0, 112], sizes = [2, 16], strides = [1, 1]} : vector<2x128xf32> to vector<2x16xf32>
    %422 = math.tanh %420 : vector<2x16xf32>
    %423 = arith.mulf %421, %422 : vector<2x16xf32>
    %c4_i32_94 = arith.constant 4 : i32
    %424 = vector.broadcast %c4_i32_94 : i32 to vector<2x1xi32>
    %425 = arith.cmpi sgt, %90, %424 : vector<2x1xi32>
    %426 = arith.extui %425 : vector<2x1xi1> to vector<2x1xi32>
    %427 = arith.sitofp %426 : vector<2x1xi32> to vector<2x1xf32>
    %c0_i32_95 = arith.constant 0 : i32
    %428 = vector.broadcast %c0_i32_95 : i32 to vector<2x1xi32>
    %429 = arith.cmpi sgt, %90, %428 : vector<2x1xi32>
    %430 = arith.extui %429 : vector<2x1xi1> to vector<2x1xi32>
    %431 = arith.sitofp %430 : vector<2x1xi32> to vector<2x1xf32>
    %432 = vector.broadcast %427 : vector<2x1xf32> to vector<2x16xf32>
    %433 = arith.mulf %432, %414 : vector<2x16xf32>
    %cst_96 = arith.constant 1.000000e+00 : f32
    %434 = vector.broadcast %cst_96 : f32 to vector<2x1xf32>
    %435 = arith.subf %434, %427 : vector<2x1xf32>
    %436 = vector.broadcast %435 : vector<2x1xf32> to vector<2x16xf32>
    %437 = arith.mulf %436, %366 : vector<2x16xf32>
    %438 = arith.addf %433, %437 : vector<2x16xf32>
    %439 = vector.broadcast %431 : vector<2x1xf32> to vector<2x16xf32>
    %440 = arith.mulf %439, %423 : vector<2x16xf32>
    %cst_97 = arith.constant 1.000000e+00 : f32
    %441 = vector.broadcast %cst_97 : f32 to vector<2x1xf32>
    %442 = arith.subf %441, %431 : vector<2x1xf32>
    %443 = vector.broadcast %442 : vector<2x1xf32> to vector<2x16xf32>
    %444 = arith.mulf %443, %380 : vector<2x16xf32>
    %445 = arith.addf %440, %444 : vector<2x16xf32>
    %446 = vector.broadcast %427 : vector<2x1xf32> to vector<2x16xf32>
    %447 = arith.mulf %438, %446 : vector<2x16xf32>
    %448 = vector.broadcast %431 : vector<2x1xf32> to vector<2x16xf32>
    %449 = arith.mulf %445, %448 : vector<2x16xf32>
    %450 = tpu.concatenate %173, %449 in 1 : vector<2x16xf32>, vector<2x16xf32> -> vector<2x32xf32>
    %451 = tpu.concatenate %245, %391 in 1 : vector<2x16xf32>, vector<2x16xf32> -> vector<2x32xf32>
    %452 = tpu.concatenate %317, %319 in 1 : vector<2x16xf32>, vector<2x16xf32> -> vector<2x32xf32>
    %453 = tpu.concatenate %389, %247 in 1 : vector<2x16xf32>, vector<2x16xf32> -> vector<2x32xf32>
    %454 = tpu.concatenate %447, %175 in 1 : vector<2x16xf32>, vector<2x16xf32> -> vector<2x32xf32>
    %455 = tpu.concatenate %450, %451, %452, %453, %454 in 0 : vector<2x32xf32>, vector<2x32xf32>, vector<2x32xf32>, vector<2x32xf32>, vector<2x32xf32> -> vector<10x32xf32>
    %c0_98 = arith.constant 0 : index
    %c0_99 = arith.constant 0 : index
    %456 = vector.load %arg25[%c0_98, %c0_99] : memref<10x32xf32, #tpu.memory_space<vmem>>, vector<10x32xf32>
    tpu.vector_store %arg25[%c0_98, %c0_99], %455 {strides = array<i32>} : memref<10x32xf32, #tpu.memory_space<vmem>>, vector<10x32xf32>,
    %c0_100 = arith.constant 0 : index
    %c0_101 = arith.constant 0 : index
    %457 = vector.load %arg17[%c0_100, %c0_101] : memref<1x32xf32, #tpu.memory_space<vmem>>, vector<1x32xf32>
    %c0_102 = arith.constant 0 : index
    %458 = memref.load %arg1[%c0_102] : memref<6xi32, #tpu.memory_space<smem>>
    %c2_i32_103 = arith.constant 2 : i32
    %459 = arith.muli %458, %c2_i32_103 : i32
    %c0_i32_104 = arith.constant 0 : i32
    %460 = arith.addi %459, %c0_i32_104 : i32
    %461 = arith.index_cast %460 : i32 to index
    %c0_105 = arith.constant 0 : index
    %462 = vector.load %arg25[%461, %c0_105] : memref<10x32xf32, #tpu.memory_space<vmem>>, vector<1x32xf32>
    %c3_106 = arith.constant 3 : index
    %463 = memref.load %arg1[%c3_106] : memref<6xi32, #tpu.memory_space<smem>>
    %c2_i32_107 = arith.constant 2 : i32
    %464 = arith.muli %463, %c2_i32_107 : i32
    %c1_i32_108 = arith.constant 1 : i32
    %465 = arith.addi %464, %c1_i32_108 : i32
    %466 = arith.index_cast %465 : i32 to index
    %c0_109 = arith.constant 0 : index
    %467 = vector.load %arg25[%466, %c0_109] : memref<10x32xf32, #tpu.memory_space<vmem>>, vector<1x32xf32>
    %c1_110 = arith.constant 1 : index
    %468 = memref.load %arg1[%c1_110] : memref<6xi32, #tpu.memory_space<smem>>
    %c2_i32_111 = arith.constant 2 : i32
    %469 = arith.muli %468, %c2_i32_111 : i32
    %c0_i32_112 = arith.constant 0 : i32
    %470 = arith.addi %469, %c0_i32_112 : i32
    %471 = arith.index_cast %470 : i32 to index
    %c0_113 = arith.constant 0 : index
    %472 = vector.load %arg25[%471, %c0_113] : memref<10x32xf32, #tpu.memory_space<vmem>>, vector<1x32xf32>
    %c4_114 = arith.constant 4 : index
    %473 = memref.load %arg1[%c4_114] : memref<6xi32, #tpu.memory_space<smem>>
    %c2_i32_115 = arith.constant 2 : i32
    %474 = arith.muli %473, %c2_i32_115 : i32
    %c1_i32_116 = arith.constant 1 : i32
    %475 = arith.addi %474, %c1_i32_116 : i32
    %476 = arith.index_cast %475 : i32 to index
    %c0_117 = arith.constant 0 : index
    %477 = vector.load %arg25[%476, %c0_117] : memref<10x32xf32, #tpu.memory_space<vmem>>, vector<1x32xf32>
    %c2_118 = arith.constant 2 : index
    %478 = memref.load %arg1[%c2_118] : memref<6xi32, #tpu.memory_space<smem>>
    %c2_i32_119 = arith.constant 2 : i32
    %479 = arith.muli %478, %c2_i32_119 : i32
    %c0_i32_120 = arith.constant 0 : i32
    %480 = arith.addi %479, %c0_i32_120 : i32
    %481 = arith.index_cast %480 : i32 to index
    %c0_121 = arith.constant 0 : index
    %482 = vector.load %arg25[%481, %c0_121] : memref<10x32xf32, #tpu.memory_space<vmem>>, vector<1x32xf32>
    %c5 = arith.constant 5 : index
    %483 = memref.load %arg1[%c5] : memref<6xi32, #tpu.memory_space<smem>>
    %c2_i32_122 = arith.constant 2 : i32
    %484 = arith.muli %483, %c2_i32_122 : i32
    %c1_i32_123 = arith.constant 1 : i32
    %485 = arith.addi %484, %c1_i32_123 : i32
    %486 = arith.index_cast %485 : i32 to index
    %c0_124 = arith.constant 0 : index
    %487 = vector.load %arg25[%486, %c0_124] : memref<10x32xf32, #tpu.memory_space<vmem>>, vector<1x32xf32>
    %488 = tpu.concatenate %457, %457, %462, %467, %472, %477, %482, %487 in 0 : vector<1x32xf32>, vector<1x32xf32>, vector<1x32xf32>, vector<1x32xf32>, vector<1x32xf32>, vector<1x32xf32>, vector<1x32xf32>, vector<1x32xf32> -> vector<8x32xf32>
    %c0_125 = arith.constant 0 : index
    %c0_126 = arith.constant 0 : index
    %489 = vector.load %arg12[%c0_125, %c0_126] : memref<32x64xf32, #tpu.memory_space<vmem>>, vector<32x64xf32>
    %cst_127 = arith.constant dense<0.000000e+00> : vector<8x64xf32>
    %490 = tpu.matmul %488, %489, %cst_127 {dimension_numbers = #tpu.dot_dimension_numbers<[1], [0], [0], [1], [0, 0, 1, 1], [], []>} : vector<8x32xf32>, vector<32x64xf32>, vector<8x64xf32> -> vector<8x64xf32>
    %c0_128 = arith.constant 0 : index
    %c0_129 = arith.constant 0 : index
    %491 = vector.load %arg14[%c0_128, %c0_129] : memref<1x64xf32, #tpu.memory_space<vmem>>, vector<1x64xf32>
    %492 = vector.broadcast %491 : vector<1x64xf32> to vector<8x64xf32>
    %493 = arith.addf %490, %492 : vector<8x64xf32>
    %c0_130 = arith.constant 0 : index
    %c0_131 = arith.constant 0 : index
    %494 = vector.load %arg13[%c0_130, %c0_131] : memref<16x64xf32, #tpu.memory_space<vmem>>, vector<16x64xf32>
    %cst_132 = arith.constant 0.000000e+00 : f32
    %495 = vector.broadcast %cst_132 : f32 to vector<2x16xf32>
    %c0_133 = arith.constant 0 : index
    %c0_134 = arith.constant 0 : index
    %496 = vector.load %arg15[%c0_133, %c0_134] : memref<1x16xf32, #tpu.memory_space<vmem>>, vector<1x16xf32>
    %497 = vector.broadcast %496 : vector<1x16xf32> to vector<2x16xf32>
    %498 = arith.addf %495, %497 : vector<2x16xf32>
    %cst_135 = arith.constant 0.000000e+00 : f32
    %499 = vector.broadcast %cst_135 : f32 to vector<2x16xf32>
    %c0_136 = arith.constant 0 : index
    %c0_137 = arith.constant 0 : index
    %500 = vector.load %arg16[%c0_136, %c0_137] : memref<1x16xf32, #tpu.memory_space<vmem>>, vector<1x16xf32>
    %501 = vector.broadcast %500 : vector<1x16xf32> to vector<2x16xf32>
    %502 = arith.addf %499, %501 : vector<2x16xf32>
    %503 = vector.extract_strided_slice %493 {offsets = [0, 0], sizes = [2, 64], strides = [1, 1]} : vector<8x64xf32> to vector<2x64xf32>
    %cst_138 = arith.constant dense<0.000000e+00> : vector<2x64xf32>
    %504 = tpu.matmul %498, %494, %cst_138 {dimension_numbers = #tpu.dot_dimension_numbers<[1], [0], [0], [1], [0, 0, 1, 1], [], []>} : vector<2x16xf32>, vector<16x64xf32>, vector<2x64xf32> -> vector<2x64xf32>
    %505 = arith.addf %503, %504 : vector<2x64xf32>
    %cst_139 = arith.constant 5.000000e-01 : f32
    %506 = vector.broadcast %cst_139 : f32 to vector<2x64xf32>
    %507 = arith.mulf %506, %505 : vector<2x64xf32>
    %508 = math.tanh %507 : vector<2x64xf32>
    %cst_140 = arith.constant 1.000000e+00 : f32
    %509 = vector.broadcast %cst_140 : f32 to vector<2x64xf32>
    %510 = arith.addf %508, %509 : vector<2x64xf32>
    %cst_141 = arith.constant 5.000000e-01 : f32
    %511 = vector.broadcast %cst_141 : f32 to vector<2x64xf32>
    %512 = arith.mulf %511, %510 : vector<2x64xf32>
    %513 = vector.extract_strided_slice %512 {offsets = [0, 16], sizes = [2, 16], strides = [1, 1]} : vector<2x64xf32> to vector<2x16xf32>
    %514 = arith.mulf %513, %502 : vector<2x16xf32>
    %515 = vector.extract_strided_slice %512 {offsets = [0, 0], sizes = [2, 16], strides = [1, 1]} : vector<2x64xf32> to vector<2x16xf32>
    %516 = vector.extract_strided_slice %505 {offsets = [0, 32], sizes = [2, 16], strides = [1, 1]} : vector<2x64xf32> to vector<2x16xf32>
    %517 = math.tanh %516 : vector<2x16xf32>
    %518 = arith.mulf %515, %517 : vector<2x16xf32>
    %519 = arith.addf %514, %518 : vector<2x16xf32>
    %520 = vector.extract_strided_slice %512 {offsets = [0, 48], sizes = [2, 16], strides = [1, 1]} : vector<2x64xf32> to vector<2x16xf32>
    %521 = math.tanh %519 : vector<2x16xf32>
    %522 = arith.mulf %520, %521 : vector<2x16xf32>
    %523 = vector.extract_strided_slice %493 {offsets = [2, 0], sizes = [2, 64], strides = [1, 1]} : vector<8x64xf32> to vector<2x64xf32>
    %cst_142 = arith.constant dense<0.000000e+00> : vector<2x64xf32>
    %524 = tpu.matmul %522, %494, %cst_142 {dimension_numbers = #tpu.dot_dimension_numbers<[1], [0], [0], [1], [0, 0, 1, 1], [], []>} : vector<2x16xf32>, vector<16x64xf32>, vector<2x64xf32> -> vector<2x64xf32>
    %525 = arith.addf %523, %524 : vector<2x64xf32>
    %cst_143 = arith.constant 5.000000e-01 : f32
    %526 = vector.broadcast %cst_143 : f32 to vector<2x64xf32>
    %527 = arith.mulf %526, %525 : vector<2x64xf32>
    %528 = math.tanh %527 : vector<2x64xf32>
    %cst_144 = arith.constant 1.000000e+00 : f32
    %529 = vector.broadcast %cst_144 : f32 to vector<2x64xf32>
    %530 = arith.addf %528, %529 : vector<2x64xf32>
    %cst_145 = arith.constant 5.000000e-01 : f32
    %531 = vector.broadcast %cst_145 : f32 to vector<2x64xf32>
    %532 = arith.mulf %531, %530 : vector<2x64xf32>
    %533 = vector.extract_strided_slice %532 {offsets = [0, 16], sizes = [2, 16], strides = [1, 1]} : vector<2x64xf32> to vector<2x16xf32>
    %534 = arith.mulf %533, %519 : vector<2x16xf32>
    %535 = vector.extract_strided_slice %532 {offsets = [0, 0], sizes = [2, 16], strides = [1, 1]} : vector<2x64xf32> to vector<2x16xf32>
    %536 = vector.extract_strided_slice %525 {offsets = [0, 32], sizes = [2, 16], strides = [1, 1]} : vector<2x64xf32> to vector<2x16xf32>
    %537 = math.tanh %536 : vector<2x16xf32>
    %538 = arith.mulf %535, %537 : vector<2x16xf32>
    %539 = arith.addf %534, %538 : vector<2x16xf32>
    %540 = vector.extract_strided_slice %532 {offsets = [0, 48], sizes = [2, 16], strides = [1, 1]} : vector<2x64xf32> to vector<2x16xf32>
    %541 = math.tanh %539 : vector<2x16xf32>
    %542 = arith.mulf %540, %541 : vector<2x16xf32>
    %543 = vector.extract_strided_slice %493 {offsets = [4, 0], sizes = [2, 64], strides = [1, 1]} : vector<8x64xf32> to vector<2x64xf32>
    %cst_146 = arith.constant dense<0.000000e+00> : vector<2x64xf32>
    %544 = tpu.matmul %542, %494, %cst_146 {dimension_numbers = #tpu.dot_dimension_numbers<[1], [0], [0], [1], [0, 0, 1, 1], [], []>} : vector<2x16xf32>, vector<16x64xf32>, vector<2x64xf32> -> vector<2x64xf32>
    %545 = arith.addf %543, %544 : vector<2x64xf32>
    %cst_147 = arith.constant 5.000000e-01 : f32
    %546 = vector.broadcast %cst_147 : f32 to vector<2x64xf32>
    %547 = arith.mulf %546, %545 : vector<2x64xf32>
    %548 = math.tanh %547 : vector<2x64xf32>
    %cst_148 = arith.constant 1.000000e+00 : f32
    %549 = vector.broadcast %cst_148 : f32 to vector<2x64xf32>
    %550 = arith.addf %548, %549 : vector<2x64xf32>
    %cst_149 = arith.constant 5.000000e-01 : f32
    %551 = vector.broadcast %cst_149 : f32 to vector<2x64xf32>
    %552 = arith.mulf %551, %550 : vector<2x64xf32>
    %553 = vector.extract_strided_slice %552 {offsets = [0, 16], sizes = [2, 16], strides = [1, 1]} : vector<2x64xf32> to vector<2x16xf32>
    %554 = arith.mulf %553, %539 : vector<2x16xf32>
    %555 = vector.extract_strided_slice %552 {offsets = [0, 0], sizes = [2, 16], strides = [1, 1]} : vector<2x64xf32> to vector<2x16xf32>
    %556 = vector.extract_strided_slice %545 {offsets = [0, 32], sizes = [2, 16], strides = [1, 1]} : vector<2x64xf32> to vector<2x16xf32>
    %557 = math.tanh %556 : vector<2x16xf32>
    %558 = arith.mulf %555, %557 : vector<2x16xf32>
    %559 = arith.addf %554, %558 : vector<2x16xf32>
    %560 = vector.extract_strided_slice %552 {offsets = [0, 48], sizes = [2, 16], strides = [1, 1]} : vector<2x64xf32> to vector<2x16xf32>
    %561 = math.tanh %559 : vector<2x16xf32>
    %562 = arith.mulf %560, %561 : vector<2x16xf32>
    %563 = vector.extract_strided_slice %493 {offsets = [6, 0], sizes = [2, 64], strides = [1, 1]} : vector<8x64xf32> to vector<2x64xf32>
    %cst_150 = arith.constant dense<0.000000e+00> : vector<2x64xf32>
    %564 = tpu.matmul %562, %494, %cst_150 {dimension_numbers = #tpu.dot_dimension_numbers<[1], [0], [0], [1], [0, 0, 1, 1], [], []>} : vector<2x16xf32>, vector<16x64xf32>, vector<2x64xf32> -> vector<2x64xf32>
    %565 = arith.addf %563, %564 : vector<2x64xf32>
    %cst_151 = arith.constant 5.000000e-01 : f32
    %566 = vector.broadcast %cst_151 : f32 to vector<2x64xf32>
    %567 = arith.mulf %566, %565 : vector<2x64xf32>
    %568 = math.tanh %567 : vector<2x64xf32>
    %cst_152 = arith.constant 1.000000e+00 : f32
    %569 = vector.broadcast %cst_152 : f32 to vector<2x64xf32>
    %570 = arith.addf %568, %569 : vector<2x64xf32>
    %cst_153 = arith.constant 5.000000e-01 : f32
    %571 = vector.broadcast %cst_153 : f32 to vector<2x64xf32>
    %572 = arith.mulf %571, %570 : vector<2x64xf32>
    %573 = vector.extract_strided_slice %572 {offsets = [0, 16], sizes = [2, 16], strides = [1, 1]} : vector<2x64xf32> to vector<2x16xf32>
    %574 = arith.mulf %573, %559 : vector<2x16xf32>
    %575 = vector.extract_strided_slice %572 {offsets = [0, 0], sizes = [2, 16], strides = [1, 1]} : vector<2x64xf32> to vector<2x16xf32>
    %576 = vector.extract_strided_slice %565 {offsets = [0, 32], sizes = [2, 16], strides = [1, 1]} : vector<2x64xf32> to vector<2x16xf32>
    %577 = math.tanh %576 : vector<2x16xf32>
    %578 = arith.mulf %575, %577 : vector<2x16xf32>
    %579 = arith.addf %574, %578 : vector<2x16xf32>
    %580 = vector.extract_strided_slice %572 {offsets = [0, 48], sizes = [2, 16], strides = [1, 1]} : vector<2x64xf32> to vector<2x16xf32>
    %581 = math.tanh %579 : vector<2x16xf32>
    %582 = arith.mulf %580, %581 : vector<2x16xf32>
    %583 = vector.extract_strided_slice %455 {offsets = [0, 0], sizes = [1, 32], strides = [1, 1]} : vector<10x32xf32> to vector<1x32xf32>
    %584 = vector.extract_strided_slice %455 {offsets = [2, 0], sizes = [1, 32], strides = [1, 1]} : vector<10x32xf32> to vector<1x32xf32>
    %585 = vector.extract_strided_slice %455 {offsets = [4, 0], sizes = [1, 32], strides = [1, 1]} : vector<10x32xf32> to vector<1x32xf32>
    %586 = vector.extract_strided_slice %455 {offsets = [6, 0], sizes = [1, 32], strides = [1, 1]} : vector<10x32xf32> to vector<1x32xf32>
    %587 = vector.extract_strided_slice %455 {offsets = [8, 0], sizes = [1, 32], strides = [1, 1]} : vector<10x32xf32> to vector<1x32xf32>
    %588 = vector.extract_strided_slice %455 {offsets = [1, 0], sizes = [1, 32], strides = [1, 1]} : vector<10x32xf32> to vector<1x32xf32>
    %589 = vector.extract_strided_slice %455 {offsets = [3, 0], sizes = [1, 32], strides = [1, 1]} : vector<10x32xf32> to vector<1x32xf32>
    %590 = vector.extract_strided_slice %455 {offsets = [5, 0], sizes = [1, 32], strides = [1, 1]} : vector<10x32xf32> to vector<1x32xf32>
    %591 = vector.extract_strided_slice %455 {offsets = [7, 0], sizes = [1, 32], strides = [1, 1]} : vector<10x32xf32> to vector<1x32xf32>
    %592 = vector.extract_strided_slice %455 {offsets = [9, 0], sizes = [1, 32], strides = [1, 1]} : vector<10x32xf32> to vector<1x32xf32>
    %593 = tpu.concatenate %583, %584, %585, %586, %587, %588, %589, %590, %591, %592 in 0 : vector<1x32xf32>, vector<1x32xf32>, vector<1x32xf32>, vector<1x32xf32>, vector<1x32xf32>, vector<1x32xf32>, vector<1x32xf32>, vector<1x32xf32>, vector<1x32xf32>, vector<1x32xf32> -> vector<10x32xf32>
    %c0_154 = arith.constant 0 : index
    %c0_155 = arith.constant 0 : index
    %594 = vector.load %arg18[%c0_154, %c0_155] : memref<32x16xf32, #tpu.memory_space<vmem>>, vector<32x16xf32>
    %cst_156 = arith.constant dense<0.000000e+00> : vector<10x16xf32>
    %595 = tpu.matmul %593, %594, %cst_156 {dimension_numbers = #tpu.dot_dimension_numbers<[1], [0], [0], [1], [0, 0, 1, 1], [], []>} : vector<10x32xf32>, vector<32x16xf32>, vector<10x16xf32> -> vector<10x16xf32>
    %c0_157 = arith.constant 0 : index
    %c0_158 = arith.constant 0 : index
    %596 = vector.load %arg21[%c0_157, %c0_158] : memref<32x16xf32, #tpu.memory_space<vmem>>, vector<32x16xf32>
    %cst_159 = arith.constant dense<0.000000e+00> : vector<10x16xf32>
    %597 = tpu.matmul %593, %596, %cst_159 {dimension_numbers = #tpu.dot_dimension_numbers<[1], [0], [0], [1], [0, 0, 1, 1], [], []>} : vector<10x32xf32>, vector<32x16xf32>, vector<10x16xf32> -> vector<10x16xf32>
    %c0_160 = arith.constant 0 : index
    %c0_161 = arith.constant 0 : index
    %598 = vector.load %arg20[%c0_160, %c0_161] : memref<1x16xf32, #tpu.memory_space<vmem>>, vector<1x16xf32>
    %c0_162 = arith.constant 0 : index
    %c0_163 = arith.constant 0 : index
    %599 = vector.load %arg23[%c0_162, %c0_163] : memref<1x16xf32, #tpu.memory_space<vmem>>, vector<1x16xf32>
    %600 = tpu.iota {dimensions = array<i32: 1>} : vector<4x5xi32>
    %601 = vector.extract_strided_slice %595 {offsets = [0, 0], sizes = [5, 16], strides = [1, 1]} : vector<10x16xf32> to vector<5x16xf32>
    %602 = vector.extract_strided_slice %597 {offsets = [0, 0], sizes = [5, 16], strides = [1, 1]} : vector<10x16xf32> to vector<5x16xf32>
    %603 = vector.extract_strided_slice %522 {offsets = [0, 0], sizes = [1, 16], strides = [1, 1]} : vector<2x16xf32> to vector<1x16xf32>
    %604 = vector.extract_strided_slice %542 {offsets = [0, 0], sizes = [1, 16], strides = [1, 1]} : vector<2x16xf32> to vector<1x16xf32>
    %605 = vector.extract_strided_slice %562 {offsets = [0, 0], sizes = [1, 16], strides = [1, 1]} : vector<2x16xf32> to vector<1x16xf32>
    %606 = vector.extract_strided_slice %582 {offsets = [0, 0], sizes = [1, 16], strides = [1, 1]} : vector<2x16xf32> to vector<1x16xf32>
    %607 = tpu.concatenate %603, %604, %605, %606 in 0 : vector<1x16xf32>, vector<1x16xf32>, vector<1x16xf32>, vector<1x16xf32> -> vector<4x16xf32>
    %c0_164 = arith.constant 0 : index
    %608 = memref.load %arg0[%c0_164] : memref<2xi32, #tpu.memory_space<smem>>
    %609 = vector.broadcast %608 : i32 to vector<4x5xi32>
    %610 = arith.cmpi slt, %600, %609 : vector<4x5xi32>
    %c0_165 = arith.constant 0 : index
    %c0_166 = arith.constant 0 : index
    %611 = vector.load %arg22[%c0_165, %c0_166] : memref<16x16xf32, #tpu.memory_space<vmem>>, vector<16x16xf32>
    %cst_167 = arith.constant dense<0.000000e+00> : vector<4x16xf32>
    %612 = tpu.matmul %607, %611, %cst_167 {dimension_numbers = #tpu.dot_dimension_numbers<[1], [0], [0], [1], [0, 0, 1, 1], [], []>} : vector<4x16xf32>, vector<16x16xf32>, vector<4x16xf32> -> vector<4x16xf32>
    %613 = vector.shape_cast %612 : vector<4x16xf32> to vector<4x1x16xf32>
    %614 = vector.shape_cast %602 : vector<5x16xf32> to vector<1x5x16xf32>
    %615 = vector.broadcast %613 : vector<4x1x16xf32> to vector<4x5x16xf32>
    %616 = vector.broadcast %614 : vector<1x5x16xf32> to vector<4x5x16xf32>
    %617 = arith.addf %615, %616 : vector<4x5x16xf32>
    %618 = math.tanh %617 : vector<4x5x16xf32>
    %619 = vector.shape_cast %599 : vector<1x16xf32> to vector<1x1x16xf32>
    %620 = vector.broadcast %619 : vector<1x1x16xf32> to vector<4x5x16xf32>
    %621 = arith.mulf %618, %620 : vector<4x5x16xf32>
    %cst_168 = arith.constant dense<0.000000e+00> : vector<4x5xf32>
    %622 = vector.multi_reduction <add>, %621, %cst_168 [2] : vector<4x5x16xf32> to vector<4x5xf32>
    %cst_169 = arith.constant -9.99999984E+17 : f32
    %623 = vector.broadcast %cst_169 : f32 to vector<4x5xf32>
    %624 = arith.select %610, %622, %623 : vector<4x5xi1>, vector<4x5xf32>
    %cst_170 = arith.constant dense<0xFF800000> : vector<4xf32>
    %625 = vector.multi_reduction <maximumf>, %624, %cst_170 [1] : vector<4x5xf32> to vector<4xf32>
    %626 = vector.shape_cast %625 : vector<4xf32> to vector<4x1xf32>
    %627 = vector.broadcast %626 : vector<4x1xf32> to vector<4x5xf32>
    %628 = arith.subf %624, %627 : vector<4x5xf32>
    %629 = math.exp %628 : vector<4x5xf32>
    %cst_171 = arith.constant dense<0.000000e+00> : vector<4xf32>
    %630 = vector.multi_reduction <add>, %629, %cst_171 [1] : vector<4x5xf32> to vector<4xf32>
    %631 = vector.shape_cast %630 : vector<4xf32> to vector<4x1xf32>
    %632 = vector.broadcast %631 : vector<4x1xf32> to vector<4x5xf32>
    %633 = arith.divf %629, %632 : vector<4x5xf32>
    %cst_172 = arith.constant dense<0.000000e+00> : vector<4x16xf32>
    %634 = tpu.matmul %633, %602, %cst_172 {dimension_numbers = #tpu.dot_dimension_numbers<[1], [0], [0], [1], [0, 0, 1, 1], [], []>} : vector<4x5xf32>, vector<5x16xf32>, vector<4x16xf32> -> vector<4x16xf32>
    %c0_173 = arith.constant 0 : index
    %c0_174 = arith.constant 0 : index
    %635 = vector.load %arg19[%c0_173, %c0_174] : memref<16x16xf32, #tpu.memory_space<vmem>>, vector<16x16xf32>
    %cst_175 = arith.constant dense<0.000000e+00> : vector<4x16xf32>
    %636 = tpu.matmul %634, %635, %cst_175 {dimension_numbers = #tpu.dot_dimension_numbers<[1], [0], [0], [1], [0, 0, 1, 1], [], []>} : vector<4x16xf32>, vector<16x16xf32>, vector<4x16xf32> -> vector<4x16xf32>
    %637 = vector.shape_cast %636 : vector<4x16xf32> to vector<4x1x16xf32>
    %638 = vector.shape_cast %601 : vector<5x16xf32> to vector<1x5x16xf32>
    %639 = vector.broadcast %637 : vector<4x1x16xf32> to vector<4x5x16xf32>
    %640 = vector.broadcast %638 : vector<1x5x16xf32> to vector<4x5x16xf32>
    %641 = arith.addf %639, %640 : vector<4x5x16xf32>
    %642 = math.tanh %641 : vector<4x5x16xf32>
    %643 = vector.shape_cast %598 : vector<1x16xf32> to vector<1x1x16xf32>
    %644 = vector.broadcast %643 : vector<1x1x16xf32> to vector<4x5x16xf32>
    %645 = arith.mulf %642, %644 : vector<4x5x16xf32>
    %cst_176 = arith.constant dense<0.000000e+00> : vector<4x5xf32>
    %646 = vector.multi_reduction <add>, %645, %cst_176 [2] : vector<4x5x16xf32> to vector<4x5xf32>
    %647 = vector.extract_strided_slice %595 {offsets = [5, 0], sizes = [5, 16], strides = [1, 1]} : vector<10x16xf32> to vector<5x16xf32>
    %648 = vector.extract_strided_slice %597 {offsets = [5, 0], sizes = [5, 16], strides = [1, 1]} : vector<10x16xf32> to vector<5x16xf32>
    %649 = vector.extract_strided_slice %522 {offsets = [1, 0], sizes = [1, 16], strides = [1, 1]} : vector<2x16xf32> to vector<1x16xf32>
    %650 = vector.extract_strided_slice %542 {offsets = [1, 0], sizes = [1, 16], strides = [1, 1]} : vector<2x16xf32> to vector<1x16xf32>
    %651 = vector.extract_strided_slice %562 {offsets = [1, 0], sizes = [1, 16], strides = [1, 1]} : vector<2x16xf32> to vector<1x16xf32>
    %652 = vector.extract_strided_slice %582 {offsets = [1, 0], sizes = [1, 16], strides = [1, 1]} : vector<2x16xf32> to vector<1x16xf32>
    %653 = tpu.concatenate %649, %650, %651, %652 in 0 : vector<1x16xf32>, vector<1x16xf32>, vector<1x16xf32>, vector<1x16xf32> -> vector<4x16xf32>
    %c1_177 = arith.constant 1 : index
    %654 = memref.load %arg0[%c1_177] : memref<2xi32, #tpu.memory_space<smem>>
    %655 = vector.broadcast %654 : i32 to vector<4x5xi32>
    %656 = arith.cmpi slt, %600, %655 : vector<4x5xi32>
    %c0_178 = arith.constant 0 : index
    %c0_179 = arith.constant 0 : index
    %657 = vector.load %arg22[%c0_178, %c0_179] : memref<16x16xf32, #tpu.memory_space<vmem>>, vector<16x16xf32>
    %cst_180 = arith.constant dense<0.000000e+00> : vector<4x16xf32>
    %658 = tpu.matmul %653, %657, %cst_180 {dimension_numbers = #tpu.dot_dimension_numbers<[1], [0], [0], [1], [0, 0, 1, 1], [], []>} : vector<4x16xf32>, vector<16x16xf32>, vector<4x16xf32> -> vector<4x16xf32>
    %659 = vector.shape_cast %658 : vector<4x16xf32> to vector<4x1x16xf32>
    %660 = vector.shape_cast %648 : vector<5x16xf32> to vector<1x5x16xf32>
    %661 = vector.broadcast %659 : vector<4x1x16xf32> to vector<4x5x16xf32>
    %662 = vector.broadcast %660 : vector<1x5x16xf32> to vector<4x5x16xf32>
    %663 = arith.addf %661, %662 : vector<4x5x16xf32>
    %664 = math.tanh %663 : vector<4x5x16xf32>
    %665 = vector.shape_cast %599 : vector<1x16xf32> to vector<1x1x16xf32>
    %666 = vector.broadcast %665 : vector<1x1x16xf32> to vector<4x5x16xf32>
    %667 = arith.mulf %664, %666 : vector<4x5x16xf32>
    %cst_181 = arith.constant dense<0.000000e+00> : vector<4x5xf32>
    %668 = vector.multi_reduction <add>, %667, %cst_181 [2] : vector<4x5x16xf32> to vector<4x5xf32>
    %cst_182 = arith.constant -9.99999984E+17 : f32
    %669 = vector.broadcast %cst_182 : f32 to vector<4x5xf32>
    %670 = arith.select %656, %668, %669 : vector<4x5xi1>, vector<4x5xf32>
    %cst_183 = arith.constant dense<0xFF800000> : vector<4xf32>
    %671 = vector.multi_reduction <maximumf>, %670, %cst_183 [1] : vector<4x5xf32> to vector<4xf32>
    %672 = vector.shape_cast %671 : vector<4xf32> to vector<4x1xf32>
    %673 = vector.broadcast %672 : vector<4x1xf32> to vector<4x5xf32>
    %674 = arith.subf %670, %673 : vector<4x5xf32>
    %675 = math.exp %674 : vector<4x5xf32>
    %cst_184 = arith.constant dense<0.000000e+00> : vector<4xf32>
    %676 = vector.multi_reduction <add>, %675, %cst_184 [1] : vector<4x5xf32> to vector<4xf32>
    %677 = vector.shape_cast %676 : vector<4xf32> to vector<4x1xf32>
    %678 = vector.broadcast %677 : vector<4x1xf32> to vector<4x5xf32>
    %679 = arith.divf %675, %678 : vector<4x5xf32>
    %cst_185 = arith.constant dense<0.000000e+00> : vector<4x16xf32>
    %680 = tpu.matmul %679, %648, %cst_185 {dimension_numbers = #tpu.dot_dimension_numbers<[1], [0], [0], [1], [0, 0, 1, 1], [], []>} : vector<4x5xf32>, vector<5x16xf32>, vector<4x16xf32> -> vector<4x16xf32>
    %c0_186 = arith.constant 0 : index
    %c0_187 = arith.constant 0 : index
    %681 = vector.load %arg19[%c0_186, %c0_187] : memref<16x16xf32, #tpu.memory_space<vmem>>, vector<16x16xf32>
    %cst_188 = arith.constant dense<0.000000e+00> : vector<4x16xf32>
    %682 = tpu.matmul %680, %681, %cst_188 {dimension_numbers = #tpu.dot_dimension_numbers<[1], [0], [0], [1], [0, 0, 1, 1], [], []>} : vector<4x16xf32>, vector<16x16xf32>, vector<4x16xf32> -> vector<4x16xf32>
    %683 = vector.shape_cast %682 : vector<4x16xf32> to vector<4x1x16xf32>
    %684 = vector.shape_cast %647 : vector<5x16xf32> to vector<1x5x16xf32>
    %685 = vector.broadcast %683 : vector<4x1x16xf32> to vector<4x5x16xf32>
    %686 = vector.broadcast %684 : vector<1x5x16xf32> to vector<4x5x16xf32>
    %687 = arith.addf %685, %686 : vector<4x5x16xf32>
    %688 = math.tanh %687 : vector<4x5x16xf32>
    %689 = vector.shape_cast %598 : vector<1x16xf32> to vector<1x1x16xf32>
    %690 = vector.broadcast %689 : vector<1x1x16xf32> to vector<4x5x16xf32>
    %691 = arith.mulf %688, %690 : vector<4x5x16xf32>
    %cst_189 = arith.constant dense<0.000000e+00> : vector<4x5xf32>
    %692 = vector.multi_reduction <add>, %691, %cst_189 [2] : vector<4x5x16xf32> to vector<4x5xf32>
    %693 = tpu.concatenate %646, %692 in 0 : vector<4x5xf32>, vector<4x5xf32> -> vector<8x5xf32>
    %c0_190 = arith.constant 0 : index
    %c0_191 = arith.constant 0 : index
    %694 = vector.load %arg24[%c0_190, %c0_191] : memref<8x5xf32, #tpu.memory_space<vmem>>, vector<8x5xf32>
    tpu.vector_store %arg24[%c0_190, %c0_191], %693 {strides = array<i32>} : memref<8x5xf32, #tpu.memory_space<vmem>>, vector<8x5xf32>,
    return
  }
}

</mosaic_0001>

<llo_original>
// kernel: ptr_extract_summ_forward.1
$region0: #{ptr_extract_summ_forward.1}
  #allocation0 [shape = 'u32[]', space=smem, size = 0x4, offset = 0x4, fixed_abs, tag = 'smem constant byte address 0x4 - core index']
  #allocation1 [shape = 'u32[144,128]{1,0:T(1,128)}', space=vmem, size = 0x12000, scoped, tag = 'internal scratch']
  #allocation2 [shape = 'f32[10,32]{1,0:T(8,128)}', space=vmem, size = 0x2000, scoped, tag = 'scratch operand']
  %s0 = inlined_call_operand.vmem [shape: s32[2], index: 0, kind: input, shape index: {}]
  %s1 = inlined_call_operand.vmem [shape: s32[6], index: 1, kind: input, shape index: {}]
  %s2 = inlined_call_operand.vmem [shape: s32[104,1], index: 2, kind: input, shape index: {}]
  %s3 = inlined_call_operand.vmem [shape: f32[100,32], index: 3, kind: input, shape index: {}]
  %s4 = inlined_call_operand.vmem [shape: f32[5,32,24], index: 4, kind: input, shape index: {}]
  %s5 = inlined_call_operand.vmem [shape: f32[1,24], index: 5, kind: input, shape index: {}]
  %s6 = inlined_call_operand.vmem [shape: f32[10,91], index: 6, kind: input, shape index: {}]
  %s7 = inlined_call_operand.vmem [shape: f32[24,128], index: 7, kind: input, shape index: {}]
  %s8 = inlined_call_operand.vmem [shape: f32[32,128], index: 8, kind: input, shape index: {}]
  %s9 = inlined_call_operand.vmem [shape: f32[1,128], index: 9, kind: input, shape index: {}]
  %s10 = inlined_call_operand.vmem [shape: f32[2,16], index: 10, kind: input, shape index: {}]
  %s11 = inlined_call_operand.vmem [shape: f32[2,16], index: 11, kind: input, shape index: {}]
  %s12 = inlined_call_operand.vmem [shape: f32[32,64], index: 12, kind: input, shape index: {}]
  %s13 = inlined_call_operand.vmem [shape: f32[16,64], index: 13, kind: input, shape index: {}]
  %s14 = inlined_call_operand.vmem [shape: f32[1,64], index: 14, kind: input, shape index: {}]
  %s15 = inlined_call_operand.vmem [shape: f32[1,16], index: 15, kind: input, shape index: {}]
  %s16 = inlined_call_operand.vmem [shape: f32[1,16], index: 16, kind: input, shape index: {}]
  %s17 = inlined_call_operand.vmem [shape: f32[1,32], index: 17, kind: input, shape index: {}]
  %s18 = inlined_call_operand.vmem [shape: f32[32,16], index: 18, kind: input, shape index: {}]
  %s19 = inlined_call_operand.vmem [shape: f32[16,16], index: 19, kind: input, shape index: {}]
  %s20 = inlined_call_operand.vmem [shape: f32[1,16], index: 20, kind: input, shape index: {}]
  %s21 = inlined_call_operand.vmem [shape: f32[32,16], index: 21, kind: input, shape index: {}]
  %s22 = inlined_call_operand.vmem [shape: f32[16,16], index: 22, kind: input, shape index: {}]
  %s23 = inlined_call_operand.vmem [shape: f32[1,16], index: 23, kind: input, shape index: {}]
  %s24 = inlined_call_operand.hbm [shape: f32[8,5], index: 24, kind: output, shape index: {}]
  %s25 = sld [smem:[#allocation0]]
  $region114: #{ptr_extract_summ_forward.1} parent=0
    _
  %s27 = ssub.s32 1, %s25
  %s28 = scalar_select 0, %s27, %s25
  $region1: #{ptr_extract_summ_forward.1} parent=0
    #allocation3 [shape = 'u8[512]{0}', space=smem, size = 0x200, scoped, tag = 'input window, operand 0, single buffered']
    #allocation4 [shape = 's32[1]{0}', space=sflag, size = 0x4, scoped, tag = 'scoped memory for ptr_extract_summ_forward.1']
    #allocation5 [shape = 's32[1]{0}', space=sflag, size = 0x4, scoped, tag = 'scoped memory for ptr_extract_summ_forward.1']
    #allocation6 [shape = 'u8[512]{0}', space=smem, size = 0x200, scoped, tag = 'input window, operand 1, single buffered']
    #allocation7 [shape = 's32[1]{0}', space=sflag, size = 0x4, scoped, tag = 'scoped memory for ptr_extract_summ_forward.1']
    #allocation8 [shape = 'u8[4096]{0}', space=vmem, size = 0x1000, scoped, tag = 'output window, operand 0, single buffered']
    %29 = vsyncpa [#allocation5], 0
    %30 = vsyncpa [#allocation7], 0
    %31 = vsyncpa [#allocation4], 0
    // Predicated region
    $region2: #{ptr_extract_summ_forward.1} parent=1 // pred_check
      _
    $region3: #{ptr_extract_summ_forward.1} parent=1 // pred_check_branch
      %33 = sbr.rel (0) target = $region5
    $region4: #{ptr_extract_summ_forward.1} parent=1 // pred_region
      %s35 = ssub.s32 16, 16
      %36 = vsyncadd [#allocation5], %s35
      %s38 = sshll.u32 %s0, 4
      %s39 = int_to_ptr.vmem [resolvable:$true] %s38
      %41 = dma.vmem_to_smem %s39, 16, [#allocation3], [#allocation5]
    $region5: #{ptr_extract_summ_forward.1} parent=1 // pred_fallthru
      _
    // Predicated region
    $region6: #{ptr_extract_summ_forward.1} parent=1 // pred_check
      _
    $region7: #{ptr_extract_summ_forward.1} parent=1 // pred_check_branch
      %43 = sbr.rel (0) target = $region9
    $region8: #{ptr_extract_summ_forward.1} parent=1 // pred_region
      %s45 = ssub.s32 16, 16
      %46 = vsyncadd [#allocation7], %s45
      %s48 = sshll.u32 %s1, 4
      %s49 = int_to_ptr.vmem [resolvable:$true] %s48
      %51 = dma.vmem_to_smem %s49, 16, [#allocation6], [#allocation7]
    $region9: #{ptr_extract_summ_forward.1} parent=1 // pred_fallthru
      _
    // Predicated region
    $region10: #{ptr_extract_summ_forward.1} parent=1 // pred_check
      _
    $region11: #{ptr_extract_summ_forward.1} parent=1 // pred_check_branch
      %53 = sbr.rel (0) target = $region13
    $region12: #{ptr_extract_summ_forward.1} parent=1 // pred_region
      _
    $region13: #{ptr_extract_summ_forward.1} parent=1 // pred_fallthru
      _
    // Predicated region
    $region14: #{ptr_extract_summ_forward.1} parent=1 // pred_check
      _
    $region15: #{ptr_extract_summ_forward.1} parent=1 // pred_check_branch
      %55 = sbr.rel (0) target = $region17
    $region16: #{ptr_extract_summ_forward.1} parent=1 // pred_region
      _
    $region17: #{ptr_extract_summ_forward.1} parent=1 // pred_fallthru
      _
    // Predicated region
    $region18: #{ptr_extract_summ_forward.1} parent=1 // pred_check
      _
    $region19: #{ptr_extract_summ_forward.1} parent=1 // pred_check_branch
      %57 = sbr.rel (0) target = $region21
    $region20: #{ptr_extract_summ_forward.1} parent=1 // pred_region
      _
    $region21: #{ptr_extract_summ_forward.1} parent=1 // pred_fallthru
      _
    // Predicated region
    $region22: #{ptr_extract_summ_forward.1} parent=1 // pred_check
      _
    $region23: #{ptr_extract_summ_forward.1} parent=1 // pred_check_branch
      %59 = sbr.rel (0) target = $region25
    $region24: #{ptr_extract_summ_forward.1} parent=1 // pred_region
      _
    $region25: #{ptr_extract_summ_forward.1} parent=1 // pred_fallthru
      _
    // Predicated region
    $region26: #{ptr_extract_summ_forward.1} parent=1 // pred_check
      _
    $region27: #{ptr_extract_summ_forward.1} parent=1 // pred_check_branch
      %61 = sbr.rel (0) target = $region29
    $region28: #{ptr_extract_summ_forward.1} parent=1 // pred_region
      _
    $region29: #{ptr_extract_summ_forward.1} parent=1 // pred_fallthru
      _
    // Predicated region
    $region30: #{ptr_extract_summ_forward.1} parent=1 // pred_check
      _
    $region31: #{ptr_extract_summ_forward.1} parent=1 // pred_check_branch
      %63 = sbr.rel (0) target = $region33
    $region32: #{ptr_extract_summ_forward.1} parent=1 // pred_region
      _
    $region33: #{ptr_extract_summ_forward.1} parent=1 // pred_fallthru
      _
    // Predicated region
    $region34: #{ptr_extract_summ_forward.1} parent=1 // pred_check
      _
    $region35: #{ptr_extract_summ_forward.1} parent=1 // pred_check_branch
      %65 = sbr.rel (0) target = $region37
    $region36: #{ptr_extract_summ_forward.1} parent=1 // pred_region
      _
    $region37: #{ptr_extract_summ_forward.1} parent=1 // pred_fallthru
      _
    // Predicated region
    $region38: #{ptr_extract_summ_forward.1} parent=1 // pred_check
      _
    $region39: #{ptr_extract_summ_forward.1} parent=1 // pred_check_branch
      %67 = sbr.rel (0) target = $region41
    $region40: #{ptr_extract_summ_forward.1} parent=1 // pred_region
      _
    $region41: #{ptr_extract_summ_forward.1} parent=1 // pred_fallthru
      _
    // Predicated region
    $region42: #{ptr_extract_summ_forward.1} parent=1 // pred_check
      _
    $region43: #{ptr_extract_summ_forward.1} parent=1 // pred_check_branch
      %69 = sbr.rel (0) target = $region45
    $region44: #{ptr_extract_summ_forward.1} parent=1 // pred_region
      _
    $region45: #{ptr_extract_summ_forward.1} parent=1 // pred_fallthru
      _
    // Predicated region
    $region46: #{ptr_extract_summ_forward.1} parent=1 // pred_check
      _
    $region47: #{ptr_extract_summ_forward.1} parent=1 // pred_check_branch
      %71 = sbr.rel (0) target = $region49
    $region48: #{ptr_extract_summ_forward.1} parent=1 // pred_region
      _
    $region49: #{ptr_extract_summ_forward.1} parent=1 // pred_fallthru
      _
    // Predicated region
    $region50: #{ptr_extract_summ_forward.1} parent=1 // pred_check
      _
    $region51: #{ptr_extract_summ_forward.1} parent=1 // pred_check_branch
      %73 = sbr.rel (0) target = $region53
    $region52: #{ptr_extract_summ_forward.1} parent=1 // pred_region
      _
    $region53: #{ptr_extract_summ_forward.1} parent=1 // pred_fallthru
      _
    // Predicated region
    $region54: #{ptr_extract_summ_forward.1} parent=1 // pred_check
      _
    $region55: #{ptr_extract_summ_forward.1} parent=1 // pred_check_branch
      %75 = sbr.rel (0) target = $region57
    $region56: #{ptr_extract_summ_forward.1} parent=1 // pred_region
      _
    $region57: #{ptr_extract_summ_forward.1} parent=1 // pred_fallthru
      _
    // Predicated region
    $region58: #{ptr_extract_summ_forward.1} parent=1 // pred_check
      _
    $region59: #{ptr_extract_summ_forward.1} parent=1 // pred_check_branch
      %77 = sbr.rel (0) target = $region61
    $region60: #{ptr_extract_summ_forward.1} parent=1 // pred_region
      _
    $region61: #{ptr_extract_summ_forward.1} parent=1 // pred_fallthru
      _
    // Predicated region
    $region62: #{ptr_extract_summ_forward.1} parent=1 // pred_check
      _
    $region63: #{ptr_extract_summ_forward.1} parent=1 // pred_check_branch
      %79 = sbr.rel (0) target = $region65
    $region64: #{ptr_extract_summ_forward.1} parent=1 // pred_region
      _
    $region65: #{ptr_extract_summ_forward.1} parent=1 // pred_fallthru
      _
    // Predicated region
    $region66: #{ptr_extract_summ_forward.1} parent=1 // pred_check
      _
    $region67: #{ptr_extract_summ_forward.1} parent=1 // pred_check_branch
      %81 = sbr.rel (0) target = $region69
    $region68: #{ptr_extract_summ_forward.1} parent=1 // pred_region
      _
    $region69: #{ptr_extract_summ_forward.1} parent=1 // pred_fallthru
      _
    // Predicated region
    $region70: #{ptr_extract_summ_forward.1} parent=1 // pred_check
      _
    $region71: #{ptr_extract_summ_forward.1} parent=1 // pred_check_branch
      %83 = sbr.rel (0) target = $region73
    $region72: #{ptr_extract_summ_forward.1} parent=1 // pred_region
      _
    $region73: #{ptr_extract_summ_forward.1} parent=1 // pred_fallthru
      _
    // Predicated region
    $region74: #{ptr_extract_summ_forward.1} parent=1 // pred_check
      _
    $region75: #{ptr_extract_summ_forward.1} parent=1 // pred_check_branch
      %85 = sbr.rel (0) target = $region77
    $region76: #{ptr_extract_summ_forward.1} parent=1 // pred_region
      _
    $region77: #{ptr_extract_summ_forward.1} parent=1 // pred_fallthru
      _
    // Predicated region
    $region78: #{ptr_extract_summ_forward.1} parent=1 // pred_check
      _
    $region79: #{ptr_extract_summ_forward.1} parent=1 // pred_check_branch
      %87 = sbr.rel (0) target = $region81
    $region80: #{ptr_extract_summ_forward.1} parent=1 // pred_region
      _
    $region81: #{ptr_extract_summ_forward.1} parent=1 // pred_fallthru
      _
    // Predicated region
    $region82: #{ptr_extract_summ_forward.1} parent=1 // pred_check
      _
    $region83: #{ptr_extract_summ_forward.1} parent=1 // pred_check_branch
      %89 = sbr.rel (0) target = $region85
    $region84: #{ptr_extract_summ_forward.1} parent=1 // pred_region
      _
    $region85: #{ptr_extract_summ_forward.1} parent=1 // pred_fallthru
      _
    // Predicated region
    $region86: #{ptr_extract_summ_forward.1} parent=1 // pred_check
      _
    $region87: #{ptr_extract_summ_forward.1} parent=1 // pred_check_branch
      %91 = sbr.rel (0) target = $region89
    $region88: #{ptr_extract_summ_forward.1} parent=1 // pred_region
      _
    $region89: #{ptr_extract_summ_forward.1} parent=1 // pred_fallthru
      _
    // Predicated region
    $region90: #{ptr_extract_summ_forward.1} parent=1 // pred_check
      _
    $region91: #{ptr_extract_summ_forward.1} parent=1 // pred_check_branch
      %93 = sbr.rel (0) target = $region93
    $region92: #{ptr_extract_summ_forward.1} parent=1 // pred_region
      _
    $region93: #{ptr_extract_summ_forward.1} parent=1 // pred_fallthru
      _
    // Predicated region
    $region94: #{ptr_extract_summ_forward.1} parent=1 // pred_check
      _
    $region95: #{ptr_extract_summ_forward.1} parent=1 // pred_check_branch
      %95 = sbr.rel (0) target = $region97
    $region96: #{ptr_extract_summ_forward.1} parent=1 // pred_region
      _
    $region97: #{ptr_extract_summ_forward.1} parent=1 // pred_fallthru
      _
    // Predicated region
    $region98: #{ptr_extract_summ_forward.1} parent=1 // pred_check
      _
    $region99: #{ptr_extract_summ_forward.1} parent=1 // pred_check_branch
      %97 = sbr.rel (0) target = $region101
    $region100: #{ptr_extract_summ_forward.1} parent=1 // pred_region
      %98 = dma.done [#allocation5], 16
    $region101: #{ptr_extract_summ_forward.1} parent=1 // pred_fallthru
      _
    // Predicated region
    $region102: #{ptr_extract_summ_forward.1} parent=1 // pred_check
      _
    $region103: #{ptr_extract_summ_forward.1} parent=1 // pred_check_branch
      %100 = sbr.rel (0) target = $region105
    $region104: #{ptr_extract_summ_forward.1} parent=1 // pred_region
      %101 = dma.done [#allocation7], 16
    $region105: #{ptr_extract_summ_forward.1} parent=1 // pred_fallthru
      _
    %102 = sfence
    %v103 = vld [vmem:[%s2] sm:$0xff]
    %v104 = vld [vmem:[%s2 + $0x8] sm:$0xff]
    %v105 = vld [vmem:[%s2 + $0x10] sm:$0xff]
    %v106 = vld [vmem:[%s2 + $0x18] sm:$0xff]
    %v107 = vld [vmem:[%s2 + $0x20] sm:$0xff]
    %v108 = vld [vmem:[%s2 + $0x28] sm:$0xff]
    %v109 = vld [vmem:[%s2 + $0x30] sm:$0xff]
    %v110 = vld [vmem:[%s2 + $0x38] sm:$0xff]
    %v111 = vld [vmem:[%s2 + $0x40] sm:$0xff]
    %v112 = vld [vmem:[%s2 + $0x48] sm:$0xff]
    %v113 = vld [vmem:[%s2 + $0x50] sm:$0xff]
    %v114 = vld [vmem:[%s2 + $0x58] sm:$0xff]
    %v115 = vld [vmem:[%s2 + $0x60] sm:$0xff]
    %v116 = vlaneseq
    %v117 = vand.u32 %v116, 127
    %118 = vset.pattern.permute.xlu0 0
    %119 = vperm.xlu0 %118, %v103
    %v120 = vpop.permute.xlu0 %119
    %121 = vset.pattern.permute.xlu0 0
    %122 = vperm.xlu0 %121, %v104
    %v123 = vpop.permute.xlu0 %122
    %124 = vset.pattern.permute.xlu0 0
    %125 = vperm.xlu0 %124, %v105
    %v126 = vpop.permute.xlu0 %125
    %127 = vset.pattern.permute.xlu0 0
    %128 = vperm.xlu0 %127, %v106
    %v129 = vpop.permute.xlu0 %128
    %130 = vset.pattern.permute.xlu0 0
    %131 = vperm.xlu0 %130, %v107
    %v132 = vpop.permute.xlu0 %131
    %133 = vset.pattern.permute.xlu0 0
    %134 = vperm.xlu0 %133, %v108
    %v135 = vpop.permute.xlu0 %134
    %136 = vset.pattern.permute.xlu0 0
    %137 = vperm.xlu0 %136, %v109
    %v138 = vpop.permute.xlu0 %137
    %139 = vset.pattern.permute.xlu0 0
    %140 = vperm.xlu0 %139, %v110
    %v141 = vpop.permute.xlu0 %140
    %142 = vset.pattern.permute.xlu0 0
    %143 = vperm.xlu0 %142, %v111
    %v144 = vpop.permute.xlu0 %143
    %145 = vset.pattern.permute.xlu0 0
    %146 = vperm.xlu0 %145, %v112
    %v147 = vpop.permute.xlu0 %146
    %148 = vset.pattern.permute.xlu0 0
    %149 = vperm.xlu0 %148, %v113
    %v150 = vpop.permute.xlu0 %149
    %151 = vset.pattern.permute.xlu0 0
    %152 = vperm.xlu0 %151, %v114
    %v153 = vpop.permute.xlu0 %152
    %154 = vset.pattern.permute.xlu0 0
    %155 = vperm.xlu0 %154, %v115
    %v156 = vpop.permute.xlu0 %155
    %vm157 = vcmp.eq.s32.totalorder %v120, %v117
    %vm158 = vcmp.eq.s32.totalorder %v123, %v117
    %vm159 = vcmp.eq.s32.totalorder %v126, %v117
    %vm160 = vcmp.eq.s32.totalorder %v129, %v117
    %vm161 = vcmp.eq.s32.totalorder %v132, %v117
    %vm162 = vcmp.eq.s32.totalorder %v135, %v117
    %vm163 = vcmp.eq.s32.totalorder %v138, %v117
    %vm164 = vcmp.eq.s32.totalorder %v141, %v117
    %vm165 = vcmp.eq.s32.totalorder %v144, %v117
    %vm166 = vcmp.eq.s32.totalorder %v147, %v117
    %vm167 = vcmp.eq.s32.totalorder %v150, %v117
    %vm168 = vcmp.eq.s32.totalorder %v153, %v117
    %vm169 = vcmp.eq.s32.totalorder %v156, %v117
    %v170 = vsel %vm157, 1, 0
    %v171 = vsel %vm158, 1, 0
    %v172 = vsel %vm159, 1, 0
    %v173 = vsel %vm160, 1, 0
    %v174 = vsel %vm161, 1, 0
    %v175 = vsel %vm162, 1, 0
    %v176 = vsel %vm163, 1, 0
    %v177 = vsel %vm164, 1, 0
    %v178 = vsel %vm165, 1, 0
    %v179 = vsel %vm166, 1, 0
    %v180 = vsel %vm167, 1, 0
    %v181 = vsel %vm168, 1, 0
    %v182 = vsel %vm169, 1, 0
    %v183 = vcvt.s32.f32 %v170
    %v184 = vcvt.s32.f32 %v171
    %v185 = vcvt.s32.f32 %v172
    %v186 = vcvt.s32.f32 %v173
    %v187 = vcvt.s32.f32 %v174
    %v188 = vcvt.s32.f32 %v175
    %v189 = vcvt.s32.f32 %v176
    %v190 = vcvt.s32.f32 %v177
    %v191 = vcvt.s32.f32 %v178
    %v192 = vcvt.s32.f32 %v179
    %v193 = vcvt.s32.f32 %v180
    %v194 = vcvt.s32.f32 %v181
    %v195 = vcvt.s32.f32 %v182
    %v196 = vld [vmem:[%s3] sm:$0xff]
    %v197 = vld [vmem:[%s3 + $0x8] sm:$0xff]
    %v198 = vld [vmem:[%s3 + $0x10] sm:$0xff]
    %v199 = vld [vmem:[%s3 + $0x18] sm:$0xff]
    %v200 = vld [vmem:[%s3 + $0x20] sm:$0xff]
    %v201 = vld [vmem:[%s3 + $0x28] sm:$0xff]
    %v202 = vld [vmem:[%s3 + $0x30] sm:$0xff]
    %v203 = vld [vmem:[%s3 + $0x38] sm:$0xff]
    %v204 = vld [vmem:[%s3 + $0x40] sm:$0xff]
    %v205 = vld [vmem:[%s3 + $0x48] sm:$0xff]
    %v206 = vld [vmem:[%s3 + $0x50] sm:$0xff]
    %v207 = vld [vmem:[%s3 + $0x58] sm:$0xff]
    %v208 = vld [vmem:[%s3 + $0x60] sm:$0xf]
    %vm209 = vcmask 818176
    %v211 = vsel %vm209, %v183, 0
    %v214 = vsel %vm209, %v184, 0
    %v217 = vsel %vm209, %v185, 0
    %v220 = vsel %vm209, %v186, 0
    %v223 = vsel %vm209, %v187, 0
    %v226 = vsel %vm209, %v188, 0
    %v229 = vsel %vm209, %v189, 0
    %v232 = vsel %vm209, %v190, 0
    %v235 = vsel %vm209, %v191, 0
    %v238 = vsel %vm209, %v192, 0
    %v241 = vsel %vm209, %v193, 0
    %v244 = vsel %vm209, %v194, 0
    %v247 = vsel %vm209, %v195, 0
    %vm249 = vcmask 1043456
    %v251 = vsel %vm249, %v208, 0
    %253 = vmatprep.subr.mxu0 0.0
    %254 = vmatpush1.msra.mxu0 %v196
    %255 = vmatprep.subr.mxu0 0.0
    %256 = vmatpush1.msra.mxu0 %v197
    %257 = vmatprep.subr.mxu0 0.0
    %258 = vmatpush1.msra.mxu0 %v198
    %259 = vmatprep.subr.mxu0 0.0
    %260 = vmatpush1.msra.mxu0 %v199
    %261 = vmatprep.subr.mxu0 0.0
    %262 = vmatpush1.msra.mxu0 %v200
    %263 = vmatprep.subr.mxu0 0.0
    %264 = vmatpush1.msra.mxu0 %v201
    %265 = vmatprep.subr.mxu0 0.0
    %266 = vmatpush1.msra.mxu0 %v202
    %267 = vmatprep.subr.mxu0 0.0
    %268 = vmatpush1.msra.mxu0 %v203
    %269 = vmatprep.subr.mxu0 0.0
    %270 = vmatpush1.msra.mxu0 %v204
    %271 = vmatprep.subr.mxu0 0.0
    %272 = vmatpush1.msra.mxu0 %v205
    %273 = vmatprep.subr.mxu0 0.0
    %274 = vmatpush1.msra.mxu0 %v206
    %275 = vmatprep.subr.mxu0 0.0
    %276 = vmatpush1.msra.mxu0 %v207
    %277 = vmatprep.subr.mxu0 0.0
    %278 = vmatpush1.msra.mxu0 %v251
    %279 = vmatprep.subr.mxu0 0.0
    %280 = vmatpush1.msra.mxu0 0.0
    %281 = vmatprep.subr.mxu0 0.0
    %282 = vmatpush1.msra.mxu0 0.0
    %283 = vmatprep.subr.mxu0 0.0
    %284 = vmatpush1.msra.mxu0 0.0
    %285 = vmatprep.subr.mxu0 0.0
    %286 = vmatpush1.msra.mxu0 0.0
    %287 = vmatprep.subr.mxu0 0.0
    %288 = vmatpush1.msra.mxu0 0.0
    %289 = vmatprep.subr.mxu0 0.0
    %290 = vmatpush1.msra.mxu0 0.0
    %291 = vmatprep.subr.mxu0 0.0
    %292 = vmatpush1.msra.mxu0 0.0
    %293 = vmatprep.subr.mxu0 0.0
    %294 = vmatpush1.msra.mxu0 0.0
    %295 = vmatprep.subr.mxu0 0.0
    %296 = vmatpush1.msra.mxu0 0.0
    %297 = vmatprep.subr.mxu0 0.0
    %298 = vmatpush1.msra.mxu0 0.0
    %299 = vmatprep.subr.mxu0 0.0
    %300 = vmatpush1.msra.mxu0 0.0
    %301 = vmatprep.subr.mxu0 0.0
    %302 = vmatpush1.msra.mxu0 0.0
    %303 = vmatprep.subr.mxu0 0.0
    %304 = vmatpush1.msra.mxu0 0.0
    %305 = vmatprep.subr.mxu0 0.0
    %306 = vmatpush1.msra.mxu0 0.0
    %307 = vmatprep.subr.mxu0 0.0
    %308 = vmatpush1.msra.mxu0 0.0
    %309 = vmatprep.subr.mxu0 0.0
    %310 = vmatpush1.msra.mxu0 0.0
    %311 = vmatprep.subr.mxu0 0.0
    %312 = vmatpush1.msra.mxu0 0.0
    %313 = vmatprep.subr.mxu0 0.0
    %314 = vmatpush1.msra.mxu0 0.0
    %315 = vmatprep.subr.mxu0 0.0
    %316 = vmatpush1.msra.mxu0 0.0
    %317 = vmatprep.mubr.f32.mxu0 0.0
    %318 = vmatmul.mubr.f32.gmra.mrb[0].mxu0 %v211
    %v319 = vpop.f32.mrb[0].mxu0
    %v320 = vadd.f32 0.0, %v319
    %v321 = vpop.f32.mrb[0].mxu0
    %322 = vmatprep.mubr.f32.mxu0 0.0
    %323 = vmatmul.mubr.f32.gmra.mrb[0].mxu0 %v214
    %v324 = vpop.f32.mrb[0].mxu0
    %v325 = vadd.f32 0.0, %v324
    %v326 = vpop.f32.mrb[0].mxu0
    %327 = vmatprep.mubr.f32.mxu0 0.0
    %328 = vmatmul.mubr.f32.gmra.mrb[0].mxu0 %v217
    %v329 = vpop.f32.mrb[0].mxu0
    %v330 = vadd.f32 0.0, %v329
    %v331 = vpop.f32.mrb[0].mxu0
    %332 = vmatprep.mubr.f32.mxu0 0.0
    %333 = vmatmul.mubr.f32.gmra.mrb[0].mxu0 %v220
    %v334 = vpop.f32.mrb[0].mxu0
    %v335 = vadd.f32 0.0, %v334
    %v336 = vpop.f32.mrb[0].mxu0
    %337 = vmatprep.mubr.f32.mxu0 0.0
    %338 = vmatmul.mubr.f32.gmra.mrb[0].mxu0 %v223
    %v339 = vpop.f32.mrb[0].mxu0
    %v340 = vadd.f32 0.0, %v339
    %v341 = vpop.f32.mrb[0].mxu0
    %342 = vmatprep.mubr.f32.mxu0 0.0
    %343 = vmatmul.mubr.f32.gmra.mrb[0].mxu0 %v226
    %v344 = vpop.f32.mrb[0].mxu0
    %v345 = vadd.f32 0.0, %v344
    %v346 = vpop.f32.mrb[0].mxu0
    %347 = vmatprep.mubr.f32.mxu0 0.0
    %348 = vmatmul.mubr.f32.gmra.mrb[0].mxu0 %v229
    %v349 = vpop.f32.mrb[0].mxu0
    %v350 = vadd.f32 0.0, %v349
    %v351 = vpop.f32.mrb[0].mxu0
    %352 = vmatprep.mubr.f32.mxu0 0.0
    %353 = vmatmul.mubr.f32.gmra.mrb[0].mxu0 %v232
    %v354 = vpop.f32.mrb[0].mxu0
    %v355 = vadd.f32 0.0, %v354
    %v356 = vpop.f32.mrb[0].mxu0
    %357 = vmatprep.mubr.f32.mxu0 0.0
    %358 = vmatmul.mubr.f32.gmra.mrb[0].mxu0 %v235
    %v359 = vpop.f32.mrb[0].mxu0
    %v360 = vadd.f32 0.0, %v359
    %v361 = vpop.f32.mrb[0].mxu0
    %362 = vmatprep.mubr.f32.mxu0 0.0
    %363 = vmatmul.mubr.f32.gmra.mrb[0].mxu0 %v238
    %v364 = vpop.f32.mrb[0].mxu0
    %v365 = vadd.f32 0.0, %v364
    %v366 = vpop.f32.mrb[0].mxu0
    %367 = vmatprep.mubr.f32.mxu0 0.0
    %368 = vmatmul.mubr.f32.gmra.mrb[0].mxu0 %v241
    %v369 = vpop.f32.mrb[0].mxu0
    %v370 = vadd.f32 0.0, %v369
    %v371 = vpop.f32.mrb[0].mxu0
    %372 = vmatprep.mubr.f32.mxu0 0.0
    %373 = vmatmul.mubr.f32.gmra.mrb[0].mxu0 %v244
    %v374 = vpop.f32.mrb[0].mxu0
    %v375 = vadd.f32 0.0, %v374
    %v376 = vpop.f32.mrb[0].mxu0
    %377 = vmatprep.mubr.f32.mxu0 0.0
    %378 = vmatmul.mubr.f32.gmra.mrb[0].mxu0 %v247
    %v379 = vpop.f32.mrb[0].mxu0
    %v380 = vadd.f32 0.0, %v379
    %v381 = vpop.f32.mrb[0].mxu0
    %382 = vdwg.mxu0
    %v383 = vld [vmem:[%s4] sm:$0xff]
    %v384 = vld [vmem:[%s4 + $0x8] sm:$0xff]
    %v385 = vld [vmem:[%s4 + $0x10] sm:$0xff]
    %v386 = vld [vmem:[%s4 + $0x18] sm:$0xff]
    %s387 = scalar_lea.vmem %s4, 32
    %v388 = vld [vmem:[%s387] sm:$0xff]
    %v389 = vld [vmem:[%s387 + $0x8] sm:$0xff]
    %v390 = vld [vmem:[%s387 + $0x10] sm:$0xff]
    %v391 = vld [vmem:[%s387 + $0x18] sm:$0xff]
    %vm405 = vcmask 1046528
    %v406 = vrot.slane %v320, 1
    %v407 = vrot.slane %v325, 1
    %v408 = vsel %vm405, %v406, %v407
    %v409 = vrot.slane %v330, 1
    %v410 = vsel %vm405, %v407, %v409
    %v411 = vrot.slane %v335, 1
    %v412 = vsel %vm405, %v409, %v411
    %v413 = vrot.slane %v340, 1
    %v414 = vsel %vm405, %v411, %v413
    %v415 = vrot.slane %v345, 1
    %v416 = vsel %vm405, %v413, %v415
    %v417 = vrot.slane %v350, 1
    %v418 = vsel %vm405, %v415, %v417
    %v419 = vrot.slane %v355, 1
    %v420 = vsel %vm405, %v417, %v419
    %v421 = vrot.slane %v360, 1
    %v422 = vsel %vm405, %v419, %v421
    %v423 = vrot.slane %v365, 1
    %v424 = vsel %vm405, %v421, %v423
    %v425 = vrot.slane %v370, 1
    %v426 = vsel %vm405, %v423, %v425
    %v427 = vrot.slane %v375, 1
    %v428 = vsel %vm405, %v425, %v427
    %v429 = vrot.slane %v380, 1
    %v430 = vsel %vm405, %v427, %v429
    %vm431 = vcmask 261120
    %v432 = vsel %vm431, %v408, 0
    %v434 = vsel %vm431, %v410, 0
    %v436 = vsel %vm431, %v412, 0
    %v438 = vsel %vm431, %v414, 0
    %v440 = vsel %vm431, %v416, 0
    %v442 = vsel %vm431, %v418, 0
    %v444 = vsel %vm431, %v420, 0
    %v446 = vsel %vm431, %v422, 0
    %v448 = vsel %vm431, %v424, 0
    %v450 = vsel %vm431, %v426, 0
    %v452 = vsel %vm431, %v428, 0
    %v454 = vsel %vm431, %v430, 0
    %v456 = vsel %vm431, %v429, 0
    %458 = vmatprep.subr.mxu0 0.0
    %459 = vmatpush1.msra.mxu0 %v388
    %460 = vmatprep.subr.mxu0 0.0
    %461 = vmatpush1.msra.mxu0 %v389
    %462 = vmatprep.subr.mxu0 0.0
    %463 = vmatpush1.msra.mxu0 %v390
    %464 = vmatprep.subr.mxu0 0.0
    %465 = vmatpush1.msra.mxu0 %v391
    %466 = vmatprep.subr.mxu0 0.0
    %467 = vmatpush1.msra.mxu0 0.0
    %468 = vmatprep.subr.mxu0 0.0
    %469 = vmatpush1.msra.mxu0 0.0
    %470 = vmatprep.subr.mxu0 0.0
    %471 = vmatpush1.msra.mxu0 0.0
    %472 = vmatprep.subr.mxu0 0.0
    %473 = vmatpush1.msra.mxu0 0.0
    %474 = vmatprep.subr.mxu0 0.0
    %475 = vmatpush1.msra.mxu0 0.0
    %476 = vmatprep.subr.mxu0 0.0
    %477 = vmatpush1.msra.mxu0 0.0
    %478 = vmatprep.subr.mxu0 0.0
    %479 = vmatpush1.msra.mxu0 0.0
    %480 = vmatprep.subr.mxu0 0.0
    %481 = vmatpush1.msra.mxu0 0.0
    %482 = vmatprep.subr.mxu0 0.0
    %483 = vmatpush1.msra.mxu0 0.0
    %484 = vmatprep.subr.mxu0 0.0
    %485 = vmatpush1.msra.mxu0 0.0
    %486 = vmatprep.subr.mxu0 0.0
    %487 = vmatpush1.msra.mxu0 0.0
    %488 = vmatprep.subr.mxu0 0.0
    %489 = vmatpush1.msra.mxu0 0.0
    %490 = vmatprep.subr.mxu0 0.0
    %491 = vmatpush1.msra.mxu0 0.0
    %492 = vmatprep.subr.mxu0 0.0
    %493 = vmatpush1.msra.mxu0 0.0
    %494 = vmatprep.subr.mxu0 0.0
    %495 = vmatpush1.msra.mxu0 0.0
    %496 = vmatprep.subr.mxu0 0.0
    %497 = vmatpush1.msra.mxu0 0.0
    %498 = vmatprep.subr.mxu0 0.0
    %499 = vmatpush1.msra.mxu0 0.0
    %500 = vmatprep.subr.mxu0 0.0
    %501 = vmatpush1.msra.mxu0 0.0
    %502 = vmatprep.subr.mxu0 0.0
    %503 = vmatpush1.msra.mxu0 0.0
    %504 = vmatprep.subr.mxu0 0.0
    %505 = vmatpush1.msra.mxu0 0.0
    %506 = vmatprep.subr.mxu0 0.0
    %507 = vmatpush1.msra.mxu0 0.0
    %508 = vmatprep.subr.mxu0 0.0
    %509 = vmatpush1.msra.mxu0 0.0
    %510 = vmatprep.subr.mxu0 0.0
    %511 = vmatpush1.msra.mxu0 0.0
    %512 = vmatprep.subr.mxu0 0.0
    %513 = vmatpush1.msra.mxu0 0.0
    %514 = vmatprep.subr.mxu0 0.0
    %515 = vmatpush1.msra.mxu0 0.0
    %516 = vmatprep.subr.mxu0 0.0
    %517 = vmatpush1.msra.mxu0 0.0
    %518 = vmatprep.subr.mxu0 0.0
    %519 = vmatpush1.msra.mxu0 0.0
    %520 = vmatprep.subr.mxu0 0.0
    %521 = vmatpush1.msra.mxu0 0.0
    %522 = vmatprep.mubr.f32.mxu0 0.0
    %523 = vmatmul.mubr.f32.gmra.mrb[0].mxu0 %v432
    %v524 = vpop.f32.mrb[0].mxu0
    %v525 = vadd.f32 0.0, %v524
    %v526 = vpop.f32.mrb[0].mxu0
    %527 = vmatprep.mubr.f32.mxu0 0.0
    %528 = vmatmul.mubr.f32.gmra.mrb[0].mxu0 %v434
    %v529 = vpop.f32.mrb[0].mxu0
    %v530 = vadd.f32 0.0, %v529
    %v531 = vpop.f32.mrb[0].mxu0
    %532 = vmatprep.mubr.f32.mxu0 0.0
    %533 = vmatmul.mubr.f32.gmra.mrb[0].mxu0 %v436
    %v534 = vpop.f32.mrb[0].mxu0
    %v535 = vadd.f32 0.0, %v534
    %v536 = vpop.f32.mrb[0].mxu0
    %537 = vmatprep.mubr.f32.mxu0 0.0
    %538 = vmatmul.mubr.f32.gmra.mrb[0].mxu0 %v438
    %v539 = vpop.f32.mrb[0].mxu0
    %v540 = vadd.f32 0.0, %v539
    %v541 = vpop.f32.mrb[0].mxu0
    %542 = vmatprep.mubr.f32.mxu0 0.0
    %543 = vmatmul.mubr.f32.gmra.mrb[0].mxu0 %v440
    %v544 = vpop.f32.mrb[0].mxu0
    %v545 = vadd.f32 0.0, %v544
    %v546 = vpop.f32.mrb[0].mxu0
    %547 = vmatprep.mubr.f32.mxu0 0.0
    %548 = vmatmul.mubr.f32.gmra.mrb[0].mxu0 %v442
    %v549 = vpop.f32.mrb[0].mxu0
    %v550 = vadd.f32 0.0, %v549
    %v551 = vpop.f32.mrb[0].mxu0
    %552 = vmatprep.mubr.f32.mxu0 0.0
    %553 = vmatmul.mubr.f32.gmra.mrb[0].mxu0 %v444
    %v554 = vpop.f32.mrb[0].mxu0
    %v555 = vadd.f32 0.0, %v554
    %v556 = vpop.f32.mrb[0].mxu0
    %557 = vmatprep.mubr.f32.mxu0 0.0
    %558 = vmatmul.mubr.f32.gmra.mrb[0].mxu0 %v446
    %v559 = vpop.f32.mrb[0].mxu0
    %v560 = vadd.f32 0.0, %v559
    %v561 = vpop.f32.mrb[0].mxu0
    %562 = vmatprep.mubr.f32.mxu0 0.0
    %563 = vmatmul.mubr.f32.gmra.mrb[0].mxu0 %v448
    %v564 = vpop.f32.mrb[0].mxu0
    %v565 = vadd.f32 0.0, %v564
    %v566 = vpop.f32.mrb[0].mxu0
    %567 = vmatprep.mubr.f32.mxu0 0.0
    %568 = vmatmul.mubr.f32.gmra.mrb[0].mxu0 %v450
    %v569 = vpop.f32.mrb[0].mxu0
    %v570 = vadd.f32 0.0, %v569
    %v571 = vpop.f32.mrb[0].mxu0
    %572 = vmatprep.mubr.f32.mxu0 0.0
    %573 = vmatmul.mubr.f32.gmra.mrb[0].mxu0 %v452
    %v574 = vpop.f32.mrb[0].mxu0
    %v575 = vadd.f32 0.0, %v574
    %v576 = vpop.f32.mrb[0].mxu0
    %577 = vmatprep.mubr.f32.mxu0 0.0
    %578 = vmatmul.mubr.f32.gmra.mrb[0].mxu0 %v454
    %v579 = vpop.f32.mrb[0].mxu0
    %v580 = vadd.f32 0.0, %v579
    %v581 = vpop.f32.mrb[0].mxu0
    %582 = vmatprep.mubr.f32.mxu0 0.0
    %583 = vmatmul.mubr.f32.gmra.mrb[0].mxu0 %v456
    %v584 = vpop.f32.mrb[0].mxu0
    %v585 = vadd.f32 0.0, %v584
    %v586 = vpop.f32.mrb[0].mxu0
    %587 = vdwg.mxu0
    %v588 = vsel %vm431, %v320, 0
    %v590 = vsel %vm431, %v325, 0
    %v592 = vsel %vm431, %v330, 0
    %v594 = vsel %vm431, %v335, 0
    %v596 = vsel %vm431, %v340, 0
    %v598 = vsel %vm431, %v345, 0
    %v600 = vsel %vm431, %v350, 0
    %v602 = vsel %vm431, %v355, 0
    %v604 = vsel %vm431, %v360, 0
    %v606 = vsel %vm431, %v365, 0
    %v608 = vsel %vm431, %v370, 0
    %v610 = vsel %vm431, %v375, 0
    %v612 = vsel %vm431, %v380, 0
    %614 = vmatprep.subr.mxu0 0.0
    %615 = vmatpush1.msra.mxu0 %v383
    %616 = vmatprep.subr.mxu0 0.0
    %617 = vmatpush1.msra.mxu0 %v384
    %618 = vmatprep.subr.mxu0 0.0
    %619 = vmatpush1.msra.mxu0 %v385
    %620 = vmatprep.subr.mxu0 0.0
    %621 = vmatpush1.msra.mxu0 %v386
    %622 = vmatprep.subr.mxu0 0.0
    %623 = vmatpush1.msra.mxu0 0.0
    %624 = vmatprep.subr.mxu0 0.0
    %625 = vmatpush1.msra.mxu0 0.0
    %626 = vmatprep.subr.mxu0 0.0
    %627 = vmatpush1.msra.mxu0 0.0
    %628 = vmatprep.subr.mxu0 0.0
    %629 = vmatpush1.msra.mxu0 0.0
    %630 = vmatprep.subr.mxu0 0.0
    %631 = vmatpush1.msra.mxu0 0.0
    %632 = vmatprep.subr.mxu0 0.0
    %633 = vmatpush1.msra.mxu0 0.0
    %634 = vmatprep.subr.mxu0 0.0
    %635 = vmatpush1.msra.mxu0 0.0
    %636 = vmatprep.subr.mxu0 0.0
    %637 = vmatpush1.msra.mxu0 0.0
    %638 = vmatprep.subr.mxu0 0.0
    %639 = vmatpush1.msra.mxu0 0.0
    %640 = vmatprep.subr.mxu0 0.0
    %641 = vmatpush1.msra.mxu0 0.0
    %642 = vmatprep.subr.mxu0 0.0
    %643 = vmatpush1.msra.mxu0 0.0
    %644 = vmatprep.subr.mxu0 0.0
    %645 = vmatpush1.msra.mxu0 0.0
    %646 = vmatprep.subr.mxu0 0.0
    %647 = vmatpush1.msra.mxu0 0.0
    %648 = vmatprep.subr.mxu0 0.0
    %649 = vmatpush1.msra.mxu0 0.0
    %650 = vmatprep.subr.mxu0 0.0
    %651 = vmatpush1.msra.mxu0 0.0
    %652 = vmatprep.subr.mxu0 0.0
    %653 = vmatpush1.msra.mxu0 0.0
    %654 = vmatprep.subr.mxu0 0.0
    %655 = vmatpush1.msra.mxu0 0.0
    %656 = vmatprep.subr.mxu0 0.0
    %657 = vmatpush1.msra.mxu0 0.0
    %658 = vmatprep.subr.mxu0 0.0
    %659 = vmatpush1.msra.mxu0 0.0
    %660 = vmatprep.subr.mxu0 0.0
    %661 = vmatpush1.msra.mxu0 0.0
    %662 = vmatprep.subr.mxu0 0.0
    %663 = vmatpush1.msra.mxu0 0.0
    %664 = vmatprep.subr.mxu0 0.0
    %665 = vmatpush1.msra.mxu0 0.0
    %666 = vmatprep.subr.mxu0 0.0
    %667 = vmatpush1.msra.mxu0 0.0
    %668 = vmatprep.subr.mxu0 0.0
    %669 = vmatpush1.msra.mxu0 0.0
    %670 = vmatprep.subr.mxu0 0.0
    %671 = vmatpush1.msra.mxu0 0.0
    %672 = vmatprep.subr.mxu0 0.0
    %673 = vmatpush1.msra.mxu0 0.0
    %674 = vmatprep.subr.mxu0 0.0
    %675 = vmatpush1.msra.mxu0 0.0
    %676 = vmatprep.subr.mxu0 0.0
    %677 = vmatpush1.msra.mxu0 0.0
    %678 = vmatprep.mubr.f32.mxu0 0.0
    %679 = vmatmul.mubr.f32.gmra.mrb[0].mxu0 %v588
    %v680 = vpop.f32.mrb[0].mxu0
    %v681 = vadd.f32 %v525, %v680
    %v682 = vpop.f32.mrb[0].mxu0
    %683 = vmatprep.mubr.f32.mxu0 0.0
    %684 = vmatmul.mubr.f32.gmra.mrb[0].mxu0 %v590
    %v685 = vpop.f32.mrb[0].mxu0
    %v686 = vadd.f32 %v530, %v685
    %v687 = vpop.f32.mrb[0].mxu0
    %688 = vmatprep.mubr.f32.mxu0 0.0
    %689 = vmatmul.mubr.f32.gmra.mrb[0].mxu0 %v592
    %v690 = vpop.f32.mrb[0].mxu0
    %v691 = vadd.f32 %v535, %v690
    %v692 = vpop.f32.mrb[0].mxu0
    %693 = vmatprep.mubr.f32.mxu0 0.0
    %694 = vmatmul.mubr.f32.gmra.mrb[0].mxu0 %v594
    %v695 = vpop.f32.mrb[0].mxu0
    %v696 = vadd.f32 %v540, %v695
    %v697 = vpop.f32.mrb[0].mxu0
    %698 = vmatprep.mubr.f32.mxu0 0.0
    %699 = vmatmul.mubr.f32.gmra.mrb[0].mxu0 %v596
    %v700 = vpop.f32.mrb[0].mxu0
    %v701 = vadd.f32 %v545, %v700
    %v702 = vpop.f32.mrb[0].mxu0
    %703 = vmatprep.mubr.f32.mxu0 0.0
    %704 = vmatmul.mubr.f32.gmra.mrb[0].mxu0 %v598
    %v705 = vpop.f32.mrb[0].mxu0
    %v706 = vadd.f32 %v550, %v705
    %v707 = vpop.f32.mrb[0].mxu0
    %708 = vmatprep.mubr.f32.mxu0 0.0
    %709 = vmatmul.mubr.f32.gmra.mrb[0].mxu0 %v600
    %v710 = vpop.f32.mrb[0].mxu0
    %v711 = vadd.f32 %v555, %v710
    %v712 = vpop.f32.mrb[0].mxu0
    %713 = vmatprep.mubr.f32.mxu0 0.0
    %714 = vmatmul.mubr.f32.gmra.mrb[0].mxu0 %v602
    %v715 = vpop.f32.mrb[0].mxu0
    %v716 = vadd.f32 %v560, %v715
    %v717 = vpop.f32.mrb[0].mxu0
    %718 = vmatprep.mubr.f32.mxu0 0.0
    %719 = vmatmul.mubr.f32.gmra.mrb[0].mxu0 %v604
    %v720 = vpop.f32.mrb[0].mxu0
    %v721 = vadd.f32 %v565, %v720
    %v722 = vpop.f32.mrb[0].mxu0
    %723 = vmatprep.mubr.f32.mxu0 0.0
    %724 = vmatmul.mubr.f32.gmra.mrb[0].mxu0 %v606
    %v725 = vpop.f32.mrb[0].mxu0
    %v726 = vadd.f32 %v570, %v725
    %v727 = vpop.f32.mrb[0].mxu0
    %728 = vmatprep.mubr.f32.mxu0 0.0
    %729 = vmatmul.mubr.f32.gmra.mrb[0].mxu0 %v608
    %v730 = vpop.f32.mrb[0].mxu0
    %v731 = vadd.f32 %v575, %v730
    %v732 = vpop.f32.mrb[0].mxu0
    %733 = vmatprep.mubr.f32.mxu0 0.0
    %734 = vmatmul.mubr.f32.gmra.mrb[0].mxu0 %v610
    %v735 = vpop.f32.mrb[0].mxu0
    %v736 = vadd.f32 %v580, %v735
    %v737 = vpop.f32.mrb[0].mxu0
    %738 = vmatprep.mubr.f32.mxu0 0.0
    %739 = vmatmul.mubr.f32.gmra.mrb[0].mxu0 %v612
    %v740 = vpop.f32.mrb[0].mxu0
    %v741 = vadd.f32 %v585, %v740
    %v742 = vpop.f32.mrb[0].mxu0
    %743 = vdwg.mxu0
    %s744 = scalar_lea.vmem %s4, 64
    %v745 = vld [vmem:[%s744] sm:$0xff]
    %v746 = vld [vmem:[%s744 + $0x8] sm:$0xff]
    %v747 = vld [vmem:[%s744 + $0x10] sm:$0xff]
    %v748 = vld [vmem:[%s744 + $0x18] sm:$0xff]
    %vm749 = vcmask 1045504
    %v750 = vrot.slane %v320, 2
    %v751 = vrot.slane %v325, 2
    %v752 = vsel %vm749, %v750, %v751
    %v753 = vrot.slane %v330, 2
    %v754 = vsel %vm749, %v751, %v753
    %v755 = vrot.slane %v335, 2
    %v756 = vsel %vm749, %v753, %v755
    %v757 = vrot.slane %v340, 2
    %v758 = vsel %vm749, %v755, %v757
    %v759 = vrot.slane %v345, 2
    %v760 = vsel %vm749, %v757, %v759
    %v761 = vrot.slane %v350, 2
    %v762 = vsel %vm749, %v759, %v761
    %v763 = vrot.slane %v355, 2
    %v764 = vsel %vm749, %v761, %v763
    %v765 = vrot.slane %v360, 2
    %v766 = vsel %vm749, %v763, %v765
    %v767 = vrot.slane %v365, 2
    %v768 = vsel %vm749, %v765, %v767
    %v769 = vrot.slane %v370, 2
    %v770 = vsel %vm749, %v767, %v769
    %v771 = vrot.slane %v375, 2
    %v772 = vsel %vm749, %v769, %v771
    %v773 = vrot.slane %v380, 2
    %v774 = vsel %vm749, %v771, %v773
    %v775 = vsel %vm431, %v752, 0
    %v777 = vsel %vm431, %v754, 0
    %v779 = vsel %vm431, %v756, 0
    %v781 = vsel %vm431, %v758, 0
    %v783 = vsel %vm431, %v760, 0
    %v785 = vsel %vm431, %v762, 0
    %v787 = vsel %vm431, %v764, 0
    %v789 = vsel %vm431, %v766, 0
    %v791 = vsel %vm431, %v768, 0
    %v793 = vsel %vm431, %v770, 0
    %v795 = vsel %vm431, %v772, 0
    %v797 = vsel %vm431, %v774, 0
    %v799 = vsel %vm431, %v773, 0
    %801 = vmatprep.subr.mxu0 0.0
    %802 = vmatpush1.msra.mxu0 %v745
    %803 = vmatprep.subr.mxu0 0.0
    %804 = vmatpush1.msra.mxu0 %v746
    %805 = vmatprep.subr.mxu0 0.0
    %806 = vmatpush1.msra.mxu0 %v747
    %807 = vmatprep.subr.mxu0 0.0
    %808 = vmatpush1.msra.mxu0 %v748
    %809 = vmatprep.subr.mxu0 0.0
    %810 = vmatpush1.msra.mxu0 0.0
    %811 = vmatprep.subr.mxu0 0.0
    %812 = vmatpush1.msra.mxu0 0.0
    %813 = vmatprep.subr.mxu0 0.0
    %814 = vmatpush1.msra.mxu0 0.0
    %815 = vmatprep.subr.mxu0 0.0
    %816 = vmatpush1.msra.mxu0 0.0
    %817 = vmatprep.subr.mxu0 0.0
    %818 = vmatpush1.msra.mxu0 0.0
    %819 = vmatprep.subr.mxu0 0.0
    %820 = vmatpush1.msra.mxu0 0.0
    %821 = vmatprep.subr.mxu0 0.0
    %822 = vmatpush1.msra.mxu0 0.0
    %823 = vmatprep.subr.mxu0 0.0
    %824 = vmatpush1.msra.mxu0 0.0
    %825 = vmatprep.subr.mxu0 0.0
    %826 = vmatpush1.msra.mxu0 0.0
    %827 = vmatprep.subr.mxu0 0.0
    %828 = vmatpush1.msra.mxu0 0.0
    %829 = vmatprep.subr.mxu0 0.0
    %830 = vmatpush1.msra.mxu0 0.0
    %831 = vmatprep.subr.mxu0 0.0
    %832 = vmatpush1.msra.mxu0 0.0
    %833 = vmatprep.subr.mxu0 0.0
    %834 = vmatpush1.msra.mxu0 0.0
    %835 = vmatprep.subr.mxu0 0.0
    %836 = vmatpush1.msra.mxu0 0.0
    %837 = vmatprep.subr.mxu0 0.0
    %838 = vmatpush1.msra.mxu0 0.0
    %839 = vmatprep.subr.mxu0 0.0
    %840 = vmatpush1.msra.mxu0 0.0
    %841 = vmatprep.subr.mxu0 0.0
    %842 = vmatpush1.msra.mxu0 0.0
    %843 = vmatprep.subr.mxu0 0.0
    %844 = vmatpush1.msra.mxu0 0.0
    %845 = vmatprep.subr.mxu0 0.0
    %846 = vmatpush1.msra.mxu0 0.0
    %847 = vmatprep.subr.mxu0 0.0
    %848 = vmatpush1.msra.mxu0 0.0
    %849 = vmatprep.subr.mxu0 0.0
    %850 = vmatpush1.msra.mxu0 0.0
    %851 = vmatprep.subr.mxu0 0.0
    %852 = vmatpush1.msra.mxu0 0.0
    %853 = vmatprep.subr.mxu0 0.0
    %854 = vmatpush1.msra.mxu0 0.0
    %855 = vmatprep.subr.mxu0 0.0
    %856 = vmatpush1.msra.mxu0 0.0
    %857 = vmatprep.subr.mxu0 0.0
    %858 = vmatpush1.msra.mxu0 0.0
    %859 = vmatprep.subr.mxu0 0.0
    %860 = vmatpush1.msra.mxu0 0.0
    %861 = vmatprep.subr.mxu0 0.0
    %862 = vmatpush1.msra.mxu0 0.0
    %863 = vmatprep.subr.mxu0 0.0
    %864 = vmatpush1.msra.mxu0 0.0
    %865 = vmatprep.mubr.f32.mxu0 0.0
    %866 = vmatmul.mubr.f32.gmra.mrb[0].mxu0 %v775
    %v867 = vpop.f32.mrb[0].mxu0
    %v868 = vadd.f32 0.0, %v867
    %v869 = vpop.f32.mrb[0].mxu0
    %870 = vmatprep.mubr.f32.mxu0 0.0
    %871 = vmatmul.mubr.f32.gmra.mrb[0].mxu0 %v777
    %v872 = vpop.f32.mrb[0].mxu0
    %v873 = vadd.f32 0.0, %v872
    %v874 = vpop.f32.mrb[0].mxu0
    %875 = vmatprep.mubr.f32.mxu0 0.0
    %876 = vmatmul.mubr.f32.gmra.mrb[0].mxu0 %v779
    %v877 = vpop.f32.mrb[0].mxu0
    %v878 = vadd.f32 0.0, %v877
    %v879 = vpop.f32.mrb[0].mxu0
    %880 = vmatprep.mubr.f32.mxu0 0.0
    %881 = vmatmul.mubr.f32.gmra.mrb[0].mxu0 %v781
    %v882 = vpop.f32.mrb[0].mxu0
    %v883 = vadd.f32 0.0, %v882
    %v884 = vpop.f32.mrb[0].mxu0
    %885 = vmatprep.mubr.f32.mxu0 0.0
    %886 = vmatmul.mubr.f32.gmra.mrb[0].mxu0 %v783
    %v887 = vpop.f32.mrb[0].mxu0
    %v888 = vadd.f32 0.0, %v887
    %v889 = vpop.f32.mrb[0].mxu0
    %890 = vmatprep.mubr.f32.mxu0 0.0
    %891 = vmatmul.mubr.f32.gmra.mrb[0].mxu0 %v785
    %v892 = vpop.f32.mrb[0].mxu0
    %v893 = vadd.f32 0.0, %v892
    %v894 = vpop.f32.mrb[0].mxu0
    %895 = vmatprep.mubr.f32.mxu0 0.0
    %896 = vmatmul.mubr.f32.gmra.mrb[0].mxu0 %v787
    %v897 = vpop.f32.mrb[0].mxu0
    %v898 = vadd.f32 0.0, %v897
    %v899 = vpop.f32.mrb[0].mxu0
    %900 = vmatprep.mubr.f32.mxu0 0.0
    %901 = vmatmul.mubr.f32.gmra.mrb[0].mxu0 %v789
    %v902 = vpop.f32.mrb[0].mxu0
    %v903 = vadd.f32 0.0, %v902
    %v904 = vpop.f32.mrb[0].mxu0
    %905 = vmatprep.mubr.f32.mxu0 0.0
    %906 = vmatmul.mubr.f32.gmra.mrb[0].mxu0 %v791
    %v907 = vpop.f32.mrb[0].mxu0
    %v908 = vadd.f32 0.0, %v907
    %v909 = vpop.f32.mrb[0].mxu0
    %910 = vmatprep.mubr.f32.mxu0 0.0
    %911 = vmatmul.mubr.f32.gmra.mrb[0].mxu0 %v793
    %v912 = vpop.f32.mrb[0].mxu0
    %v913 = vadd.f32 0.0, %v912
    %v914 = vpop.f32.mrb[0].mxu0
    %915 = vmatprep.mubr.f32.mxu0 0.0
    %916 = vmatmul.mubr.f32.gmra.mrb[0].mxu0 %v795
    %v917 = vpop.f32.mrb[0].mxu0
    %v918 = vadd.f32 0.0, %v917
    %v919 = vpop.f32.mrb[0].mxu0
    %920 = vmatprep.mubr.f32.mxu0 0.0
    %921 = vmatmul.mubr.f32.gmra.mrb[0].mxu0 %v797
    %v922 = vpop.f32.mrb[0].mxu0
    %v923 = vadd.f32 0.0, %v922
    %v924 = vpop.f32.mrb[0].mxu0
    %925 = vmatprep.mubr.f32.mxu0 0.0
    %926 = vmatmul.mubr.f32.gmra.mrb[0].mxu0 %v799
    %v927 = vpop.f32.mrb[0].mxu0
    %v928 = vadd.f32 0.0, %v927
    %v929 = vpop.f32.mrb[0].mxu0
    %930 = vdwg.mxu0
    %v931 = vadd.f32 %v681, %v868
    %v932 = vadd.f32 %v686, %v873
    %v933 = vadd.f32 %v691, %v878
    %v934 = vadd.f32 %v696, %v883
    %v935 = vadd.f32 %v701, %v888
    %v936 = vadd.f32 %v706, %v893
    %v937 = vadd.f32 %v711, %v898
    %v938 = vadd.f32 %v716, %v903
    %v939 = vadd.f32 %v721, %v908
    %v940 = vadd.f32 %v726, %v913
    %v941 = vadd.f32 %v731, %v918
    %v942 = vadd.f32 %v736, %v923
    %v943 = vadd.f32 %v741, %v928
    %s944 = scalar_lea.vmem %s4, 96
    %v945 = vld [vmem:[%s944] sm:$0xff]
    %v946 = vld [vmem:[%s944 + $0x8] sm:$0xff]
    %v947 = vld [vmem:[%s944 + $0x10] sm:$0xff]
    %v948 = vld [vmem:[%s944 + $0x18] sm:$0xff]
    %vm949 = vcmask 1044480
    %v950 = vrot.slane %v320, 3
    %v951 = vrot.slane %v325, 3
    %v952 = vsel %vm949, %v950, %v951
    %v953 = vrot.slane %v330, 3
    %v954 = vsel %vm949, %v951, %v953
    %v955 = vrot.slane %v335, 3
    %v956 = vsel %vm949, %v953, %v955
    %v957 = vrot.slane %v340, 3
    %v958 = vsel %vm949, %v955, %v957
    %v959 = vrot.slane %v345, 3
    %v960 = vsel %vm949, %v957, %v959
    %v961 = vrot.slane %v350, 3
    %v962 = vsel %vm949, %v959, %v961
    %v963 = vrot.slane %v355, 3
    %v964 = vsel %vm949, %v961, %v963
    %v965 = vrot.slane %v360, 3
    %v966 = vsel %vm949, %v963, %v965
    %v967 = vrot.slane %v365, 3
    %v968 = vsel %vm949, %v965, %v967
    %v969 = vrot.slane %v370, 3
    %v970 = vsel %vm949, %v967, %v969
    %v971 = vrot.slane %v375, 3
    %v972 = vsel %vm949, %v969, %v971
    %v973 = vrot.slane %v380, 3
    %v974 = vsel %vm949, %v971, %v973
    %v975 = vsel %vm431, %v952, 0
    %v977 = vsel %vm431, %v954, 0
    %v979 = vsel %vm431, %v956, 0
    %v981 = vsel %vm431, %v958, 0
    %v983 = vsel %vm431, %v960, 0
    %v985 = vsel %vm431, %v962, 0
    %v987 = vsel %vm431, %v964, 0
    %v989 = vsel %vm431, %v966, 0
    %v991 = vsel %vm431, %v968, 0
    %v993 = vsel %vm431, %v970, 0
    %v995 = vsel %vm431, %v972, 0
    %v997 = vsel %vm431, %v974, 0
    %v999 = vsel %vm431, %v973, 0
    %1001 = vmatprep.subr.mxu0 0.0
    %1002 = vmatpush1.msra.mxu0 %v945
    %1003 = vmatprep.subr.mxu0 0.0
    %1004 = vmatpush1.msra.mxu0 %v946
    %1005 = vmatprep.subr.mxu0 0.0
    %1006 = vmatpush1.msra.mxu0 %v947
    %1007 = vmatprep.subr.mxu0 0.0
    %1008 = vmatpush1.msra.mxu0 %v948
    %1009 = vmatprep.subr.mxu0 0.0
    %1010 = vmatpush1.msra.mxu0 0.0
    %1011 = vmatprep.subr.mxu0 0.0
    %1012 = vmatpush1.msra.mxu0 0.0
    %1013 = vmatprep.subr.mxu0 0.0
    %1014 = vmatpush1.msra.mxu0 0.0
    %1015 = vmatprep.subr.mxu0 0.0
    %1016 = vmatpush1.msra.mxu0 0.0
    %1017 = vmatprep.subr.mxu0 0.0
    %1018 = vmatpush1.msra.mxu0 0.0
    %1019 = vmatprep.subr.mxu0 0.0
    %1020 = vmatpush1.msra.mxu0 0.0
    %1021 = vmatprep.subr.mxu0 0.0
    %1022 = vmatpush1.msra.mxu0 0.0
    %1023 = vmatprep.subr.mxu0 0.0
    %1024 = vmatpush1.msra.mxu0 0.0
    %1025 = vmatprep.subr.mxu0 0.0
    %1026 = vmatpush1.msra.mxu0 0.0
    %1027 = vmatprep.subr.mxu0 0.0
    %1028 = vmatpush1.msra.mxu0 0.0
    %1029 = vmatprep.subr.mxu0 0.0
    %1030 = vmatpush1.msra.mxu0 0.0
    %1031 = vmatprep.subr.mxu0 0.0
    %1032 = vmatpush1.msra.mxu0 0.0
    %1033 = vmatprep.subr.mxu0 0.0
    %1034 = vmatpush1.msra.mxu0 0.0
    %1035 = vmatprep.subr.mxu0 0.0
    %1036 = vmatpush1.msra.mxu0 0.0
    %1037 = vmatprep.subr.mxu0 0.0
    %1038 = vmatpush1.msra.mxu0 0.0
    %1039 = vmatprep.subr.mxu0 0.0
    %1040 = vmatpush1.msra.mxu0 0.0
    %1041 = vmatprep.subr.mxu0 0.0
    %1042 = vmatpush1.msra.mxu0 0.0
    %1043 = vmatprep.subr.mxu0 0.0
    %1044 = vmatpush1.msra.mxu0 0.0
    %1045 = vmatprep.subr.mxu0 0.0
    %1046 = vmatpush1.msra.mxu0 0.0
    %1047 = vmatprep.subr.mxu0 0.0
    %1048 = vmatpush1.msra.mxu0 0.0
    %1049 = vmatprep.subr.mxu0 0.0
    %1050 = vmatpush1.msra.mxu0 0.0
    %1051 = vmatprep.subr.mxu0 0.0
    %1052 = vmatpush1.msra.mxu0 0.0
    %1053 = vmatprep.subr.mxu0 0.0
    %1054 = vmatpush1.msra.mxu0 0.0
    %1055 = vmatprep.subr.mxu0 0.0
    %1056 = vmatpush1.msra.mxu0 0.0
    %1057 = vmatprep.subr.mxu0 0.0
    %1058 = vmatpush1.msra.mxu0 0.0
    %1059 = vmatprep.subr.mxu0 0.0
    %1060 = vmatpush1.msra.mxu0 0.0
    %1061 = vmatprep.subr.mxu0 0.0
    %1062 = vmatpush1.msra.mxu0 0.0
    %1063 = vmatprep.subr.mxu0 0.0
    %1064 = vmatpush1.msra.mxu0 0.0
    %1065 = vmatprep.mubr.f32.mxu0 0.0
    %1066 = vmatmul.mubr.f32.gmra.mrb[0].mxu0 %v975
    %v1067 = vpop.f32.mrb[0].mxu0
    %v1068 = vadd.f32 0.0, %v1067
    %v1069 = vpop.f32.mrb[0].mxu0
    %1070 = vmatprep.mubr.f32.mxu0 0.0
    %1071 = vmatmul.mubr.f32.gmra.mrb[0].mxu0 %v977
    %v1072 = vpop.f32.mrb[0].mxu0
    %v1073 = vadd.f32 0.0, %v1072
    %v1074 = vpop.f32.mrb[0].mxu0
    %1075 = vmatprep.mubr.f32.mxu0 0.0
    %1076 = vmatmul.mubr.f32.gmra.mrb[0].mxu0 %v979
    %v1077 = vpop.f32.mrb[0].mxu0
    %v1078 = vadd.f32 0.0, %v1077
    %v1079 = vpop.f32.mrb[0].mxu0
    %1080 = vmatprep.mubr.f32.mxu0 0.0
    %1081 = vmatmul.mubr.f32.gmra.mrb[0].mxu0 %v981
    %v1082 = vpop.f32.mrb[0].mxu0
    %v1083 = vadd.f32 0.0, %v1082
    %v1084 = vpop.f32.mrb[0].mxu0
    %1085 = vmatprep.mubr.f32.mxu0 0.0
    %1086 = vmatmul.mubr.f32.gmra.mrb[0].mxu0 %v983
    %v1087 = vpop.f32.mrb[0].mxu0
    %v1088 = vadd.f32 0.0, %v1087
    %v1089 = vpop.f32.mrb[0].mxu0
    %1090 = vmatprep.mubr.f32.mxu0 0.0
    %1091 = vmatmul.mubr.f32.gmra.mrb[0].mxu0 %v985
    %v1092 = vpop.f32.mrb[0].mxu0
    %v1093 = vadd.f32 0.0, %v1092
    %v1094 = vpop.f32.mrb[0].mxu0
    %1095 = vmatprep.mubr.f32.mxu0 0.0
    %1096 = vmatmul.mubr.f32.gmra.mrb[0].mxu0 %v987
    %v1097 = vpop.f32.mrb[0].mxu0
    %v1098 = vadd.f32 0.0, %v1097
    %v1099 = vpop.f32.mrb[0].mxu0
    %1100 = vmatprep.mubr.f32.mxu0 0.0
    %1101 = vmatmul.mubr.f32.gmra.mrb[0].mxu0 %v989
    %v1102 = vpop.f32.mrb[0].mxu0
    %v1103 = vadd.f32 0.0, %v1102
    %v1104 = vpop.f32.mrb[0].mxu0
    %1105 = vmatprep.mubr.f32.mxu0 0.0
    %1106 = vmatmul.mubr.f32.gmra.mrb[0].mxu0 %v991
    %v1107 = vpop.f32.mrb[0].mxu0
    %v1108 = vadd.f32 0.0, %v1107
    %v1109 = vpop.f32.mrb[0].mxu0
    %1110 = vmatprep.mubr.f32.mxu0 0.0
    %1111 = vmatmul.mubr.f32.gmra.mrb[0].mxu0 %v993
    %v1112 = vpop.f32.mrb[0].mxu0
    %v1113 = vadd.f32 0.0, %v1112
    %v1114 = vpop.f32.mrb[0].mxu0
    %1115 = vmatprep.mubr.f32.mxu0 0.0
    %1116 = vmatmul.mubr.f32.gmra.mrb[0].mxu0 %v995
    %v1117 = vpop.f32.mrb[0].mxu0
    %v1118 = vadd.f32 0.0, %v1117
    %v1119 = vpop.f32.mrb[0].mxu0
    %1120 = vmatprep.mubr.f32.mxu0 0.0
    %1121 = vmatmul.mubr.f32.gmra.mrb[0].mxu0 %v997
    %v1122 = vpop.f32.mrb[0].mxu0
    %v1123 = vadd.f32 0.0, %v1122
    %v1124 = vpop.f32.mrb[0].mxu0
    %1125 = vmatprep.mubr.f32.mxu0 0.0
    %1126 = vmatmul.mubr.f32.gmra.mrb[0].mxu0 %v999
    %v1127 = vpop.f32.mrb[0].mxu0
    %v1128 = vadd.f32 0.0, %v1127
    %v1129 = vpop.f32.mrb[0].mxu0
    %1130 = vdwg.mxu0
    %v1131 = vadd.f32 %v931, %v1068
    %v1132 = vadd.f32 %v932, %v1073
    %v1133 = vadd.f32 %v933, %v1078
    %v1134 = vadd.f32 %v934, %v1083
    %v1135 = vadd.f32 %v935, %v1088
    %v1136 = vadd.f32 %v936, %v1093
    %v1137 = vadd.f32 %v937, %v1098
    %v1138 = vadd.f32 %v938, %v1103
    %v1139 = vadd.f32 %v939, %v1108
    %v1140 = vadd.f32 %v940, %v1113
    %v1141 = vadd.f32 %v941, %v1118
    %v1142 = vadd.f32 %v942, %v1123
    %v1143 = vadd.f32 %v943, %v1128
    %s1144 = scalar_lea.vmem %s4, 128
    %v1145 = vld [vmem:[%s1144] sm:$0xff]
    %v1146 = vld [vmem:[%s1144 + $0x8] sm:$0xff]
    %v1147 = vld [vmem:[%s1144 + $0x10] sm:$0xff]
    %v1148 = vld [vmem:[%s1144 + $0x18] sm:$0xff]
    %v1149 = vrot.slane %v320, 4
    %v1150 = vrot.slane %v325, 4
    %v1151 = vsel %vm249, %v1149, %v1150
    %v1152 = vrot.slane %v330, 4
    %v1153 = vsel %vm249, %v1150, %v1152
    %v1154 = vrot.slane %v335, 4
    %v1155 = vsel %vm249, %v1152, %v1154
    %v1156 = vrot.slane %v340, 4
    %v1157 = vsel %vm249, %v1154, %v1156
    %v1158 = vrot.slane %v345, 4
    %v1159 = vsel %vm249, %v1156, %v1158
    %v1160 = vrot.slane %v350, 4
    %v1161 = vsel %vm249, %v1158, %v1160
    %v1162 = vrot.slane %v355, 4
    %v1163 = vsel %vm249, %v1160, %v1162
    %v1164 = vrot.slane %v360, 4
    %v1165 = vsel %vm249, %v1162, %v1164
    %v1166 = vrot.slane %v365, 4
    %v1167 = vsel %vm249, %v1164, %v1166
    %v1168 = vrot.slane %v370, 4
    %v1169 = vsel %vm249, %v1166, %v1168
    %v1170 = vrot.slane %v375, 4
    %v1171 = vsel %vm249, %v1168, %v1170
    %v1172 = vrot.slane %v380, 4
    %v1173 = vsel %vm249, %v1170, %v1172
    %v1174 = vsel %vm431, %v1151, 0
    %v1176 = vsel %vm431, %v1153, 0
    %v1178 = vsel %vm431, %v1155, 0
    %v1180 = vsel %vm431, %v1157, 0
    %v1182 = vsel %vm431, %v1159, 0
    %v1184 = vsel %vm431, %v1161, 0
    %v1186 = vsel %vm431, %v1163, 0
    %v1188 = vsel %vm431, %v1165, 0
    %v1190 = vsel %vm431, %v1167, 0
    %v1192 = vsel %vm431, %v1169, 0
    %v1194 = vsel %vm431, %v1171, 0
    %v1196 = vsel %vm431, %v1173, 0
    %v1198 = vsel %vm431, %v1172, 0
    %1200 = vmatprep.subr.mxu0 0.0
    %1201 = vmatpush1.msra.mxu0 %v1145
    %1202 = vmatprep.subr.mxu0 0.0
    %1203 = vmatpush1.msra.mxu0 %v1146
    %1204 = vmatprep.subr.mxu0 0.0
    %1205 = vmatpush1.msra.mxu0 %v1147
    %1206 = vmatprep.subr.mxu0 0.0
    %1207 = vmatpush1.msra.mxu0 %v1148
    %1208 = vmatprep.subr.mxu0 0.0
    %1209 = vmatpush1.msra.mxu0 0.0
    %1210 = vmatprep.subr.mxu0 0.0
    %1211 = vmatpush1.msra.mxu0 0.0
    %1212 = vmatprep.subr.mxu0 0.0
    %1213 = vmatpush1.msra.mxu0 0.0
    %1214 = vmatprep.subr.mxu0 0.0
    %1215 = vmatpush1.msra.mxu0 0.0
    %1216 = vmatprep.subr.mxu0 0.0
    %1217 = vmatpush1.msra.mxu0 0.0
    %1218 = vmatprep.subr.mxu0 0.0
    %1219 = vmatpush1.msra.mxu0 0.0
    %1220 = vmatprep.subr.mxu0 0.0
    %1221 = vmatpush1.msra.mxu0 0.0
    %1222 = vmatprep.subr.mxu0 0.0
    %1223 = vmatpush1.msra.mxu0 0.0
    %1224 = vmatprep.subr.mxu0 0.0
    %1225 = vmatpush1.msra.mxu0 0.0
    %1226 = vmatprep.subr.mxu0 0.0
    %1227 = vmatpush1.msra.mxu0 0.0
    %1228 = vmatprep.subr.mxu0 0.0
    %1229 = vmatpush1.msra.mxu0 0.0
    %1230 = vmatprep.subr.mxu0 0.0
    %1231 = vmatpush1.msra.mxu0 0.0
    %1232 = vmatprep.subr.mxu0 0.0
    %1233 = vmatpush1.msra.mxu0 0.0
    %1234 = vmatprep.subr.mxu0 0.0
    %1235 = vmatpush1.msra.mxu0 0.0
    %1236 = vmatprep.subr.mxu0 0.0
    %1237 = vmatpush1.msra.mxu0 0.0
    %1238 = vmatprep.subr.mxu0 0.0
    %1239 = vmatpush1.msra.mxu0 0.0
    %1240 = vmatprep.subr.mxu0 0.0
    %1241 = vmatpush1.msra.mxu0 0.0
    %1242 = vmatprep.subr.mxu0 0.0
    %1243 = vmatpush1.msra.mxu0 0.0
    %1244 = vmatprep.subr.mxu0 0.0
    %1245 = vmatpush1.msra.mxu0 0.0
    %1246 = vmatprep.subr.mxu0 0.0
    %1247 = vmatpush1.msra.mxu0 0.0
    %1248 = vmatprep.subr.mxu0 0.0
    %1249 = vmatpush1.msra.mxu0 0.0
    %1250 = vmatprep.subr.mxu0 0.0
    %1251 = vmatpush1.msra.mxu0 0.0
    %1252 = vmatprep.subr.mxu0 0.0
    %1253 = vmatpush1.msra.mxu0 0.0
    %1254 = vmatprep.subr.mxu0 0.0
    %1255 = vmatpush1.msra.mxu0 0.0
    %1256 = vmatprep.subr.mxu0 0.0
    %1257 = vmatpush1.msra.mxu0 0.0
    %1258 = vmatprep.subr.mxu0 0.0
    %1259 = vmatpush1.msra.mxu0 0.0
    %1260 = vmatprep.subr.mxu0 0.0
    %1261 = vmatpush1.msra.mxu0 0.0
    %1262 = vmatprep.subr.mxu0 0.0
    %1263 = vmatpush1.msra.mxu0 0.0
    %1264 = vmatprep.mubr.f32.mxu0 0.0
    %1265 = vmatmul.mubr.f32.gmra.mrb[0].mxu0 %v1174
    %v1266 = vpop.f32.mrb[0].mxu0
    %v1267 = vadd.f32 0.0, %v1266
    %v1268 = vpop.f32.mrb[0].mxu0
    %1269 = vmatprep.mubr.f32.mxu0 0.0
    %1270 = vmatmul.mubr.f32.gmra.mrb[0].mxu0 %v1176
    %v1271 = vpop.f32.mrb[0].mxu0
    %v1272 = vadd.f32 0.0, %v1271
    %v1273 = vpop.f32.mrb[0].mxu0
    %1274 = vmatprep.mubr.f32.mxu0 0.0
    %1275 = vmatmul.mubr.f32.gmra.mrb[0].mxu0 %v1178
    %v1276 = vpop.f32.mrb[0].mxu0
    %v1277 = vadd.f32 0.0, %v1276
    %v1278 = vpop.f32.mrb[0].mxu0
    %1279 = vmatprep.mubr.f32.mxu0 0.0
    %1280 = vmatmul.mubr.f32.gmra.mrb[0].mxu0 %v1180
    %v1281 = vpop.f32.mrb[0].mxu0
    %v1282 = vadd.f32 0.0, %v1281
    %v1283 = vpop.f32.mrb[0].mxu0
    %1284 = vmatprep.mubr.f32.mxu0 0.0
    %1285 = vmatmul.mubr.f32.gmra.mrb[0].mxu0 %v1182
    %v1286 = vpop.f32.mrb[0].mxu0
    %v1287 = vadd.f32 0.0, %v1286
    %v1288 = vpop.f32.mrb[0].mxu0
    %1289 = vmatprep.mubr.f32.mxu0 0.0
    %1290 = vmatmul.mubr.f32.gmra.mrb[0].mxu0 %v1184
    %v1291 = vpop.f32.mrb[0].mxu0
    %v1292 = vadd.f32 0.0, %v1291
    %v1293 = vpop.f32.mrb[0].mxu0
    %1294 = vmatprep.mubr.f32.mxu0 0.0
    %1295 = vmatmul.mubr.f32.gmra.mrb[0].mxu0 %v1186
    %v1296 = vpop.f32.mrb[0].mxu0
    %v1297 = vadd.f32 0.0, %v1296
    %v1298 = vpop.f32.mrb[0].mxu0
    %1299 = vmatprep.mubr.f32.mxu0 0.0
    %1300 = vmatmul.mubr.f32.gmra.mrb[0].mxu0 %v1188
    %v1301 = vpop.f32.mrb[0].mxu0
    %v1302 = vadd.f32 0.0, %v1301
    %v1303 = vpop.f32.mrb[0].mxu0
    %1304 = vmatprep.mubr.f32.mxu0 0.0
    %1305 = vmatmul.mubr.f32.gmra.mrb[0].mxu0 %v1190
    %v1306 = vpop.f32.mrb[0].mxu0
    %v1307 = vadd.f32 0.0, %v1306
    %v1308 = vpop.f32.mrb[0].mxu0
    %1309 = vmatprep.mubr.f32.mxu0 0.0
    %1310 = vmatmul.mubr.f32.gmra.mrb[0].mxu0 %v1192
    %v1311 = vpop.f32.mrb[0].mxu0
    %v1312 = vadd.f32 0.0, %v1311
    %v1313 = vpop.f32.mrb[0].mxu0
    %1314 = vmatprep.mubr.f32.mxu0 0.0
    %1315 = vmatmul.mubr.f32.gmra.mrb[0].mxu0 %v1194
    %v1316 = vpop.f32.mrb[0].mxu0
    %v1317 = vadd.f32 0.0, %v1316
    %v1318 = vpop.f32.mrb[0].mxu0
    %1319 = vmatprep.mubr.f32.mxu0 0.0
    %1320 = vmatmul.mubr.f32.gmra.mrb[0].mxu0 %v1196
    %v1321 = vpop.f32.mrb[0].mxu0
    %v1322 = vadd.f32 0.0, %v1321
    %v1323 = vpop.f32.mrb[0].mxu0
    %1324 = vmatprep.mubr.f32.mxu0 0.0
    %1325 = vmatmul.mubr.f32.gmra.mrb[0].mxu0 %v1198
    %v1326 = vpop.f32.mrb[0].mxu0
    %v1327 = vadd.f32 0.0, %v1326
    %v1328 = vpop.f32.mrb[0].mxu0
    %1329 = vdwg.mxu0
    %v1330 = vadd.f32 %v1131, %v1267
    %v1331 = vadd.f32 %v1132, %v1272
    %v1332 = vadd.f32 %v1133, %v1277
    %v1333 = vadd.f32 %v1134, %v1282
    %v1334 = vadd.f32 %v1135, %v1287
    %v1335 = vadd.f32 %v1136, %v1292
    %v1336 = vadd.f32 %v1137, %v1297
    %v1337 = vadd.f32 %v1138, %v1302
    %v1338 = vadd.f32 %v1139, %v1307
    %v1339 = vadd.f32 %v1140, %v1312
    %v1340 = vadd.f32 %v1141, %v1317
    %v1341 = vadd.f32 %v1142, %v1322
    %v1342 = vadd.f32 %v1143, %v1327
    %v1343 = vld [vmem:[%s5] sm:$0x1]
    %v1345 = vlaneseq
    %v1346 = vshrl.u32 %v1345, 7
    %v1347 = vsub.s32 0, %v1346
    %v1348 = vrot.slane %v1343, %v1347
    %v1350 = vadd.f32 %v1330, %v1348
    %v1351 = vadd.f32 %v1331, %v1348
    %v1352 = vadd.f32 %v1332, %v1348
    %v1353 = vadd.f32 %v1333, %v1348
    %v1354 = vadd.f32 %v1334, %v1348
    %v1355 = vadd.f32 %v1335, %v1348
    %v1356 = vadd.f32 %v1336, %v1348
    %v1357 = vadd.f32 %v1337, %v1348
    %v1358 = vadd.f32 %v1338, %v1348
    %v1359 = vadd.f32 %v1339, %v1348
    %v1360 = vadd.f32 %v1340, %v1348
    %v1361 = vadd.f32 %v1341, %v1348
    %v1362 = vadd.f32 %v1342, %v1348
    %v1363 = vmax.f32 %v1350, 0.0
    %v1364 = vmax.f32 %v1351, 0.0
    %v1365 = vmax.f32 %v1352, 0.0
    %v1366 = vmax.f32 %v1353, 0.0
    %v1367 = vmax.f32 %v1354, 0.0
    %v1368 = vmax.f32 %v1355, 0.0
    %v1369 = vmax.f32 %v1356, 0.0
    %v1370 = vmax.f32 %v1357, 0.0
    %v1371 = vmax.f32 %v1358, 0.0
    %v1372 = vmax.f32 %v1359, 0.0
    %v1373 = vmax.f32 %v1360, 0.0
    %v1374 = vmax.f32 %v1361, 0.0
    %v1375 = vmax.f32 %v1362, 0.0
    %v1376 = vld [vmem:[%s6] sm:$0xff]
    %v1377 = vld [vmem:[%s6 + $0x8] sm:$0x3]
    %vm1378 = vcmask 744448
    %v1380 = vsel %vm1378, %v1376, 0
    %v1383 = vsel %vm1378, %v1377, 0
    %vm1385 = vcmask 1042432
    %v1387 = vsel %vm1385, %v1374, 0
    %1389 = vmatprep.subr.mxu0 0.0
    %1390 = vmatpush1.msra.mxu0 %v1363
    %1391 = vmatprep.subr.mxu0 0.0
    %1392 = vmatpush1.msra.mxu0 %v1364
    %1393 = vmatprep.subr.mxu0 0.0
    %1394 = vmatpush1.msra.mxu0 %v1365
    %1395 = vmatprep.subr.mxu0 0.0
    %1396 = vmatpush1.msra.mxu0 %v1366
    %1397 = vmatprep.subr.mxu0 0.0
    %1398 = vmatpush1.msra.mxu0 %v1367
    %1399 = vmatprep.subr.mxu0 0.0
    %1400 = vmatpush1.msra.mxu0 %v1368
    %1401 = vmatprep.subr.mxu0 0.0
    %1402 = vmatpush1.msra.mxu0 %v1369
    %1403 = vmatprep.subr.mxu0 0.0
    %1404 = vmatpush1.msra.mxu0 %v1370
    %1405 = vmatprep.subr.mxu0 0.0
    %1406 = vmatpush1.msra.mxu0 %v1371
    %1407 = vmatprep.subr.mxu0 0.0
    %1408 = vmatpush1.msra.mxu0 %v1372
    %1409 = vmatprep.subr.mxu0 0.0
    %1410 = vmatpush1.msra.mxu0 %v1373
    %1411 = vmatprep.subr.mxu0 0.0
    %1412 = vmatpush1.msra.mxu0 %v1387
    %1413 = vmatprep.subr.mxu0 0.0
    %1414 = vmatpush1.msra.mxu0 0.0
    %1415 = vmatprep.subr.mxu0 0.0
    %1416 = vmatpush1.msra.mxu0 0.0
    %1417 = vmatprep.subr.mxu0 0.0
    %1418 = vmatpush1.msra.mxu0 0.0
    %1419 = vmatprep.subr.mxu0 0.0
    %1420 = vmatpush1.msra.mxu0 0.0
    %1421 = vmatprep.subr.mxu0 0.0
    %1422 = vmatpush1.msra.mxu0 0.0
    %1423 = vmatprep.subr.mxu0 0.0
    %1424 = vmatpush1.msra.mxu0 0.0
    %1425 = vmatprep.subr.mxu0 0.0
    %1426 = vmatpush1.msra.mxu0 0.0
    %1427 = vmatprep.subr.mxu0 0.0
    %1428 = vmatpush1.msra.mxu0 0.0
    %1429 = vmatprep.subr.mxu0 0.0
    %1430 = vmatpush1.msra.mxu0 0.0
    %1431 = vmatprep.subr.mxu0 0.0
    %1432 = vmatpush1.msra.mxu0 0.0
    %1433 = vmatprep.subr.mxu0 0.0
    %1434 = vmatpush1.msra.mxu0 0.0
    %1435 = vmatprep.subr.mxu0 0.0
    %1436 = vmatpush1.msra.mxu0 0.0
    %1437 = vmatprep.subr.mxu0 0.0
    %1438 = vmatpush1.msra.mxu0 0.0
    %1439 = vmatprep.subr.mxu0 0.0
    %1440 = vmatpush1.msra.mxu0 0.0
    %1441 = vmatprep.subr.mxu0 0.0
    %1442 = vmatpush1.msra.mxu0 0.0
    %1443 = vmatprep.subr.mxu0 0.0
    %1444 = vmatpush1.msra.mxu0 0.0
    %1445 = vmatprep.subr.mxu0 0.0
    %1446 = vmatpush1.msra.mxu0 0.0
    %1447 = vmatprep.subr.mxu0 0.0
    %1448 = vmatpush1.msra.mxu0 0.0
    %1449 = vmatprep.subr.mxu0 0.0
    %1450 = vmatpush1.msra.mxu0 0.0
    %1451 = vmatprep.subr.mxu0 0.0
    %1452 = vmatpush1.msra.mxu0 0.0
    %1453 = vmatprep.mubr.f32.mxu0 0.0
    %1454 = vmatmul.mubr.f32.gmra.mrb[0].mxu0 %v1380
    %v1455 = vpop.f32.mrb[0].mxu0
    %v1456 = vadd.f32 0.0, %v1455
    %v1457 = vpop.f32.mrb[0].mxu0
    %1458 = vmatprep.mubr.f32.mxu0 0.0
    %1459 = vmatmul.mubr.f32.gmra.mrb[0].mxu0 %v1383
    %v1460 = vpop.f32.mrb[0].mxu0
    %v1461 = vadd.f32 0.0, %v1460
    %v1462 = vpop.f32.mrb[0].mxu0
    %1463 = vdwg.mxu0
    %v1475 = vrot.slane %v1363, 1
    %v1476 = vrot.slane %v1364, 1
    %v1477 = vsel %vm405, %v1475, %v1476
    %v1478 = vrot.slane %v1365, 1
    %v1479 = vsel %vm405, %v1476, %v1478
    %v1480 = vrot.slane %v1366, 1
    %v1481 = vsel %vm405, %v1478, %v1480
    %v1482 = vrot.slane %v1367, 1
    %v1483 = vsel %vm405, %v1480, %v1482
    %v1484 = vrot.slane %v1368, 1
    %v1485 = vsel %vm405, %v1482, %v1484
    %v1486 = vrot.slane %v1369, 1
    %v1487 = vsel %vm405, %v1484, %v1486
    %v1488 = vrot.slane %v1370, 1
    %v1489 = vsel %vm405, %v1486, %v1488
    %v1490 = vrot.slane %v1371, 1
    %v1491 = vsel %vm405, %v1488, %v1490
    %v1492 = vrot.slane %v1372, 1
    %v1493 = vsel %vm405, %v1490, %v1492
    %v1494 = vrot.slane %v1373, 1
    %v1495 = vsel %vm405, %v1492, %v1494
    %v1496 = vrot.slane %v1374, 1
    %v1497 = vsel %vm405, %v1494, %v1496
    %v1509 = vsel %vm1385, %v1496, 0
    %1511 = vmatprep.subr.mxu0 0.0
    %1512 = vmatpush1.msra.mxu0 %v1477
    %1513 = vmatprep.subr.mxu0 0.0
    %1514 = vmatpush1.msra.mxu0 %v1479
    %1515 = vmatprep.subr.mxu0 0.0
    %1516 = vmatpush1.msra.mxu0 %v1481
    %1517 = vmatprep.subr.mxu0 0.0
    %1518 = vmatpush1.msra.mxu0 %v1483
    %1519 = vmatprep.subr.mxu0 0.0
    %1520 = vmatpush1.msra.mxu0 %v1485
    %1521 = vmatprep.subr.mxu0 0.0
    %1522 = vmatpush1.msra.mxu0 %v1487
    %1523 = vmatprep.subr.mxu0 0.0
    %1524 = vmatpush1.msra.mxu0 %v1489
    %1525 = vmatprep.subr.mxu0 0.0
    %1526 = vmatpush1.msra.mxu0 %v1491
    %1527 = vmatprep.subr.mxu0 0.0
    %1528 = vmatpush1.msra.mxu0 %v1493
    %1529 = vmatprep.subr.mxu0 0.0
    %1530 = vmatpush1.msra.mxu0 %v1495
    %1531 = vmatprep.subr.mxu0 0.0
    %1532 = vmatpush1.msra.mxu0 %v1497
    %1533 = vmatprep.subr.mxu0 0.0
    %1534 = vmatpush1.msra.mxu0 %v1509
    %1535 = vmatprep.subr.mxu0 0.0
    %1536 = vmatpush1.msra.mxu0 0.0
    %1537 = vmatprep.subr.mxu0 0.0
    %1538 = vmatpush1.msra.mxu0 0.0
    %1539 = vmatprep.subr.mxu0 0.0
    %1540 = vmatpush1.msra.mxu0 0.0
    %1541 = vmatprep.subr.mxu0 0.0
    %1542 = vmatpush1.msra.mxu0 0.0
    %1543 = vmatprep.subr.mxu0 0.0
    %1544 = vmatpush1.msra.mxu0 0.0
    %1545 = vmatprep.subr.mxu0 0.0
    %1546 = vmatpush1.msra.mxu0 0.0
    %1547 = vmatprep.subr.mxu0 0.0
    %1548 = vmatpush1.msra.mxu0 0.0
    %1549 = vmatprep.subr.mxu0 0.0
    %1550 = vmatpush1.msra.mxu0 0.0
    %1551 = vmatprep.subr.mxu0 0.0
    %1552 = vmatpush1.msra.mxu0 0.0
    %1553 = vmatprep.subr.mxu0 0.0
    %1554 = vmatpush1.msra.mxu0 0.0
    %1555 = vmatprep.subr.mxu0 0.0
    %1556 = vmatpush1.msra.mxu0 0.0
    %1557 = vmatprep.subr.mxu0 0.0
    %1558 = vmatpush1.msra.mxu0 0.0
    %1559 = vmatprep.subr.mxu0 0.0
    %1560 = vmatpush1.msra.mxu0 0.0
    %1561 = vmatprep.subr.mxu0 0.0
    %1562 = vmatpush1.msra.mxu0 0.0
    %1563 = vmatprep.subr.mxu0 0.0
    %1564 = vmatpush1.msra.mxu0 0.0
    %1565 = vmatprep.subr.mxu0 0.0
    %1566 = vmatpush1.msra.mxu0 0.0
    %1567 = vmatprep.subr.mxu0 0.0
    %1568 = vmatpush1.msra.mxu0 0.0
    %1569 = vmatprep.subr.mxu0 0.0
    %1570 = vmatpush1.msra.mxu0 0.0
    %1571 = vmatprep.subr.mxu0 0.0
    %1572 = vmatpush1.msra.mxu0 0.0
    %1573 = vmatprep.subr.mxu0 0.0
    %1574 = vmatpush1.msra.mxu0 0.0
    %1575 = vmatprep.mubr.f32.mxu0 0.0
    %1576 = vmatmul.mubr.f32.gmra.mrb[0].mxu0 %v1380
    %v1577 = vpop.f32.mrb[0].mxu0
    %v1578 = vadd.f32 0.0, %v1577
    %v1579 = vpop.f32.mrb[0].mxu0
    %1580 = vmatprep.mubr.f32.mxu0 0.0
    %1581 = vmatmul.mubr.f32.gmra.mrb[0].mxu0 %v1383
    %v1582 = vpop.f32.mrb[0].mxu0
    %v1583 = vadd.f32 0.0, %v1582
    %v1584 = vpop.f32.mrb[0].mxu0
    %1585 = vdwg.mxu0
    %v1586 = vmax.f32 %v1456, %v1578
    %v1587 = vmax.f32 %v1461, %v1583
    %v1588 = vrot.slane %v1363, 2
    %v1589 = vrot.slane %v1364, 2
    %v1590 = vsel %vm749, %v1588, %v1589
    %v1591 = vrot.slane %v1365, 2
    %v1592 = vsel %vm749, %v1589, %v1591
    %v1593 = vrot.slane %v1366, 2
    %v1594 = vsel %vm749, %v1591, %v1593
    %v1595 = vrot.slane %v1367, 2
    %v1596 = vsel %vm749, %v1593, %v1595
    %v1597 = vrot.slane %v1368, 2
    %v1598 = vsel %vm749, %v1595, %v1597
    %v1599 = vrot.slane %v1369, 2
    %v1600 = vsel %vm749, %v1597, %v1599
    %v1601 = vrot.slane %v1370, 2
    %v1602 = vsel %vm749, %v1599, %v1601
    %v1603 = vrot.slane %v1371, 2
    %v1604 = vsel %vm749, %v1601, %v1603
    %v1605 = vrot.slane %v1372, 2
    %v1606 = vsel %vm749, %v1603, %v1605
    %v1607 = vrot.slane %v1373, 2
    %v1608 = vsel %vm749, %v1605, %v1607
    %v1609 = vrot.slane %v1374, 2
    %v1610 = vsel %vm749, %v1607, %v1609
    %v1622 = vsel %vm1385, %v1609, 0
    %1624 = vmatprep.subr.mxu0 0.0
    %1625 = vmatpush1.msra.mxu0 %v1590
    %1626 = vmatprep.subr.mxu0 0.0
    %1627 = vmatpush1.msra.mxu0 %v1592
    %1628 = vmatprep.subr.mxu0 0.0
    %1629 = vmatpush1.msra.mxu0 %v1594
    %1630 = vmatprep.subr.mxu0 0.0
    %1631 = vmatpush1.msra.mxu0 %v1596
    %1632 = vmatprep.subr.mxu0 0.0
    %1633 = vmatpush1.msra.mxu0 %v1598
    %1634 = vmatprep.subr.mxu0 0.0
    %1635 = vmatpush1.msra.mxu0 %v1600
    %1636 = vmatprep.subr.mxu0 0.0
    %1637 = vmatpush1.msra.mxu0 %v1602
    %1638 = vmatprep.subr.mxu0 0.0
    %1639 = vmatpush1.msra.mxu0 %v1604
    %1640 = vmatprep.subr.mxu0 0.0
    %1641 = vmatpush1.msra.mxu0 %v1606
    %1642 = vmatprep.subr.mxu0 0.0
    %1643 = vmatpush1.msra.mxu0 %v1608
    %1644 = vmatprep.subr.mxu0 0.0
    %1645 = vmatpush1.msra.mxu0 %v1610
    %1646 = vmatprep.subr.mxu0 0.0
    %1647 = vmatpush1.msra.mxu0 %v1622
    %1648 = vmatprep.subr.mxu0 0.0
    %1649 = vmatpush1.msra.mxu0 0.0
    %1650 = vmatprep.subr.mxu0 0.0
    %1651 = vmatpush1.msra.mxu0 0.0
    %1652 = vmatprep.subr.mxu0 0.0
    %1653 = vmatpush1.msra.mxu0 0.0
    %1654 = vmatprep.subr.mxu0 0.0
    %1655 = vmatpush1.msra.mxu0 0.0
    %1656 = vmatprep.subr.mxu0 0.0
    %1657 = vmatpush1.msra.mxu0 0.0
    %1658 = vmatprep.subr.mxu0 0.0
    %1659 = vmatpush1.msra.mxu0 0.0
    %1660 = vmatprep.subr.mxu0 0.0
    %1661 = vmatpush1.msra.mxu0 0.0
    %1662 = vmatprep.subr.mxu0 0.0
    %1663 = vmatpush1.msra.mxu0 0.0
    %1664 = vmatprep.subr.mxu0 0.0
    %1665 = vmatpush1.msra.mxu0 0.0
    %1666 = vmatprep.subr.mxu0 0.0
    %1667 = vmatpush1.msra.mxu0 0.0
    %1668 = vmatprep.subr.mxu0 0.0
    %1669 = vmatpush1.msra.mxu0 0.0
    %1670 = vmatprep.subr.mxu0 0.0
    %1671 = vmatpush1.msra.mxu0 0.0
    %1672 = vmatprep.subr.mxu0 0.0
    %1673 = vmatpush1.msra.mxu0 0.0
    %1674 = vmatprep.subr.mxu0 0.0
    %1675 = vmatpush1.msra.mxu0 0.0
    %1676 = vmatprep.subr.mxu0 0.0
    %1677 = vmatpush1.msra.mxu0 0.0
    %1678 = vmatprep.subr.mxu0 0.0
    %1679 = vmatpush1.msra.mxu0 0.0
    %1680 = vmatprep.subr.mxu0 0.0
    %1681 = vmatpush1.msra.mxu0 0.0
    %1682 = vmatprep.subr.mxu0 0.0
    %1683 = vmatpush1.msra.mxu0 0.0
    %1684 = vmatprep.subr.mxu0 0.0
    %1685 = vmatpush1.msra.mxu0 0.0
    %1686 = vmatprep.subr.mxu0 0.0
    %1687 = vmatpush1.msra.mxu0 0.0
    %1688 = vmatprep.mubr.f32.mxu0 0.0
    %1689 = vmatmul.mubr.f32.gmra.mrb[0].mxu0 %v1380
    %v1690 = vpop.f32.mrb[0].mxu0
    %v1691 = vadd.f32 0.0, %v1690
    %v1692 = vpop.f32.mrb[0].mxu0
    %1693 = vmatprep.mubr.f32.mxu0 0.0
    %1694 = vmatmul.mubr.f32.gmra.mrb[0].mxu0 %v1383
    %v1695 = vpop.f32.mrb[0].mxu0
    %v1696 = vadd.f32 0.0, %v1695
    %v1697 = vpop.f32.mrb[0].mxu0
    %1698 = vdwg.mxu0
    %v1699 = vmax.f32 %v1586, %v1691
    %v1700 = vmax.f32 %v1587, %v1696
    %v1701 = vrot.slane %v1363, 3
    %v1702 = vrot.slane %v1364, 3
    %v1703 = vsel %vm949, %v1701, %v1702
    %v1704 = vrot.slane %v1365, 3
    %v1705 = vsel %vm949, %v1702, %v1704
    %v1706 = vrot.slane %v1366, 3
    %v1707 = vsel %vm949, %v1704, %v1706
    %v1708 = vrot.slane %v1367, 3
    %v1709 = vsel %vm949, %v1706, %v1708
    %v1710 = vrot.slane %v1368, 3
    %v1711 = vsel %vm949, %v1708, %v1710
    %v1712 = vrot.slane %v1369, 3
    %v1713 = vsel %vm949, %v1710, %v1712
    %v1714 = vrot.slane %v1370, 3
    %v1715 = vsel %vm949, %v1712, %v1714
    %v1716 = vrot.slane %v1371, 3
    %v1717 = vsel %vm949, %v1714, %v1716
    %v1718 = vrot.slane %v1372, 3
    %v1719 = vsel %vm949, %v1716, %v1718
    %v1720 = vrot.slane %v1373, 3
    %v1721 = vsel %vm949, %v1718, %v1720
    %v1722 = vrot.slane %v1374, 3
    %v1723 = vsel %vm949, %v1720, %v1722
    %v1735 = vsel %vm1385, %v1722, 0
    %1737 = vmatprep.subr.mxu0 0.0
    %1738 = vmatpush1.msra.mxu0 %v1703
    %1739 = vmatprep.subr.mxu0 0.0
    %1740 = vmatpush1.msra.mxu0 %v1705
    %1741 = vmatprep.subr.mxu0 0.0
    %1742 = vmatpush1.msra.mxu0 %v1707
    %1743 = vmatprep.subr.mxu0 0.0
    %1744 = vmatpush1.msra.mxu0 %v1709
    %1745 = vmatprep.subr.mxu0 0.0
    %1746 = vmatpush1.msra.mxu0 %v1711
    %1747 = vmatprep.subr.mxu0 0.0
    %1748 = vmatpush1.msra.mxu0 %v1713
    %1749 = vmatprep.subr.mxu0 0.0
    %1750 = vmatpush1.msra.mxu0 %v1715
    %1751 = vmatprep.subr.mxu0 0.0
    %1752 = vmatpush1.msra.mxu0 %v1717
    %1753 = vmatprep.subr.mxu0 0.0
    %1754 = vmatpush1.msra.mxu0 %v1719
    %1755 = vmatprep.subr.mxu0 0.0
    %1756 = vmatpush1.msra.mxu0 %v1721
    %1757 = vmatprep.subr.mxu0 0.0
    %1758 = vmatpush1.msra.mxu0 %v1723
    %1759 = vmatprep.subr.mxu0 0.0
    %1760 = vmatpush1.msra.mxu0 %v1735
    %1761 = vmatprep.subr.mxu0 0.0
    %1762 = vmatpush1.msra.mxu0 0.0
    %1763 = vmatprep.subr.mxu0 0.0
    %1764 = vmatpush1.msra.mxu0 0.0
    %1765 = vmatprep.subr.mxu0 0.0
    %1766 = vmatpush1.msra.mxu0 0.0
    %1767 = vmatprep.subr.mxu0 0.0
    %1768 = vmatpush1.msra.mxu0 0.0
    %1769 = vmatprep.subr.mxu0 0.0
    %1770 = vmatpush1.msra.mxu0 0.0
    %1771 = vmatprep.subr.mxu0 0.0
    %1772 = vmatpush1.msra.mxu0 0.0
    %1773 = vmatprep.subr.mxu0 0.0
    %1774 = vmatpush1.msra.mxu0 0.0
    %1775 = vmatprep.subr.mxu0 0.0
    %1776 = vmatpush1.msra.mxu0 0.0
    %1777 = vmatprep.subr.mxu0 0.0
    %1778 = vmatpush1.msra.mxu0 0.0
    %1779 = vmatprep.subr.mxu0 0.0
    %1780 = vmatpush1.msra.mxu0 0.0
    %1781 = vmatprep.subr.mxu0 0.0
    %1782 = vmatpush1.msra.mxu0 0.0
    %1783 = vmatprep.subr.mxu0 0.0
    %1784 = vmatpush1.msra.mxu0 0.0
    %1785 = vmatprep.subr.mxu0 0.0
    %1786 = vmatpush1.msra.mxu0 0.0
    %1787 = vmatprep.subr.mxu0 0.0
    %1788 = vmatpush1.msra.mxu0 0.0
    %1789 = vmatprep.subr.mxu0 0.0
    %1790 = vmatpush1.msra.mxu0 0.0
    %1791 = vmatprep.subr.mxu0 0.0
    %1792 = vmatpush1.msra.mxu0 0.0
    %1793 = vmatprep.subr.mxu0 0.0
    %1794 = vmatpush1.msra.mxu0 0.0
    %1795 = vmatprep.subr.mxu0 0.0
    %1796 = vmatpush1.msra.mxu0 0.0
    %1797 = vmatprep.subr.mxu0 0.0
    %1798 = vmatpush1.msra.mxu0 0.0
    %1799 = vmatprep.subr.mxu0 0.0
    %1800 = vmatpush1.msra.mxu0 0.0
    %1801 = vmatprep.mubr.f32.mxu0 0.0
    %1802 = vmatmul.mubr.f32.gmra.mrb[0].mxu0 %v1380
    %v1803 = vpop.f32.mrb[0].mxu0
    %v1804 = vadd.f32 0.0, %v1803
    %v1805 = vpop.f32.mrb[0].mxu0
    %1806 = vmatprep.mubr.f32.mxu0 0.0
    %1807 = vmatmul.mubr.f32.gmra.mrb[0].mxu0 %v1383
    %v1808 = vpop.f32.mrb[0].mxu0
    %v1809 = vadd.f32 0.0, %v1808
    %v1810 = vpop.f32.mrb[0].mxu0
    %1811 = vdwg.mxu0
    %v1812 = vmax.f32 %v1699, %v1804
    %v1813 = vmax.f32 %v1700, %v1809
    %v1814 = vrot.slane %v1363, 4
    %v1815 = vrot.slane %v1364, 4
    %v1816 = vsel %vm249, %v1814, %v1815
    %v1817 = vrot.slane %v1365, 4
    %v1818 = vsel %vm249, %v1815, %v1817
    %v1819 = vrot.slane %v1366, 4
    %v1820 = vsel %vm249, %v1817, %v1819
    %v1821 = vrot.slane %v1367, 4
    %v1822 = vsel %vm249, %v1819, %v1821
    %v1823 = vrot.slane %v1368, 4
    %v1824 = vsel %vm249, %v1821, %v1823
    %v1825 = vrot.slane %v1369, 4
    %v1826 = vsel %vm249, %v1823, %v1825
    %v1827 = vrot.slane %v1370, 4
    %v1828 = vsel %vm249, %v1825, %v1827
    %v1829 = vrot.slane %v1371, 4
    %v1830 = vsel %vm249, %v1827, %v1829
    %v1831 = vrot.slane %v1372, 4
    %v1832 = vsel %vm249, %v1829, %v1831
    %v1833 = vrot.slane %v1373, 4
    %v1834 = vsel %vm249, %v1831, %v1833
    %v1835 = vrot.slane %v1374, 4
    %v1836 = vsel %vm249, %v1833, %v1835
    %v1848 = vsel %vm1385, %v1835, 0
    %1850 = vmatprep.subr.mxu0 0.0
    %1851 = vmatpush1.msra.mxu0 %v1816
    %1852 = vmatprep.subr.mxu0 0.0
    %1853 = vmatpush1.msra.mxu0 %v1818
    %1854 = vmatprep.subr.mxu0 0.0
    %1855 = vmatpush1.msra.mxu0 %v1820
    %1856 = vmatprep.subr.mxu0 0.0
    %1857 = vmatpush1.msra.mxu0 %v1822
    %1858 = vmatprep.subr.mxu0 0.0
    %1859 = vmatpush1.msra.mxu0 %v1824
    %1860 = vmatprep.subr.mxu0 0.0
    %1861 = vmatpush1.msra.mxu0 %v1826
    %1862 = vmatprep.subr.mxu0 0.0
    %1863 = vmatpush1.msra.mxu0 %v1828
    %1864 = vmatprep.subr.mxu0 0.0
    %1865 = vmatpush1.msra.mxu0 %v1830
    %1866 = vmatprep.subr.mxu0 0.0
    %1867 = vmatpush1.msra.mxu0 %v1832
    %1868 = vmatprep.subr.mxu0 0.0
    %1869 = vmatpush1.msra.mxu0 %v1834
    %1870 = vmatprep.subr.mxu0 0.0
    %1871 = vmatpush1.msra.mxu0 %v1836
    %1872 = vmatprep.subr.mxu0 0.0
    %1873 = vmatpush1.msra.mxu0 %v1848
    %1874 = vmatprep.subr.mxu0 0.0
    %1875 = vmatpush1.msra.mxu0 0.0
    %1876 = vmatprep.subr.mxu0 0.0
    %1877 = vmatpush1.msra.mxu0 0.0
    %1878 = vmatprep.subr.mxu0 0.0
    %1879 = vmatpush1.msra.mxu0 0.0
    %1880 = vmatprep.subr.mxu0 0.0
    %1881 = vmatpush1.msra.mxu0 0.0
    %1882 = vmatprep.subr.mxu0 0.0
    %1883 = vmatpush1.msra.mxu0 0.0
    %1884 = vmatprep.subr.mxu0 0.0
    %1885 = vmatpush1.msra.mxu0 0.0
    %1886 = vmatprep.subr.mxu0 0.0
    %1887 = vmatpush1.msra.mxu0 0.0
    %1888 = vmatprep.subr.mxu0 0.0
    %1889 = vmatpush1.msra.mxu0 0.0
    %1890 = vmatprep.subr.mxu0 0.0
    %1891 = vmatpush1.msra.mxu0 0.0
    %1892 = vmatprep.subr.mxu0 0.0
    %1893 = vmatpush1.msra.mxu0 0.0
    %1894 = vmatprep.subr.mxu0 0.0
    %1895 = vmatpush1.msra.mxu0 0.0
    %1896 = vmatprep.subr.mxu0 0.0
    %1897 = vmatpush1.msra.mxu0 0.0
    %1898 = vmatprep.subr.mxu0 0.0
    %1899 = vmatpush1.msra.mxu0 0.0
    %1900 = vmatprep.subr.mxu0 0.0
    %1901 = vmatpush1.msra.mxu0 0.0
    %1902 = vmatprep.subr.mxu0 0.0
    %1903 = vmatpush1.msra.mxu0 0.0
    %1904 = vmatprep.subr.mxu0 0.0
    %1905 = vmatpush1.msra.mxu0 0.0
    %1906 = vmatprep.subr.mxu0 0.0
    %1907 = vmatpush1.msra.mxu0 0.0
    %1908 = vmatprep.subr.mxu0 0.0
    %1909 = vmatpush1.msra.mxu0 0.0
    %1910 = vmatprep.subr.mxu0 0.0
    %1911 = vmatpush1.msra.mxu0 0.0
    %1912 = vmatprep.subr.mxu0 0.0
    %1913 = vmatpush1.msra.mxu0 0.0
    %1914 = vmatprep.mubr.f32.mxu0 0.0
    %1915 = vmatmul.mubr.f32.gmra.mrb[0].mxu0 %v1380
    %v1916 = vpop.f32.mrb[0].mxu0
    %v1917 = vadd.f32 0.0, %v1916
    %v1918 = vpop.f32.mrb[0].mxu0
    %1919 = vmatprep.mubr.f32.mxu0 0.0
    %1920 = vmatmul.mubr.f32.gmra.mrb[0].mxu0 %v1383
    %v1921 = vpop.f32.mrb[0].mxu0
    %v1922 = vadd.f32 0.0, %v1921
    %v1923 = vpop.f32.mrb[0].mxu0
    %1924 = vdwg.mxu0
    %v1925 = vmax.f32 %v1812, %v1917
    %v1926 = vmax.f32 %v1813, %v1922
    %v1927 = vrot.slane %v1363, 5
    %v1928 = vrot.slane %v1364, 5
    %v1929 = vsel %vm1385, %v1927, %v1928
    %v1930 = vrot.slane %v1365, 5
    %v1931 = vsel %vm1385, %v1928, %v1930
    %v1932 = vrot.slane %v1366, 5
    %v1933 = vsel %vm1385, %v1930, %v1932
    %v1934 = vrot.slane %v1367, 5
    %v1935 = vsel %vm1385, %v1932, %v1934
    %v1936 = vrot.slane %v1368, 5
    %v1937 = vsel %vm1385, %v1934, %v1936
    %v1938 = vrot.slane %v1369, 5
    %v1939 = vsel %vm1385, %v1936, %v1938
    %v1940 = vrot.slane %v1370, 5
    %v1941 = vsel %vm1385, %v1938, %v1940
    %v1942 = vrot.slane %v1371, 5
    %v1943 = vsel %vm1385, %v1940, %v1942
    %v1944 = vrot.slane %v1372, 5
    %v1945 = vsel %vm1385, %v1942, %v1944
    %v1946 = vrot.slane %v1373, 5
    %v1947 = vsel %vm1385, %v1944, %v1946
    %v1948 = vrot.slane %v1374, 5
    %v1949 = vsel %vm1385, %v1946, %v1948
    %v1961 = vsel %vm1385, %v1948, 0
    %1963 = vmatprep.subr.mxu0 0.0
    %1964 = vmatpush1.msra.mxu0 %v1929
    %1965 = vmatprep.subr.mxu0 0.0
    %1966 = vmatpush1.msra.mxu0 %v1931
    %1967 = vmatprep.subr.mxu0 0.0
    %1968 = vmatpush1.msra.mxu0 %v1933
    %1969 = vmatprep.subr.mxu0 0.0
    %1970 = vmatpush1.msra.mxu0 %v1935
    %1971 = vmatprep.subr.mxu0 0.0
    %1972 = vmatpush1.msra.mxu0 %v1937
    %1973 = vmatprep.subr.mxu0 0.0
    %1974 = vmatpush1.msra.mxu0 %v1939
    %1975 = vmatprep.subr.mxu0 0.0
    %1976 = vmatpush1.msra.mxu0 %v1941
    %1977 = vmatprep.subr.mxu0 0.0
    %1978 = vmatpush1.msra.mxu0 %v1943
    %1979 = vmatprep.subr.mxu0 0.0
    %1980 = vmatpush1.msra.mxu0 %v1945
    %1981 = vmatprep.subr.mxu0 0.0
    %1982 = vmatpush1.msra.mxu0 %v1947
    %1983 = vmatprep.subr.mxu0 0.0
    %1984 = vmatpush1.msra.mxu0 %v1949
    %1985 = vmatprep.subr.mxu0 0.0
    %1986 = vmatpush1.msra.mxu0 %v1961
    %1987 = vmatprep.subr.mxu0 0.0
    %1988 = vmatpush1.msra.mxu0 0.0
    %1989 = vmatprep.subr.mxu0 0.0
    %1990 = vmatpush1.msra.mxu0 0.0
    %1991 = vmatprep.subr.mxu0 0.0
    %1992 = vmatpush1.msra.mxu0 0.0
    %1993 = vmatprep.subr.mxu0 0.0
    %1994 = vmatpush1.msra.mxu0 0.0
    %1995 = vmatprep.subr.mxu0 0.0
    %1996 = vmatpush1.msra.mxu0 0.0
    %1997 = vmatprep.subr.mxu0 0.0
    %1998 = vmatpush1.msra.mxu0 0.0
    %1999 = vmatprep.subr.mxu0 0.0
    %2000 = vmatpush1.msra.mxu0 0.0
    %2001 = vmatprep.subr.mxu0 0.0
    %2002 = vmatpush1.msra.mxu0 0.0
    %2003 = vmatprep.subr.mxu0 0.0
    %2004 = vmatpush1.msra.mxu0 0.0
    %2005 = vmatprep.subr.mxu0 0.0
    %2006 = vmatpush1.msra.mxu0 0.0
    %2007 = vmatprep.subr.mxu0 0.0
    %2008 = vmatpush1.msra.mxu0 0.0
    %2009 = vmatprep.subr.mxu0 0.0
    %2010 = vmatpush1.msra.mxu0 0.0
    %2011 = vmatprep.subr.mxu0 0.0
    %2012 = vmatpush1.msra.mxu0 0.0
    %2013 = vmatprep.subr.mxu0 0.0
    %2014 = vmatpush1.msra.mxu0 0.0
    %2015 = vmatprep.subr.mxu0 0.0
    %2016 = vmatpush1.msra.mxu0 0.0
    %2017 = vmatprep.subr.mxu0 0.0
    %2018 = vmatpush1.msra.mxu0 0.0
    %2019 = vmatprep.subr.mxu0 0.0
    %2020 = vmatpush1.msra.mxu0 0.0
    %2021 = vmatprep.subr.mxu0 0.0
    %2022 = vmatpush1.msra.mxu0 0.0
    %2023 = vmatprep.subr.mxu0 0.0
    %2024 = vmatpush1.msra.mxu0 0.0
    %2025 = vmatprep.subr.mxu0 0.0
    %2026 = vmatpush1.msra.mxu0 0.0
    %2027 = vmatprep.mubr.f32.mxu0 0.0
    %2028 = vmatmul.mubr.f32.gmra.mrb[0].mxu0 %v1380
    %v2029 = vpop.f32.mrb[0].mxu0
    %v2030 = vadd.f32 0.0, %v2029
    %v2031 = vpop.f32.mrb[0].mxu0
    %2032 = vmatprep.mubr.f32.mxu0 0.0
    %2033 = vmatmul.mubr.f32.gmra.mrb[0].mxu0 %v1383
    %v2034 = vpop.f32.mrb[0].mxu0
    %v2035 = vadd.f32 0.0, %v2034
    %v2036 = vpop.f32.mrb[0].mxu0
    %2037 = vdwg.mxu0
    %v2038 = vmax.f32 %v1925, %v2030
    %v2039 = vmax.f32 %v1926, %v2035
    %vm2041 = vcmask 1041408
    %v2042 = vrot.slane %v1363, 6
    %v2043 = vrot.slane %v1364, 6
    %v2044 = vsel %vm2041, %v2042, %v2043
    %v2045 = vrot.slane %v1365, 6
    %v2046 = vsel %vm2041, %v2043, %v2045
    %v2047 = vrot.slane %v1366, 6
    %v2048 = vsel %vm2041, %v2045, %v2047
    %v2049 = vrot.slane %v1367, 6
    %v2050 = vsel %vm2041, %v2047, %v2049
    %v2051 = vrot.slane %v1368, 6
    %v2052 = vsel %vm2041, %v2049, %v2051
    %v2053 = vrot.slane %v1369, 6
    %v2054 = vsel %vm2041, %v2051, %v2053
    %v2055 = vrot.slane %v1370, 6
    %v2056 = vsel %vm2041, %v2053, %v2055
    %v2057 = vrot.slane %v1371, 6
    %v2058 = vsel %vm2041, %v2055, %v2057
    %v2059 = vrot.slane %v1372, 6
    %v2060 = vsel %vm2041, %v2057, %v2059
    %v2061 = vrot.slane %v1373, 6
    %v2062 = vsel %vm2041, %v2059, %v2061
    %v2063 = vrot.slane %v1374, 6
    %v2064 = vsel %vm2041, %v2061, %v2063
    %v2065 = vrot.slane %v1375, 6
    %v2066 = vsel %vm2041, %v2063, %v2065
    %v2078 = vsel %vm1385, %v2066, 0
    %2080 = vmatprep.subr.mxu0 0.0
    %2081 = vmatpush1.msra.mxu0 %v2044
    %2082 = vmatprep.subr.mxu0 0.0
    %2083 = vmatpush1.msra.mxu0 %v2046
    %2084 = vmatprep.subr.mxu0 0.0
    %2085 = vmatpush1.msra.mxu0 %v2048
    %2086 = vmatprep.subr.mxu0 0.0
    %2087 = vmatpush1.msra.mxu0 %v2050
    %2088 = vmatprep.subr.mxu0 0.0
    %2089 = vmatpush1.msra.mxu0 %v2052
    %2090 = vmatprep.subr.mxu0 0.0
    %2091 = vmatpush1.msra.mxu0 %v2054
    %2092 = vmatprep.subr.mxu0 0.0
    %2093 = vmatpush1.msra.mxu0 %v2056
    %2094 = vmatprep.subr.mxu0 0.0
    %2095 = vmatpush1.msra.mxu0 %v2058
    %2096 = vmatprep.subr.mxu0 0.0
    %2097 = vmatpush1.msra.mxu0 %v2060
    %2098 = vmatprep.subr.mxu0 0.0
    %2099 = vmatpush1.msra.mxu0 %v2062
    %2100 = vmatprep.subr.mxu0 0.0
    %2101 = vmatpush1.msra.mxu0 %v2064
    %2102 = vmatprep.subr.mxu0 0.0
    %2103 = vmatpush1.msra.mxu0 %v2078
    %2104 = vmatprep.subr.mxu0 0.0
    %2105 = vmatpush1.msra.mxu0 0.0
    %2106 = vmatprep.subr.mxu0 0.0
    %2107 = vmatpush1.msra.mxu0 0.0
    %2108 = vmatprep.subr.mxu0 0.0
    %2109 = vmatpush1.msra.mxu0 0.0
    %2110 = vmatprep.subr.mxu0 0.0
    %2111 = vmatpush1.msra.mxu0 0.0
    %2112 = vmatprep.subr.mxu0 0.0
    %2113 = vmatpush1.msra.mxu0 0.0
    %2114 = vmatprep.subr.mxu0 0.0
    %2115 = vmatpush1.msra.mxu0 0.0
    %2116 = vmatprep.subr.mxu0 0.0
    %2117 = vmatpush1.msra.mxu0 0.0
    %2118 = vmatprep.subr.mxu0 0.0
    %2119 = vmatpush1.msra.mxu0 0.0
    %2120 = vmatprep.subr.mxu0 0.0
    %2121 = vmatpush1.msra.mxu0 0.0
    %2122 = vmatprep.subr.mxu0 0.0
    %2123 = vmatpush1.msra.mxu0 0.0
    %2124 = vmatprep.subr.mxu0 0.0
    %2125 = vmatpush1.msra.mxu0 0.0
    %2126 = vmatprep.subr.mxu0 0.0
    %2127 = vmatpush1.msra.mxu0 0.0
    %2128 = vmatprep.subr.mxu0 0.0
    %2129 = vmatpush1.msra.mxu0 0.0
    %2130 = vmatprep.subr.mxu0 0.0
    %2131 = vmatpush1.msra.mxu0 0.0
    %2132 = vmatprep.subr.mxu0 0.0
    %2133 = vmatpush1.msra.mxu0 0.0
    %2134 = vmatprep.subr.mxu0 0.0
    %2135 = vmatpush1.msra.mxu0 0.0
    %2136 = vmatprep.subr.mxu0 0.0
    %2137 = vmatpush1.msra.mxu0 0.0
    %2138 = vmatprep.subr.mxu0 0.0
    %2139 = vmatpush1.msra.mxu0 0.0
    %2140 = vmatprep.subr.mxu0 0.0
    %2141 = vmatpush1.msra.mxu0 0.0
    %2142 = vmatprep.subr.mxu0 0.0
    %2143 = vmatpush1.msra.mxu0 0.0
    %2144 = vmatprep.mubr.f32.mxu0 0.0
    %2145 = vmatmul.mubr.f32.gmra.mrb[0].mxu0 %v1380
    %v2146 = vpop.f32.mrb[0].mxu0
    %v2147 = vadd.f32 0.0, %v2146
    %v2148 = vpop.f32.mrb[0].mxu0
    %2149 = vmatprep.mubr.f32.mxu0 0.0
    %2150 = vmatmul.mubr.f32.gmra.mrb[0].mxu0 %v1383
    %v2151 = vpop.f32.mrb[0].mxu0
    %v2152 = vadd.f32 0.0, %v2151
    %v2153 = vpop.f32.mrb[0].mxu0
    %2154 = vdwg.mxu0
    %vm2155 = vcmp.lt.s32.totalorder %v117, 16
    %v2156 = vsel %vm2155, 1, 0
    %vm2157 = vcmp.eq.s32.totalorder %v2156, 1
    %v2158 = vsel %vm2157, %v2147, 0.0
    %v2159 = vsel %vm2157, %v2152, 0.0
    %v2160 = vmax.f32 %v2038, %v2158
    %v2161 = vmax.f32 %v2039, %v2159
    %vm2162 = vcmask 1040384
    %v2163 = vrot.slane %v1363, 7
    %v2164 = vrot.slane %v1364, 7
    %v2165 = vsel %vm2162, %v2163, %v2164
    %v2166 = vrot.slane %v1365, 7
    %v2167 = vsel %vm2162, %v2164, %v2166
    %v2168 = vrot.slane %v1366, 7
    %v2169 = vsel %vm2162, %v2166, %v2168
    %v2170 = vrot.slane %v1367, 7
    %v2171 = vsel %vm2162, %v2168, %v2170
    %v2172 = vrot.slane %v1368, 7
    %v2173 = vsel %vm2162, %v2170, %v2172
    %v2174 = vrot.slane %v1369, 7
    %v2175 = vsel %vm2162, %v2172, %v2174
    %v2176 = vrot.slane %v1370, 7
    %v2177 = vsel %vm2162, %v2174, %v2176
    %v2178 = vrot.slane %v1371, 7
    %v2179 = vsel %vm2162, %v2176, %v2178
    %v2180 = vrot.slane %v1372, 7
    %v2181 = vsel %vm2162, %v2178, %v2180
    %v2182 = vrot.slane %v1373, 7
    %v2183 = vsel %vm2162, %v2180, %v2182
    %v2184 = vrot.slane %v1374, 7
    %v2185 = vsel %vm2162, %v2182, %v2184
    %v2186 = vrot.slane %v1375, 7
    %v2187 = vsel %vm2162, %v2184, %v2186
    %v2199 = vsel %vm1385, %v2187, 0
    %2201 = vmatprep.subr.mxu0 0.0
    %2202 = vmatpush1.msra.mxu0 %v2165
    %2203 = vmatprep.subr.mxu0 0.0
    %2204 = vmatpush1.msra.mxu0 %v2167
    %2205 = vmatprep.subr.mxu0 0.0
    %2206 = vmatpush1.msra.mxu0 %v2169
    %2207 = vmatprep.subr.mxu0 0.0
    %2208 = vmatpush1.msra.mxu0 %v2171
    %2209 = vmatprep.subr.mxu0 0.0
    %2210 = vmatpush1.msra.mxu0 %v2173
    %2211 = vmatprep.subr.mxu0 0.0
    %2212 = vmatpush1.msra.mxu0 %v2175
    %2213 = vmatprep.subr.mxu0 0.0
    %2214 = vmatpush1.msra.mxu0 %v2177
    %2215 = vmatprep.subr.mxu0 0.0
    %2216 = vmatpush1.msra.mxu0 %v2179
    %2217 = vmatprep.subr.mxu0 0.0
    %2218 = vmatpush1.msra.mxu0 %v2181
    %2219 = vmatprep.subr.mxu0 0.0
    %2220 = vmatpush1.msra.mxu0 %v2183
    %2221 = vmatprep.subr.mxu0 0.0
    %2222 = vmatpush1.msra.mxu0 %v2185
    %2223 = vmatprep.subr.mxu0 0.0
    %2224 = vmatpush1.msra.mxu0 %v2199
    %2225 = vmatprep.subr.mxu0 0.0
    %2226 = vmatpush1.msra.mxu0 0.0
    %2227 = vmatprep.subr.mxu0 0.0
    %2228 = vmatpush1.msra.mxu0 0.0
    %2229 = vmatprep.subr.mxu0 0.0
    %2230 = vmatpush1.msra.mxu0 0.0
    %2231 = vmatprep.subr.mxu0 0.0
    %2232 = vmatpush1.msra.mxu0 0.0
    %2233 = vmatprep.subr.mxu0 0.0
    %2234 = vmatpush1.msra.mxu0 0.0
    %2235 = vmatprep.subr.mxu0 0.0
    %2236 = vmatpush1.msra.mxu0 0.0
    %2237 = vmatprep.subr.mxu0 0.0
    %2238 = vmatpush1.msra.mxu0 0.0
    %2239 = vmatprep.subr.mxu0 0.0
    %2240 = vmatpush1.msra.mxu0 0.0
    %2241 = vmatprep.subr.mxu0 0.0
    %2242 = vmatpush1.msra.mxu0 0.0
    %2243 = vmatprep.subr.mxu0 0.0
    %2244 = vmatpush1.msra.mxu0 0.0
    %2245 = vmatprep.subr.mxu0 0.0
    %2246 = vmatpush1.msra.mxu0 0.0
    %2247 = vmatprep.subr.mxu0 0.0
    %2248 = vmatpush1.msra.mxu0 0.0
    %2249 = vmatprep.subr.mxu0 0.0
    %2250 = vmatpush1.msra.mxu0 0.0
    %2251 = vmatprep.subr.mxu0 0.0
    %2252 = vmatpush1.msra.mxu0 0.0
    %2253 = vmatprep.subr.mxu0 0.0
    %2254 = vmatpush1.msra.mxu0 0.0
    %2255 = vmatprep.subr.mxu0 0.0
    %2256 = vmatpush1.msra.mxu0 0.0
    %2257 = vmatprep.subr.mxu0 0.0
    %2258 = vmatpush1.msra.mxu0 0.0
    %2259 = vmatprep.subr.mxu0 0.0
    %2260 = vmatpush1.msra.mxu0 0.0
    %2261 = vmatprep.subr.mxu0 0.0
    %2262 = vmatpush1.msra.mxu0 0.0
    %2263 = vmatprep.subr.mxu0 0.0
    %2264 = vmatpush1.msra.mxu0 0.0
    %2265 = vmatprep.mubr.f32.mxu0 0.0
    %2266 = vmatmul.mubr.f32.gmra.mrb[0].mxu0 %v1380
    %v2267 = vpop.f32.mrb[0].mxu0
    %v2268 = vadd.f32 0.0, %v2267
    %v2269 = vpop.f32.mrb[0].mxu0
    %2270 = vmatprep.mubr.f32.mxu0 0.0
    %2271 = vmatmul.mubr.f32.gmra.mrb[0].mxu0 %v1383
    %v2272 = vpop.f32.mrb[0].mxu0
    %v2273 = vadd.f32 0.0, %v2272
    %v2274 = vpop.f32.mrb[0].mxu0
    %2275 = vdwg.mxu0
    %vm2276 = vcmp.lt.s32.totalorder %v117, 8
    %v2277 = vsel %vm2276, 1, 0
    %vm2278 = vcmp.eq.s32.totalorder %v2277, 1
    %v2279 = vsel %vm2278, %v2268, 0.0
    %v2280 = vsel %vm2278, %v2273, 0.0
    %v2281 = vmax.f32 %v2160, %v2279
    %v2282 = vmax.f32 %v2161, %v2280
    %v2283 = vld [vmem:[%s7] sm:$0xff]
    %v2284 = vld [vmem:[%s7 + $0x8] sm:$0xff]
    %v2285 = vld [vmem:[%s7 + $0x10] sm:$0xff]
    %v2286 = vld [vmem:[%s9] sm:$0x1]
    %v2288 = vlaneseq
    %v2289 = vshrl.u32 %v2288, 7
    %v2290 = vsub.s32 0, %v2289
    %v2291 = vrot.slane %v2286, %v2290
    %vm2293 = vcmask 195584
    %v2295 = vsel %vm2293, %v2281, 0
    %v2298 = vsel %vm2293, %v2282, 0
    %2300 = vmatprep.subr.mxu0 0.0
    %2301 = vmatpush1.msra.mxu0 %v2283
    %2302 = vmatprep.subr.mxu0 0.0
    %2303 = vmatpush1.msra.mxu0 %v2284
    %2304 = vmatprep.subr.mxu0 0.0
    %2305 = vmatpush1.msra.mxu0 %v2285
    %2306 = vmatprep.subr.mxu0 0.0
    %2307 = vmatpush1.msra.mxu0 0.0
    %2308 = vmatprep.subr.mxu0 0.0
    %2309 = vmatpush1.msra.mxu0 0.0
    %2310 = vmatprep.subr.mxu0 0.0
    %2311 = vmatpush1.msra.mxu0 0.0
    %2312 = vmatprep.subr.mxu0 0.0
    %2313 = vmatpush1.msra.mxu0 0.0
    %2314 = vmatprep.subr.mxu0 0.0
    %2315 = vmatpush1.msra.mxu0 0.0
    %2316 = vmatprep.subr.mxu0 0.0
    %2317 = vmatpush1.msra.mxu0 0.0
    %2318 = vmatprep.subr.mxu0 0.0
    %2319 = vmatpush1.msra.mxu0 0.0
    %2320 = vmatprep.subr.mxu0 0.0
    %2321 = vmatpush1.msra.mxu0 0.0
    %2322 = vmatprep.subr.mxu0 0.0
    %2323 = vmatpush1.msra.mxu0 0.0
    %2324 = vmatprep.subr.mxu0 0.0
    %2325 = vmatpush1.msra.mxu0 0.0
    %2326 = vmatprep.subr.mxu0 0.0
    %2327 = vmatpush1.msra.mxu0 0.0
    %2328 = vmatprep.subr.mxu0 0.0
    %2329 = vmatpush1.msra.mxu0 0.0
    %2330 = vmatprep.subr.mxu0 0.0
    %2331 = vmatpush1.msra.mxu0 0.0
    %2332 = vmatprep.subr.mxu0 0.0
    %2333 = vmatpush1.msra.mxu0 0.0
    %2334 = vmatprep.subr.mxu0 0.0
    %2335 = vmatpush1.msra.mxu0 0.0
    %2336 = vmatprep.subr.mxu0 0.0
    %2337 = vmatpush1.msra.mxu0 0.0
    %2338 = vmatprep.subr.mxu0 0.0
    %2339 = vmatpush1.msra.mxu0 0.0
    %2340 = vmatprep.subr.mxu0 0.0
    %2341 = vmatpush1.msra.mxu0 0.0
    %2342 = vmatprep.subr.mxu0 0.0
    %2343 = vmatpush1.msra.mxu0 0.0
    %2344 = vmatprep.subr.mxu0 0.0
    %2345 = vmatpush1.msra.mxu0 0.0
    %2346 = vmatprep.subr.mxu0 0.0
    %2347 = vmatpush1.msra.mxu0 0.0
    %2348 = vmatprep.subr.mxu0 0.0
    %2349 = vmatpush1.msra.mxu0 0.0
    %2350 = vmatprep.subr.mxu0 0.0
    %2351 = vmatpush1.msra.mxu0 0.0
    %2352 = vmatprep.subr.mxu0 0.0
    %2353 = vmatpush1.msra.mxu0 0.0
    %2354 = vmatprep.subr.mxu0 0.0
    %2355 = vmatpush1.msra.mxu0 0.0
    %2356 = vmatprep.subr.mxu0 0.0
    %2357 = vmatpush1.msra.mxu0 0.0
    %2358 = vmatprep.subr.mxu0 0.0
    %2359 = vmatpush1.msra.mxu0 0.0
    %2360 = vmatprep.subr.mxu0 0.0
    %2361 = vmatpush1.msra.mxu0 0.0
    %2362 = vmatprep.subr.mxu0 0.0
    %2363 = vmatpush1.msra.mxu0 0.0
    %2364 = vmatprep.mubr.f32.mxu0 0.0
    %2365 = vmatmul.mubr.f32.gmra.mrb[0].mxu0 %v2295
    %v2366 = vpop.f32.mrb[0].mxu0
    %v2367 = vadd.f32 %v2291, %v2366
    %v2368 = vpop.f32.mrb[0].mxu0
    %2369 = vmatprep.mubr.f32.mxu0 0.0
    %2370 = vmatmul.mubr.f32.gmra.mrb[0].mxu0 %v2298
    %v2371 = vpop.f32.mrb[0].mxu0
    %v2372 = vadd.f32 %v2291, %v2371
    %v2373 = vpop.f32.mrb[0].mxu0
    %2374 = vdwg.mxu0
    %v2375 = vld [vmem:[%s8] sm:$0xff]
    %v2376 = vld [vmem:[%s8 + $0x8] sm:$0xff]
    %v2377 = vld [vmem:[%s8 + $0x10] sm:$0xff]
    %v2378 = vld [vmem:[%s8 + $0x18] sm:$0xff]
    %s2379 = sld [smem:[#allocation3]]
    %v2380 = vstv %s2379
    %s2381 = sld [smem:[#allocation3 + $0x1]]
    %v2382 = vstv %s2381
    %v2383 = vsel %vm2162, %v2380, %v2382
    %v2384 = vld [vmem:[%s10] sm:$0x1]
    %v2385 = vlaneseq
    %v2386 = vshrl.u32 %v2385, 7
    %v2387 = vsub.s32 0, %v2386
    %v2388 = vrot.slane %v2384, %v2387
    %v2389 = vadd.f32 %v2388, 0.0
    %v2390 = vld [vmem:[%s11] sm:$0x1]
    %v2391 = vlaneseq
    %v2392 = vshrl.u32 %v2391, 7
    %v2393 = vsub.s32 0, %v2392
    %v2394 = vrot.slane %v2390, %v2393
    %v2395 = vadd.f32 %v2394, 0.0
    %v2396 = vld [vmem:[%s10 + $0x1] sm:$0x1]
    %v2397 = vlaneseq
    %v2398 = vshrl.u32 %v2397, 7
    %v2399 = vsub.s32 0, %v2398
    %v2400 = vrot.slane %v2396, %v2399
    %v2401 = vadd.f32 %v2400, 0.0
    %v2402 = vld [vmem:[%s11 + $0x1] sm:$0x1]
    %v2403 = vlaneseq
    %v2404 = vshrl.u32 %v2403, 7
    %v2405 = vsub.s32 0, %v2404
    %v2406 = vrot.slane %v2402, %v2405
    %v2407 = vadd.f32 %v2406, 0.0
    %2409 = vrot.lane.b32.xlu0 %v2401, 16
    %v2410 = vpop.permute.xlu0 %2409
    %vm2412 = vcmask 130048
    %v2413 = vsel %vm2412, %v2389, %v2410
    %vm2414 = vcmask 523264
    %v2415 = vsel %vm2414, %v2367, %v2372
    %v2417 = vsel %vm431, %v2413, 0
    %2419 = vmatprep.subr.mxu0 0.0
    %2420 = vmatpush1.msra.mxu0 %v2375
    %2421 = vmatprep.subr.mxu0 0.0
    %2422 = vmatpush1.msra.mxu0 %v2376
    %2423 = vmatprep.subr.mxu0 0.0
    %2424 = vmatpush1.msra.mxu0 %v2377
    %2425 = vmatprep.subr.mxu0 0.0
    %2426 = vmatpush1.msra.mxu0 %v2378
    %2427 = vmatprep.subr.mxu0 0.0
    %2428 = vmatpush1.msra.mxu0 0.0
    %2429 = vmatprep.subr.mxu0 0.0
    %2430 = vmatpush1.msra.mxu0 0.0
    %2431 = vmatprep.subr.mxu0 0.0
    %2432 = vmatpush1.msra.mxu0 0.0
    %2433 = vmatprep.subr.mxu0 0.0
    %2434 = vmatpush1.msra.mxu0 0.0
    %2435 = vmatprep.subr.mxu0 0.0
    %2436 = vmatpush1.msra.mxu0 0.0
    %2437 = vmatprep.subr.mxu0 0.0
    %2438 = vmatpush1.msra.mxu0 0.0
    %2439 = vmatprep.subr.mxu0 0.0
    %2440 = vmatpush1.msra.mxu0 0.0
    %2441 = vmatprep.subr.mxu0 0.0
    %2442 = vmatpush1.msra.mxu0 0.0
    %2443 = vmatprep.subr.mxu0 0.0
    %2444 = vmatpush1.msra.mxu0 0.0
    %2445 = vmatprep.subr.mxu0 0.0
    %2446 = vmatpush1.msra.mxu0 0.0
    %2447 = vmatprep.subr.mxu0 0.0
    %2448 = vmatpush1.msra.mxu0 0.0
    %2449 = vmatprep.subr.mxu0 0.0
    %2450 = vmatpush1.msra.mxu0 0.0
    %2451 = vmatprep.subr.mxu0 0.0
    %2452 = vmatpush1.msra.mxu0 0.0
    %2453 = vmatprep.subr.mxu0 0.0
    %2454 = vmatpush1.msra.mxu0 0.0
    %2455 = vmatprep.subr.mxu0 0.0
    %2456 = vmatpush1.msra.mxu0 0.0
    %2457 = vmatprep.subr.mxu0 0.0
    %2458 = vmatpush1.msra.mxu0 0.0
    %2459 = vmatprep.subr.mxu0 0.0
    %2460 = vmatpush1.msra.mxu0 0.0
    %2461 = vmatprep.subr.mxu0 0.0
    %2462 = vmatpush1.msra.mxu0 0.0
    %2463 = vmatprep.subr.mxu0 0.0
    %2464 = vmatpush1.msra.mxu0 0.0
    %2465 = vmatprep.subr.mxu0 0.0
    %2466 = vmatpush1.msra.mxu0 0.0
    %2467 = vmatprep.subr.mxu0 0.0
    %2468 = vmatpush1.msra.mxu0 0.0
    %2469 = vmatprep.subr.mxu0 0.0
    %2470 = vmatpush1.msra.mxu0 0.0
    %2471 = vmatprep.subr.mxu0 0.0
    %2472 = vmatpush1.msra.mxu0 0.0
    %2473 = vmatprep.subr.mxu0 0.0
    %2474 = vmatpush1.msra.mxu0 0.0
    %2475 = vmatprep.subr.mxu0 0.0
    %2476 = vmatpush1.msra.mxu0 0.0
    %2477 = vmatprep.subr.mxu0 0.0
    %2478 = vmatpush1.msra.mxu0 0.0
    %2479 = vmatprep.subr.mxu0 0.0
    %2480 = vmatpush1.msra.mxu0 0.0
    %2481 = vmatprep.subr.mxu0 0.0
    %2482 = vmatpush1.msra.mxu0 0.0
    %2483 = vmatprep.mubr.f32.mxu0 0.0
    %2484 = vmatmul.mubr.f32.gmra.mrb[0].mxu0 %v2417
    %v2485 = vpop.f32.mrb[0].mxu0
    %v2486 = vadd.f32 0.0, %v2485
    %v2487 = vpop.f32.mrb[0].mxu0
    %2488 = vdwg.mxu0
    %v2489 = vadd.f32 %v2415, %v2486
    %v2490 = vmul.f32 %v2489, 0.5
    %v2491 = vtanh.pop %v2490
    %v2492 = vadd.f32 %v2491, 1.0
    %v2493 = vmul.f32 %v2492, 0.5
    %v2494 = vtanh.pop %v2489
    %2496 = vrot.lane.b32.xlu0 %v2395, 16
    %v2497 = vpop.permute.xlu0 %2496
    %v2499 = vmul.f32 %v2493, %v2497
    %2501 = vrot.lane.b32.xlu0 %v2494, 96
    %v2502 = vpop.permute.xlu0 %2501
    %v2504 = vmul.f32 %v2493, %v2502
    %2506 = vrot.lane.b32.xlu0 %v2504, 16
    %v2507 = vpop.permute.xlu0 %2506
    %v2509 = vadd.f32 %v2499, %v2507
    %v2510 = vtanh.pop %v2509
    %2512 = vrot.lane.b32.xlu0 %v2510, 32
    %v2513 = vpop.permute.xlu0 %2512
    %v2515 = vmul.f32 %v2493, %v2513
    %2517 = vrot.lane.b32.xlu0 %v2407, 80
    %v2518 = vpop.permute.xlu0 %2517
    %v2520 = vmul.f32 %v2493, %v2518
    %v2521 = vadd.f32 %v2520, %v2507
    %v2522 = vtanh.pop %v2521
    %2524 = vrot.lane.b32.xlu0 %v2522, 32
    %v2525 = vpop.permute.xlu0 %2524
    %v2527 = vmul.f32 %v2493, %v2525
    %vm2528 = vcmp.gt.s32.totalorder %v2383, 0
    %v2529 = vsel %vm2528, 1, 0
    %v2530 = vcvt.s32.f32 %v2529
    %vm2531 = vcmp.gt.s32.totalorder %v2383, 4
    %v2532 = vsel %vm2531, 1, 0
    %v2533 = vcvt.s32.f32 %v2532
    %2535 = vset.pattern.permute.xlu0 0
    %2536 = vperm.xlu0 %2535, %v2530
    %v2537 = vpop.permute.xlu0 %2536
    %v2539 = vmul.f32 %v2537, %v2515
    %v2540 = vsub.f32 1.0, %v2530
    %2542 = vset.pattern.permute.xlu0 0
    %2543 = vperm.xlu0 %2542, %v2540
    %v2544 = vpop.permute.xlu0 %2543
    %v2546 = vmul.f32 %v2544, %v2389
    %2548 = vrot.lane.b32.xlu0 %v2546, 48
    %v2549 = vpop.permute.xlu0 %2548
    %v2551 = vadd.f32 %v2539, %v2549
    %v2552 = vmul.f32 %v2537, %v2509
    %v2553 = vmul.f32 %v2544, %v2395
    %2555 = vrot.lane.b32.xlu0 %v2553, 16
    %v2556 = vpop.permute.xlu0 %2555
    %v2558 = vadd.f32 %v2552, %v2556
    %2560 = vset.pattern.permute.xlu0 0
    %2561 = vperm.xlu0 %2560, %v2533
    %v2562 = vpop.permute.xlu0 %2561
    %v2564 = vmul.f32 %v2562, %v2527
    %v2565 = vsub.f32 1.0, %v2533
    %2567 = vset.pattern.permute.xlu0 0
    %2568 = vperm.xlu0 %2567, %v2565
    %v2569 = vpop.permute.xlu0 %2568
    %v2571 = vmul.f32 %v2569, %v2401
    %2573 = vrot.lane.b32.xlu0 %v2571, 112
    %v2574 = vpop.permute.xlu0 %2573
    %v2576 = vadd.f32 %v2564, %v2574
    %v2577 = vmul.f32 %v2562, %v2521
    %v2578 = vmul.f32 %v2569, %v2407
    %2580 = vrot.lane.b32.xlu0 %v2578, 80
    %v2581 = vpop.permute.xlu0 %2580
    %v2583 = vadd.f32 %v2577, %v2581
    %v2584 = vmul.f32 %v2551, %v2537
    %v2585 = vmul.f32 %v2576, %v2562
    %2587 = vrot.lane.b32.xlu0 %v2551, 80
    %v2588 = vpop.permute.xlu0 %2587
    %2591 = vrot.lane.b32.xlu0 %v2576, 32
    %v2592 = vpop.permute.xlu0 %2591
    %v2594 = vsel %vm2412, %v2588, %v2592
    %v2596 = vrot.slane %v2367, 4
    %v2598 = vsel %vm2414, %v2367, %v2596
    %v2600 = vsel %vm431, %v2594, 0
    %2602 = vmatprep.subr.mxu0 0.0
    %2603 = vmatpush1.msra.mxu0 %v2375
    %2604 = vmatprep.subr.mxu0 0.0
    %2605 = vmatpush1.msra.mxu0 %v2376
    %2606 = vmatprep.subr.mxu0 0.0
    %2607 = vmatpush1.msra.mxu0 %v2377
    %2608 = vmatprep.subr.mxu0 0.0
    %2609 = vmatpush1.msra.mxu0 %v2378
    %2610 = vmatprep.subr.mxu0 0.0
    %2611 = vmatpush1.msra.mxu0 0.0
    %2612 = vmatprep.subr.mxu0 0.0
    %2613 = vmatpush1.msra.mxu0 0.0
    %2614 = vmatprep.subr.mxu0 0.0
    %2615 = vmatpush1.msra.mxu0 0.0
    %2616 = vmatprep.subr.mxu0 0.0
    %2617 = vmatpush1.msra.mxu0 0.0
    %2618 = vmatprep.subr.mxu0 0.0
    %2619 = vmatpush1.msra.mxu0 0.0
    %2620 = vmatprep.subr.mxu0 0.0
    %2621 = vmatpush1.msra.mxu0 0.0
    %2622 = vmatprep.subr.mxu0 0.0
    %2623 = vmatpush1.msra.mxu0 0.0
    %2624 = vmatprep.subr.mxu0 0.0
    %2625 = vmatpush1.msra.mxu0 0.0
    %2626 = vmatprep.subr.mxu0 0.0
    %2627 = vmatpush1.msra.mxu0 0.0
    %2628 = vmatprep.subr.mxu0 0.0
    %2629 = vmatpush1.msra.mxu0 0.0
    %2630 = vmatprep.subr.mxu0 0.0
    %2631 = vmatpush1.msra.mxu0 0.0
    %2632 = vmatprep.subr.mxu0 0.0
    %2633 = vmatpush1.msra.mxu0 0.0
    %2634 = vmatprep.subr.mxu0 0.0
    %2635 = vmatpush1.msra.mxu0 0.0
    %2636 = vmatprep.subr.mxu0 0.0
    %2637 = vmatpush1.msra.mxu0 0.0
    %2638 = vmatprep.subr.mxu0 0.0
    %2639 = vmatpush1.msra.mxu0 0.0
    %2640 = vmatprep.subr.mxu0 0.0
    %2641 = vmatpush1.msra.mxu0 0.0
    %2642 = vmatprep.subr.mxu0 0.0
    %2643 = vmatpush1.msra.mxu0 0.0
    %2644 = vmatprep.subr.mxu0 0.0
    %2645 = vmatpush1.msra.mxu0 0.0
    %2646 = vmatprep.subr.mxu0 0.0
    %2647 = vmatpush1.msra.mxu0 0.0
    %2648 = vmatprep.subr.mxu0 0.0
    %2649 = vmatpush1.msra.mxu0 0.0
    %2650 = vmatprep.subr.mxu0 0.0
    %2651 = vmatpush1.msra.mxu0 0.0
    %2652 = vmatprep.subr.mxu0 0.0
    %2653 = vmatpush1.msra.mxu0 0.0
    %2654 = vmatprep.subr.mxu0 0.0
    %2655 = vmatpush1.msra.mxu0 0.0
    %2656 = vmatprep.subr.mxu0 0.0
    %2657 = vmatpush1.msra.mxu0 0.0
    %2658 = vmatprep.subr.mxu0 0.0
    %2659 = vmatpush1.msra.mxu0 0.0
    %2660 = vmatprep.subr.mxu0 0.0
    %2661 = vmatpush1.msra.mxu0 0.0
    %2662 = vmatprep.subr.mxu0 0.0
    %2663 = vmatpush1.msra.mxu0 0.0
    %2664 = vmatprep.subr.mxu0 0.0
    %2665 = vmatpush1.msra.mxu0 0.0
    %2666 = vmatprep.mubr.f32.mxu0 0.0
    %2667 = vmatmul.mubr.f32.gmra.mrb[0].mxu0 %v2600
    %v2668 = vpop.f32.mrb[0].mxu0
    %v2669 = vadd.f32 0.0, %v2668
    %v2670 = vpop.f32.mrb[0].mxu0
    %2671 = vdwg.mxu0
    %v2673 = vrot.slane %v2669, 6
    %v2675 = vadd.f32 %v2598, %v2673
    %v2676 = vmul.f32 %v2675, 0.5
    %v2677 = vtanh.pop %v2676
    %v2678 = vadd.f32 %v2677, 1.0
    %v2679 = vmul.f32 %v2678, 0.5
    %v2680 = vtanh.pop %v2675
    %v2682 = vrot.slane %v2558, 6
    %v2684 = vmul.f32 %v2679, %v2682
    %2686 = vrot.lane.b32.xlu0 %v2680, 96
    %v2687 = vpop.permute.xlu0 %2686
    %v2689 = vmul.f32 %v2679, %v2687
    %2691 = vrot.lane.b32.xlu0 %v2689, 16
    %v2692 = vpop.permute.xlu0 %2691
    %v2694 = vadd.f32 %v2684, %v2692
    %v2695 = vtanh.pop %v2694
    %2697 = vrot.lane.b32.xlu0 %v2695, 32
    %v2698 = vpop.permute.xlu0 %2697
    %v2700 = vmul.f32 %v2679, %v2698
    %v2702 = vrot.slane %v2583, 6
    %v2704 = vmul.f32 %v2679, %v2702
    %v2705 = vadd.f32 %v2704, %v2692
    %v2706 = vtanh.pop %v2705
    %2708 = vrot.lane.b32.xlu0 %v2706, 32
    %v2709 = vpop.permute.xlu0 %2708
    %v2711 = vmul.f32 %v2679, %v2709
    %vm2712 = vcmp.gt.s32.totalorder %v2383, 1
    %v2713 = vsel %vm2712, 1, 0
    %v2714 = vcvt.s32.f32 %v2713
    %vm2715 = vcmp.gt.s32.totalorder %v2383, 3
    %v2716 = vsel %vm2715, 1, 0
    %v2717 = vcvt.s32.f32 %v2716
    %2719 = vset.pattern.permute.xlu0 0
    %2720 = vperm.xlu0 %2719, %v2714
    %v2721 = vpop.permute.xlu0 %2720
    %v2724 = vrot.slane %v2700, 2
    %2725 = vrot.lane.b32.xlu0 %v2724, 80
    %v2726 = vpop.permute.xlu0 %2725
    %v2728 = vmul.f32 %v2721, %v2726
    %v2729 = vsub.f32 1.0, %v2714
    %2731 = vset.pattern.permute.xlu0 0
    %2732 = vperm.xlu0 %2731, %v2729
    %v2733 = vpop.permute.xlu0 %2732
    %v2735 = vmul.f32 %v2733, %v2551
    %2737 = vrot.lane.b32.xlu0 %v2735, 80
    %v2738 = vpop.permute.xlu0 %2737
    %v2740 = vadd.f32 %v2728, %v2738
    %v2742 = vrot.slane %v2694, 2
    %2743 = vrot.lane.b32.xlu0 %v2742, 112
    %v2744 = vpop.permute.xlu0 %2743
    %v2746 = vmul.f32 %v2721, %v2744
    %v2747 = vmul.f32 %v2733, %v2558
    %2749 = vrot.lane.b32.xlu0 %v2747, 112
    %v2750 = vpop.permute.xlu0 %2749
    %v2752 = vadd.f32 %v2746, %v2750
    %2754 = vset.pattern.permute.xlu0 0
    %2755 = vperm.xlu0 %2754, %v2717
    %v2756 = vpop.permute.xlu0 %2755
    %v2759 = vrot.slane %v2711, 2
    %2760 = vrot.lane.b32.xlu0 %v2759, 16
    %v2761 = vpop.permute.xlu0 %2760
    %v2763 = vmul.f32 %v2756, %v2761
    %v2764 = vsub.f32 1.0, %v2717
    %2766 = vset.pattern.permute.xlu0 0
    %2767 = vperm.xlu0 %2766, %v2764
    %v2768 = vpop.permute.xlu0 %2767
    %v2770 = vmul.f32 %v2768, %v2576
    %2772 = vrot.lane.b32.xlu0 %v2770, 16
    %v2773 = vpop.permute.xlu0 %2772
    %v2775 = vadd.f32 %v2763, %v2773
    %v2777 = vrot.slane %v2705, 2
    %2778 = vrot.lane.b32.xlu0 %v2777, 48
    %v2779 = vpop.permute.xlu0 %2778
    %v2781 = vmul.f32 %v2756, %v2779
    %v2782 = vmul.f32 %v2768, %v2583
    %2784 = vrot.lane.b32.xlu0 %v2782, 48
    %v2785 = vpop.permute.xlu0 %2784
    %v2787 = vadd.f32 %v2781, %v2785
    %v2788 = vmul.f32 %v2740, %v2721
    %v2789 = vmul.f32 %v2775, %v2756
    %2791 = vrot.lane.b32.xlu0 %v2775, 16
    %v2792 = vpop.permute.xlu0 %2791
    %v2794 = vsel %vm2412, %v2740, %v2792
    %v2796 = vsel %vm431, %v2794, 0
    %2798 = vmatprep.subr.mxu0 0.0
    %2799 = vmatpush1.msra.mxu0 %v2375
    %2800 = vmatprep.subr.mxu0 0.0
    %2801 = vmatpush1.msra.mxu0 %v2376
    %2802 = vmatprep.subr.mxu0 0.0
    %2803 = vmatpush1.msra.mxu0 %v2377
    %2804 = vmatprep.subr.mxu0 0.0
    %2805 = vmatpush1.msra.mxu0 %v2378
    %2806 = vmatprep.subr.mxu0 0.0
    %2807 = vmatpush1.msra.mxu0 0.0
    %2808 = vmatprep.subr.mxu0 0.0
    %2809 = vmatpush1.msra.mxu0 0.0
    %2810 = vmatprep.subr.mxu0 0.0
    %2811 = vmatpush1.msra.mxu0 0.0
    %2812 = vmatprep.subr.mxu0 0.0
    %2813 = vmatpush1.msra.mxu0 0.0
    %2814 = vmatprep.subr.mxu0 0.0
    %2815 = vmatpush1.msra.mxu0 0.0
    %2816 = vmatprep.subr.mxu0 0.0
    %2817 = vmatpush1.msra.mxu0 0.0
    %2818 = vmatprep.subr.mxu0 0.0
    %2819 = vmatpush1.msra.mxu0 0.0
    %2820 = vmatprep.subr.mxu0 0.0
    %2821 = vmatpush1.msra.mxu0 0.0
    %2822 = vmatprep.subr.mxu0 0.0
    %2823 = vmatpush1.msra.mxu0 0.0
    %2824 = vmatprep.subr.mxu0 0.0
    %2825 = vmatpush1.msra.mxu0 0.0
    %2826 = vmatprep.subr.mxu0 0.0
    %2827 = vmatpush1.msra.mxu0 0.0
    %2828 = vmatprep.subr.mxu0 0.0
    %2829 = vmatpush1.msra.mxu0 0.0
    %2830 = vmatprep.subr.mxu0 0.0
    %2831 = vmatpush1.msra.mxu0 0.0
    %2832 = vmatprep.subr.mxu0 0.0
    %2833 = vmatpush1.msra.mxu0 0.0
    %2834 = vmatprep.subr.mxu0 0.0
    %2835 = vmatpush1.msra.mxu0 0.0
    %2836 = vmatprep.subr.mxu0 0.0
    %2837 = vmatpush1.msra.mxu0 0.0
    %2838 = vmatprep.subr.mxu0 0.0
    %2839 = vmatpush1.msra.mxu0 0.0
    %2840 = vmatprep.subr.mxu0 0.0
    %2841 = vmatpush1.msra.mxu0 0.0
    %2842 = vmatprep.subr.mxu0 0.0
    %2843 = vmatpush1.msra.mxu0 0.0
    %2844 = vmatprep.subr.mxu0 0.0
    %2845 = vmatpush1.msra.mxu0 0.0
    %2846 = vmatprep.subr.mxu0 0.0
    %2847 = vmatpush1.msra.mxu0 0.0
    %2848 = vmatprep.subr.mxu0 0.0
    %2849 = vmatpush1.msra.mxu0 0.0
    %2850 = vmatprep.subr.mxu0 0.0
    %2851 = vmatpush1.msra.mxu0 0.0
    %2852 = vmatprep.subr.mxu0 0.0
    %2853 = vmatpush1.msra.mxu0 0.0
    %2854 = vmatprep.subr.mxu0 0.0
    %2855 = vmatpush1.msra.mxu0 0.0
    %2856 = vmatprep.subr.mxu0 0.0
    %2857 = vmatpush1.msra.mxu0 0.0
    %2858 = vmatprep.subr.mxu0 0.0
    %2859 = vmatpush1.msra.mxu0 0.0
    %2860 = vmatprep.subr.mxu0 0.0
    %2861 = vmatpush1.msra.mxu0 0.0
    %2862 = vmatprep.mubr.f32.mxu0 0.0
    %2863 = vmatmul.mubr.f32.gmra.mrb[0].mxu0 %v2796
    %v2864 = vpop.f32.mrb[0].mxu0
    %v2865 = vadd.f32 0.0, %v2864
    %v2866 = vpop.f32.mrb[0].mxu0
    %2867 = vdwg.mxu0
    %v2869 = vrot.slane %v2865, 4
    %v2871 = vadd.f32 %v2367, %v2869
    %v2872 = vmul.f32 %v2871, 0.5
    %v2873 = vtanh.pop %v2872
    %v2874 = vadd.f32 %v2873, 1.0
    %v2875 = vmul.f32 %v2874, 0.5
    %v2876 = vtanh.pop %v2871
    %v2878 = vrot.slane %v2752, 4
    %2879 = vrot.lane.b32.xlu0 %v2878, 16
    %v2880 = vpop.permute.xlu0 %2879
    %v2882 = vmul.f32 %v2875, %v2880
    %2884 = vrot.lane.b32.xlu0 %v2876, 96
    %v2885 = vpop.permute.xlu0 %2884
    %v2887 = vmul.f32 %v2875, %v2885
    %2889 = vrot.lane.b32.xlu0 %v2887, 16
    %v2890 = vpop.permute.xlu0 %2889
    %v2892 = vadd.f32 %v2882, %v2890
    %v2893 = vtanh.pop %v2892
    %2895 = vrot.lane.b32.xlu0 %v2893, 32
    %v2896 = vpop.permute.xlu0 %2895
    %v2898 = vmul.f32 %v2875, %v2896
    %v2900 = vrot.slane %v2787, 4
    %2901 = vrot.lane.b32.xlu0 %v2900, 80
    %v2902 = vpop.permute.xlu0 %2901
    %v2904 = vmul.f32 %v2875, %v2902
    %v2905 = vadd.f32 %v2904, %v2890
    %v2906 = vtanh.pop %v2905
    %2908 = vrot.lane.b32.xlu0 %v2906, 32
    %v2909 = vpop.permute.xlu0 %2908
    %v2911 = vmul.f32 %v2875, %v2909
    %vm2912 = vcmp.gt.s32.totalorder %v2383, 2
    %v2913 = vsel %vm2912, 1, 0
    %v2914 = vcvt.s32.f32 %v2913
    %2916 = vset.pattern.permute.xlu0 0
    %2917 = vperm.xlu0 %2916, %v2914
    %v2918 = vpop.permute.xlu0 %2917
    %v2921 = vrot.slane %v2898, 4
    %2922 = vrot.lane.b32.xlu0 %v2921, 80
    %v2923 = vpop.permute.xlu0 %2922
    %v2925 = vmul.f32 %v2918, %v2923
    %v2926 = vsub.f32 1.0, %v2914
    %2928 = vset.pattern.permute.xlu0 0
    %2929 = vperm.xlu0 %2928, %v2926
    %v2930 = vpop.permute.xlu0 %2929
    %v2932 = vmul.f32 %v2930, %v2740
    %v2933 = vadd.f32 %v2925, %v2932
    %v2935 = vrot.slane %v2892, 4
    %2936 = vrot.lane.b32.xlu0 %v2935, 112
    %v2937 = vpop.permute.xlu0 %2936
    %v2939 = vmul.f32 %v2918, %v2937
    %v2940 = vmul.f32 %v2930, %v2752
    %v2941 = vadd.f32 %v2939, %v2940
    %v2943 = vrot.slane %v2911, 4
    %2944 = vrot.lane.b32.xlu0 %v2943, 16
    %v2945 = vpop.permute.xlu0 %2944
    %v2947 = vmul.f32 %v2918, %v2945
    %v2948 = vmul.f32 %v2930, %v2775
    %v2949 = vadd.f32 %v2947, %v2948
    %v2951 = vrot.slane %v2905, 4
    %2952 = vrot.lane.b32.xlu0 %v2951, 48
    %v2953 = vpop.permute.xlu0 %2952
    %v2955 = vmul.f32 %v2918, %v2953
    %v2956 = vmul.f32 %v2930, %v2787
    %v2957 = vadd.f32 %v2955, %v2956
    %v2958 = vmul.f32 %v2933, %v2918
    %v2959 = vmul.f32 %v2949, %v2918
    %2961 = vrot.lane.b32.xlu0 %v2949, 16
    %v2962 = vpop.permute.xlu0 %2961
    %v2964 = vsel %vm2412, %v2933, %v2962
    %v2966 = vsel %vm431, %v2964, 0
    %2968 = vmatprep.subr.mxu0 0.0
    %2969 = vmatpush1.msra.mxu0 %v2375
    %2970 = vmatprep.subr.mxu0 0.0
    %2971 = vmatpush1.msra.mxu0 %v2376
    %2972 = vmatprep.subr.mxu0 0.0
    %2973 = vmatpush1.msra.mxu0 %v2377
    %2974 = vmatprep.subr.mxu0 0.0
    %2975 = vmatpush1.msra.mxu0 %v2378
    %2976 = vmatprep.subr.mxu0 0.0
    %2977 = vmatpush1.msra.mxu0 0.0
    %2978 = vmatprep.subr.mxu0 0.0
    %2979 = vmatpush1.msra.mxu0 0.0
    %2980 = vmatprep.subr.mxu0 0.0
    %2981 = vmatpush1.msra.mxu0 0.0
    %2982 = vmatprep.subr.mxu0 0.0
    %2983 = vmatpush1.msra.mxu0 0.0
    %2984 = vmatprep.subr.mxu0 0.0
    %2985 = vmatpush1.msra.mxu0 0.0
    %2986 = vmatprep.subr.mxu0 0.0
    %2987 = vmatpush1.msra.mxu0 0.0
    %2988 = vmatprep.subr.mxu0 0.0
    %2989 = vmatpush1.msra.mxu0 0.0
    %2990 = vmatprep.subr.mxu0 0.0
    %2991 = vmatpush1.msra.mxu0 0.0
    %2992 = vmatprep.subr.mxu0 0.0
    %2993 = vmatpush1.msra.mxu0 0.0
    %2994 = vmatprep.subr.mxu0 0.0
    %2995 = vmatpush1.msra.mxu0 0.0
    %2996 = vmatprep.subr.mxu0 0.0
    %2997 = vmatpush1.msra.mxu0 0.0
    %2998 = vmatprep.subr.mxu0 0.0
    %2999 = vmatpush1.msra.mxu0 0.0
    %3000 = vmatprep.subr.mxu0 0.0
    %3001 = vmatpush1.msra.mxu0 0.0
    %3002 = vmatprep.subr.mxu0 0.0
    %3003 = vmatpush1.msra.mxu0 0.0
    %3004 = vmatprep.subr.mxu0 0.0
    %3005 = vmatpush1.msra.mxu0 0.0
    %3006 = vmatprep.subr.mxu0 0.0
    %3007 = vmatpush1.msra.mxu0 0.0
    %3008 = vmatprep.subr.mxu0 0.0
    %3009 = vmatpush1.msra.mxu0 0.0
    %3010 = vmatprep.subr.mxu0 0.0
    %3011 = vmatpush1.msra.mxu0 0.0
    %3012 = vmatprep.subr.mxu0 0.0
    %3013 = vmatpush1.msra.mxu0 0.0
    %3014 = vmatprep.subr.mxu0 0.0
    %3015 = vmatpush1.msra.mxu0 0.0
    %3016 = vmatprep.subr.mxu0 0.0
    %3017 = vmatpush1.msra.mxu0 0.0
    %3018 = vmatprep.subr.mxu0 0.0
    %3019 = vmatpush1.msra.mxu0 0.0
    %3020 = vmatprep.subr.mxu0 0.0
    %3021 = vmatpush1.msra.mxu0 0.0
    %3022 = vmatprep.subr.mxu0 0.0
    %3023 = vmatpush1.msra.mxu0 0.0
    %3024 = vmatprep.subr.mxu0 0.0
    %3025 = vmatpush1.msra.mxu0 0.0
    %3026 = vmatprep.subr.mxu0 0.0
    %3027 = vmatpush1.msra.mxu0 0.0
    %3028 = vmatprep.subr.mxu0 0.0
    %3029 = vmatpush1.msra.mxu0 0.0
    %3030 = vmatprep.subr.mxu0 0.0
    %3031 = vmatpush1.msra.mxu0 0.0
    %3032 = vmatprep.mubr.f32.mxu0 0.0
    %3033 = vmatmul.mubr.f32.gmra.mrb[0].mxu0 %v2966
    %v3034 = vpop.f32.mrb[0].mxu0
    %v3035 = vadd.f32 0.0, %v3034
    %v3036 = vpop.f32.mrb[0].mxu0
    %3037 = vdwg.mxu0
    %v3039 = vrot.slane %v3035, 2
    %v3041 = vadd.f32 %v2598, %v3039
    %v3042 = vmul.f32 %v3041, 0.5
    %v3043 = vtanh.pop %v3042
    %v3044 = vadd.f32 %v3043, 1.0
    %v3045 = vmul.f32 %v3044, 0.5
    %v3046 = vtanh.pop %v3041
    %v3048 = vrot.slane %v2941, 2
    %3049 = vrot.lane.b32.xlu0 %v3048, 16
    %v3050 = vpop.permute.xlu0 %3049
    %v3052 = vmul.f32 %v3045, %v3050
    %3054 = vrot.lane.b32.xlu0 %v3046, 96
    %v3055 = vpop.permute.xlu0 %3054
    %v3057 = vmul.f32 %v3045, %v3055
    %3059 = vrot.lane.b32.xlu0 %v3057, 16
    %v3060 = vpop.permute.xlu0 %3059
    %v3062 = vadd.f32 %v3052, %v3060
    %v3063 = vtanh.pop %v3062
    %3065 = vrot.lane.b32.xlu0 %v3063, 32
    %v3066 = vpop.permute.xlu0 %3065
    %v3068 = vmul.f32 %v3045, %v3066
    %v3070 = vrot.slane %v2957, 2
    %3071 = vrot.lane.b32.xlu0 %v3070, 80
    %v3072 = vpop.permute.xlu0 %3071
    %v3074 = vmul.f32 %v3045, %v3072
    %v3075 = vadd.f32 %v3074, %v3060
    %v3076 = vtanh.pop %v3075
    %3078 = vrot.lane.b32.xlu0 %v3076, 32
    %v3079 = vpop.permute.xlu0 %3078
    %v3081 = vmul.f32 %v3045, %v3079
    %v3083 = vrot.slane %v3068, 6
    %3084 = vrot.lane.b32.xlu0 %v3083, 80
    %v3085 = vpop.permute.xlu0 %3084
    %v3087 = vmul.f32 %v2756, %v3085
    %v3088 = vmul.f32 %v2768, %v2933
    %v3089 = vadd.f32 %v3087, %v3088
    %v3091 = vrot.slane %v3062, 6
    %3092 = vrot.lane.b32.xlu0 %v3091, 112
    %v3093 = vpop.permute.xlu0 %3092
    %v3095 = vmul.f32 %v2756, %v3093
    %v3096 = vmul.f32 %v2768, %v2941
    %v3097 = vadd.f32 %v3095, %v3096
    %v3099 = vrot.slane %v3081, 6
    %3100 = vrot.lane.b32.xlu0 %v3099, 16
    %v3101 = vpop.permute.xlu0 %3100
    %v3103 = vmul.f32 %v2721, %v3101
    %v3104 = vmul.f32 %v2733, %v2949
    %v3105 = vadd.f32 %v3103, %v3104
    %v3107 = vrot.slane %v3075, 6
    %3108 = vrot.lane.b32.xlu0 %v3107, 48
    %v3109 = vpop.permute.xlu0 %3108
    %v3111 = vmul.f32 %v2721, %v3109
    %v3112 = vmul.f32 %v2733, %v2957
    %v3113 = vadd.f32 %v3111, %v3112
    %v3114 = vmul.f32 %v3089, %v2756
    %v3115 = vmul.f32 %v3105, %v2721
    %3117 = vrot.lane.b32.xlu0 %v3105, 16
    %v3118 = vpop.permute.xlu0 %3117
    %v3120 = vsel %vm2412, %v3089, %v3118
    %v3121 = vsel %vm2414, %v2372, %v2367
    %v3123 = vsel %vm431, %v3120, 0
    %3125 = vmatprep.subr.mxu0 0.0
    %3126 = vmatpush1.msra.mxu0 %v2375
    %3127 = vmatprep.subr.mxu0 0.0
    %3128 = vmatpush1.msra.mxu0 %v2376
    %3129 = vmatprep.subr.mxu0 0.0
    %3130 = vmatpush1.msra.mxu0 %v2377
    %3131 = vmatprep.subr.mxu0 0.0
    %3132 = vmatpush1.msra.mxu0 %v2378
    %3133 = vmatprep.subr.mxu0 0.0
    %3134 = vmatpush1.msra.mxu0 0.0
    %3135 = vmatprep.subr.mxu0 0.0
    %3136 = vmatpush1.msra.mxu0 0.0
    %3137 = vmatprep.subr.mxu0 0.0
    %3138 = vmatpush1.msra.mxu0 0.0
    %3139 = vmatprep.subr.mxu0 0.0
    %3140 = vmatpush1.msra.mxu0 0.0
    %3141 = vmatprep.subr.mxu0 0.0
    %3142 = vmatpush1.msra.mxu0 0.0
    %3143 = vmatprep.subr.mxu0 0.0
    %3144 = vmatpush1.msra.mxu0 0.0
    %3145 = vmatprep.subr.mxu0 0.0
    %3146 = vmatpush1.msra.mxu0 0.0
    %3147 = vmatprep.subr.mxu0 0.0
    %3148 = vmatpush1.msra.mxu0 0.0
    %3149 = vmatprep.subr.mxu0 0.0
    %3150 = vmatpush1.msra.mxu0 0.0
    %3151 = vmatprep.subr.mxu0 0.0
    %3152 = vmatpush1.msra.mxu0 0.0
    %3153 = vmatprep.subr.mxu0 0.0
    %3154 = vmatpush1.msra.mxu0 0.0
    %3155 = vmatprep.subr.mxu0 0.0
    %3156 = vmatpush1.msra.mxu0 0.0
    %3157 = vmatprep.subr.mxu0 0.0
    %3158 = vmatpush1.msra.mxu0 0.0
    %3159 = vmatprep.subr.mxu0 0.0
    %3160 = vmatpush1.msra.mxu0 0.0
    %3161 = vmatprep.subr.mxu0 0.0
    %3162 = vmatpush1.msra.mxu0 0.0
    %3163 = vmatprep.subr.mxu0 0.0
    %3164 = vmatpush1.msra.mxu0 0.0
    %3165 = vmatprep.subr.mxu0 0.0
    %3166 = vmatpush1.msra.mxu0 0.0
    %3167 = vmatprep.subr.mxu0 0.0
    %3168 = vmatpush1.msra.mxu0 0.0
    %3169 = vmatprep.subr.mxu0 0.0
    %3170 = vmatpush1.msra.mxu0 0.0
    %3171 = vmatprep.subr.mxu0 0.0
    %3172 = vmatpush1.msra.mxu0 0.0
    %3173 = vmatprep.subr.mxu0 0.0
    %3174 = vmatpush1.msra.mxu0 0.0
    %3175 = vmatprep.subr.mxu0 0.0
    %3176 = vmatpush1.msra.mxu0 0.0
    %3177 = vmatprep.subr.mxu0 0.0
    %3178 = vmatpush1.msra.mxu0 0.0
    %3179 = vmatprep.subr.mxu0 0.0
    %3180 = vmatpush1.msra.mxu0 0.0
    %3181 = vmatprep.subr.mxu0 0.0
    %3182 = vmatpush1.msra.mxu0 0.0
    %3183 = vmatprep.subr.mxu0 0.0
    %3184 = vmatpush1.msra.mxu0 0.0
    %3185 = vmatprep.subr.mxu0 0.0
    %3186 = vmatpush1.msra.mxu0 0.0
    %3187 = vmatprep.subr.mxu0 0.0
    %3188 = vmatpush1.msra.mxu0 0.0
    %3189 = vmatprep.mubr.f32.mxu0 0.0
    %3190 = vmatmul.mubr.f32.gmra.mrb[0].mxu0 %v3123
    %v3191 = vpop.f32.mrb[0].mxu0
    %v3192 = vadd.f32 0.0, %v3191
    %v3193 = vpop.f32.mrb[0].mxu0
    %3194 = vdwg.mxu0
    %v3195 = vadd.f32 %v3121, %v3192
    %v3196 = vmul.f32 %v3195, 0.5
    %v3197 = vtanh.pop %v3196
    %v3198 = vadd.f32 %v3197, 1.0
    %v3199 = vmul.f32 %v3198, 0.5
    %v3200 = vtanh.pop %v3195
    %3202 = vrot.lane.b32.xlu0 %v3097, 16
    %v3203 = vpop.permute.xlu0 %3202
    %v3205 = vmul.f32 %v3199, %v3203
    %3207 = vrot.lane.b32.xlu0 %v3200, 96
    %v3208 = vpop.permute.xlu0 %3207
    %v3210 = vmul.f32 %v3199, %v3208
    %3212 = vrot.lane.b32.xlu0 %v3210, 16
    %v3213 = vpop.permute.xlu0 %3212
    %v3215 = vadd.f32 %v3205, %v3213
    %v3216 = vtanh.pop %v3215
    %3218 = vrot.lane.b32.xlu0 %v3216, 32
    %v3219 = vpop.permute.xlu0 %3218
    %v3221 = vmul.f32 %v3199, %v3219
    %3223 = vrot.lane.b32.xlu0 %v3113, 80
    %v3224 = vpop.permute.xlu0 %3223
    %v3226 = vmul.f32 %v3199, %v3224
    %v3227 = vadd.f32 %v3226, %v3213
    %v3228 = vtanh.pop %v3227
    %3230 = vrot.lane.b32.xlu0 %v3228, 32
    %v3231 = vpop.permute.xlu0 %3230
    %v3233 = vmul.f32 %v3199, %v3231
    %v3234 = vmul.f32 %v2562, %v3221
    %v3235 = vmul.f32 %v2569, %v3089
    %3237 = vrot.lane.b32.xlu0 %v3235, 48
    %v3238 = vpop.permute.xlu0 %3237
    %v3240 = vadd.f32 %v3234, %v3238
    %v3241 = vmul.f32 %v2537, %v3233
    %v3242 = vmul.f32 %v2544, %v3105
    %3244 = vrot.lane.b32.xlu0 %v3242, 112
    %v3245 = vpop.permute.xlu0 %3244
    %v3247 = vadd.f32 %v3241, %v3245
    %v3248 = vmul.f32 %v3240, %v2562
    %v3249 = vmul.f32 %v3247, %v2537
    %3251 = vrot.lane.b32.xlu0 %v2584, 80
    %v3252 = vpop.permute.xlu0 %3251
    %3255 = vrot.lane.b32.xlu0 %v3249, 32
    %v3256 = vpop.permute.xlu0 %3255
    %v3258 = vsel %vm2412, %v3252, %v3256
    %3260 = vrot.lane.b32.xlu0 %v3115, 16
    %v3261 = vpop.permute.xlu0 %3260
    %v3263 = vsel %vm2412, %v2788, %v3261
    %3265 = vrot.lane.b32.xlu0 %v2959, 16
    %v3266 = vpop.permute.xlu0 %3265
    %v3268 = vsel %vm2412, %v2958, %v3266
    %3270 = vrot.lane.b32.xlu0 %v2789, 16
    %v3271 = vpop.permute.xlu0 %3270
    %v3273 = vsel %vm2412, %v3114, %v3271
    %3275 = vrot.lane.b32.xlu0 %v3248, 80
    %v3276 = vpop.permute.xlu0 %3275
    %3279 = vrot.lane.b32.xlu0 %v2585, 32
    %v3280 = vpop.permute.xlu0 %3279
    %v3282 = vsel %vm2412, %v3276, %v3280
    %v3284 = vrot.slane %v3263, 6
    %v3287 = vrot.slane %v3268, 4
    %v3290 = vrot.slane %v3273, 2
    %v3292 = vsel %vm2041, %v3258, %v3284
    %v3293 = vsel %vm249, %v3292, %v3287
    %v3294 = vsel %vm749, %v3293, %v3290
    %3295 = vst.msk [vmem:[#allocation2] sm:$0xff] %vm431, %v3294
    %vm3296 = vcmask 254976
    %3297 = vst.msk [vmem:[#allocation2 + $0x8] sm:$0x3] %vm3296, %v3282
    %v3298 = vld [vmem:[%s17] sm:$0x1]
    %s3299 = sld [smem:[#allocation6]]
    %s3300 = smul.u32 %s3299, 2
    %s3301 = scalar_lea.vmem [#allocation2], %s3300
    %v3302 = vld [vmem:[%s3301] sm:$0x1]
    %s3303 = sld [smem:[#allocation6 + $0x3]]
    %s3304 = smul.u32 %s3303, 2
    %s3305 = sadd.s32 %s3304, 1
    %s3306 = scalar_lea.vmem [#allocation2], %s3305
    %v3307 = vld [vmem:[%s3306] sm:$0x1]
    %s3308 = sld [smem:[#allocation6 + $0x1]]
    %s3309 = smul.u32 %s3308, 2
    %s3310 = scalar_lea.vmem [#allocation2], %s3309
    %v3311 = vld [vmem:[%s3310] sm:$0x1]
    %s3312 = sld [smem:[#allocation6 + $0x4]]
    %s3313 = smul.u32 %s3312, 2
    %s3314 = sadd.s32 %s3313, 1
    %s3315 = scalar_lea.vmem [#allocation2], %s3314
    %v3316 = vld [vmem:[%s3315] sm:$0x1]
    %s3317 = sld [smem:[#allocation6 + $0x2]]
    %s3318 = smul.u32 %s3317, 2
    %s3319 = scalar_lea.vmem [#allocation2], %s3318
    %v3320 = vld [vmem:[%s3319] sm:$0x1]
    %s3321 = sld [smem:[#allocation6 + $0x5]]
    %s3322 = smul.u32 %s3321, 2
    %s3323 = sadd.s32 %s3322, 1
    %s3324 = scalar_lea.vmem [#allocation2], %s3323
    %v3325 = vld [vmem:[%s3324] sm:$0x1]
    %v3327 = vlaneseq
    %v3328 = vshrl.u32 %v3327, 7
    %v3329 = vsub.s32 0, %v3328
    %v3330 = vrot.slane %v3298, %v3329
    %v3333 = vrot.slane %v3302, 6
    %v3336 = vrot.slane %v3307, 5
    %v3339 = vrot.slane %v3311, 4
    %v3342 = vrot.slane %v3316, 3
    %v3345 = vrot.slane %v3320, 2
    %v3348 = vrot.slane %v3325, 1
    %v3350 = vsel %vm2162, %v3298, %v3330
    %v3351 = vsel %vm2041, %v3350, %v3333
    %v3352 = vsel %vm1385, %v3351, %v3336
    %v3353 = vsel %vm249, %v3352, %v3339
    %v3354 = vsel %vm949, %v3353, %v3342
    %v3355 = vsel %vm749, %v3354, %v3345
    %v3356 = vsel %vm405, %v3355, %v3348
    %v3357 = vld [vmem:[%s12] sm:$0xff]
    %v3358 = vld [vmem:[%s12 + $0x8] sm:$0xff]
    %v3359 = vld [vmem:[%s12 + $0x10] sm:$0xff]
    %v3360 = vld [vmem:[%s12 + $0x18] sm:$0xff]
    %v3361 = vld [vmem:[%s14] sm:$0x1]
    %v3363 = vlaneseq
    %v3364 = vshrl.u32 %v3363, 7
    %v3365 = vsub.s32 0, %v3364
    %v3366 = vrot.slane %v3361, %v3365
    %v3369 = vsel %vm431, %v3356, 0
    %3371 = vmatprep.subr.mxu0 0.0
    %3372 = vmatpush1.msra.mxu0 %v3357
    %3373 = vmatprep.subr.mxu0 0.0
    %3374 = vmatpush1.msra.mxu0 %v3358
    %3375 = vmatprep.subr.mxu0 0.0
    %3376 = vmatpush1.msra.mxu0 %v3359
    %3377 = vmatprep.subr.mxu0 0.0
    %3378 = vmatpush1.msra.mxu0 %v3360
    %3379 = vmatprep.subr.mxu0 0.0
    %3380 = vmatpush1.msra.mxu0 0.0
    %3381 = vmatprep.subr.mxu0 0.0
    %3382 = vmatpush1.msra.mxu0 0.0
    %3383 = vmatprep.subr.mxu0 0.0
    %3384 = vmatpush1.msra.mxu0 0.0
    %3385 = vmatprep.subr.mxu0 0.0
    %3386 = vmatpush1.msra.mxu0 0.0
    %3387 = vmatprep.subr.mxu0 0.0
    %3388 = vmatpush1.msra.mxu0 0.0
    %3389 = vmatprep.subr.mxu0 0.0
    %3390 = vmatpush1.msra.mxu0 0.0
    %3391 = vmatprep.subr.mxu0 0.0
    %3392 = vmatpush1.msra.mxu0 0.0
    %3393 = vmatprep.subr.mxu0 0.0
    %3394 = vmatpush1.msra.mxu0 0.0
    %3395 = vmatprep.subr.mxu0 0.0
    %3396 = vmatpush1.msra.mxu0 0.0
    %3397 = vmatprep.subr.mxu0 0.0
    %3398 = vmatpush1.msra.mxu0 0.0
    %3399 = vmatprep.subr.mxu0 0.0
    %3400 = vmatpush1.msra.mxu0 0.0
    %3401 = vmatprep.subr.mxu0 0.0
    %3402 = vmatpush1.msra.mxu0 0.0
    %3403 = vmatprep.subr.mxu0 0.0
    %3404 = vmatpush1.msra.mxu0 0.0
    %3405 = vmatprep.subr.mxu0 0.0
    %3406 = vmatpush1.msra.mxu0 0.0
    %3407 = vmatprep.subr.mxu0 0.0
    %3408 = vmatpush1.msra.mxu0 0.0
    %3409 = vmatprep.subr.mxu0 0.0
    %3410 = vmatpush1.msra.mxu0 0.0
    %3411 = vmatprep.subr.mxu0 0.0
    %3412 = vmatpush1.msra.mxu0 0.0
    %3413 = vmatprep.subr.mxu0 0.0
    %3414 = vmatpush1.msra.mxu0 0.0
    %3415 = vmatprep.subr.mxu0 0.0
    %3416 = vmatpush1.msra.mxu0 0.0
    %3417 = vmatprep.subr.mxu0 0.0
    %3418 = vmatpush1.msra.mxu0 0.0
    %3419 = vmatprep.subr.mxu0 0.0
    %3420 = vmatpush1.msra.mxu0 0.0
    %3421 = vmatprep.subr.mxu0 0.0
    %3422 = vmatpush1.msra.mxu0 0.0
    %3423 = vmatprep.subr.mxu0 0.0
    %3424 = vmatpush1.msra.mxu0 0.0
    %3425 = vmatprep.subr.mxu0 0.0
    %3426 = vmatpush1.msra.mxu0 0.0
    %3427 = vmatprep.subr.mxu0 0.0
    %3428 = vmatpush1.msra.mxu0 0.0
    %3429 = vmatprep.subr.mxu0 0.0
    %3430 = vmatpush1.msra.mxu0 0.0
    %3431 = vmatprep.subr.mxu0 0.0
    %3432 = vmatpush1.msra.mxu0 0.0
    %3433 = vmatprep.subr.mxu0 0.0
    %3434 = vmatpush1.msra.mxu0 0.0
    %3435 = vmatprep.mubr.f32.mxu0 0.0
    %3436 = vmatmul.mubr.f32.gmra.mrb[0].mxu0 %v3369
    %v3437 = vpop.f32.mrb[0].mxu0
    %v3438 = vadd.f32 %v3366, %v3437
    %v3439 = vpop.f32.mrb[0].mxu0
    %3440 = vdwg.mxu0
    %v3441 = vld [vmem:[%s13] sm:$0xff]
    %v3442 = vld [vmem:[%s13 + $0x8] sm:$0xff]
    %v3443 = vld [vmem:[%s15] sm:$0x1]
    %v3445 = vlaneseq
    %v3446 = vshrl.u32 %v3445, 7
    %v3447 = vsub.s32 0, %v3446
    %v3448 = vrot.slane %v3443, %v3447
    %v3450 = vadd.f32 %v3448, 0.0
    %v3451 = vld [vmem:[%s16] sm:$0x1]
    %v3453 = vlaneseq
    %v3454 = vshrl.u32 %v3453, 7
    %v3455 = vsub.s32 0, %v3454
    %v3456 = vrot.slane %v3451, %v3455
    %v3458 = vadd.f32 %v3456, 0.0
    %v3460 = vsel %vm2412, %v3450, 0
    %3462 = vmatprep.subr.mxu0 0.0
    %3463 = vmatpush1.msra.mxu0 %v3441
    %3464 = vmatprep.subr.mxu0 0.0
    %3465 = vmatpush1.msra.mxu0 %v3442
    %3466 = vmatprep.subr.mxu0 0.0
    %3467 = vmatpush1.msra.mxu0 0.0
    %3468 = vmatprep.subr.mxu0 0.0
    %3469 = vmatpush1.msra.mxu0 0.0
    %3470 = vmatprep.subr.mxu0 0.0
    %3471 = vmatpush1.msra.mxu0 0.0
    %3472 = vmatprep.subr.mxu0 0.0
    %3473 = vmatpush1.msra.mxu0 0.0
    %3474 = vmatprep.subr.mxu0 0.0
    %3475 = vmatpush1.msra.mxu0 0.0
    %3476 = vmatprep.subr.mxu0 0.0
    %3477 = vmatpush1.msra.mxu0 0.0
    %3478 = vmatprep.subr.mxu0 0.0
    %3479 = vmatpush1.msra.mxu0 0.0
    %3480 = vmatprep.subr.mxu0 0.0
    %3481 = vmatpush1.msra.mxu0 0.0
    %3482 = vmatprep.subr.mxu0 0.0
    %3483 = vmatpush1.msra.mxu0 0.0
    %3484 = vmatprep.subr.mxu0 0.0
    %3485 = vmatpush1.msra.mxu0 0.0
    %3486 = vmatprep.subr.mxu0 0.0
    %3487 = vmatpush1.msra.mxu0 0.0
    %3488 = vmatprep.subr.mxu0 0.0
    %3489 = vmatpush1.msra.mxu0 0.0
    %3490 = vmatprep.subr.mxu0 0.0
    %3491 = vmatpush1.msra.mxu0 0.0
    %3492 = vmatprep.subr.mxu0 0.0
    %3493 = vmatpush1.msra.mxu0 0.0
    %3494 = vmatprep.subr.mxu0 0.0
    %3495 = vmatpush1.msra.mxu0 0.0
    %3496 = vmatprep.subr.mxu0 0.0
    %3497 = vmatpush1.msra.mxu0 0.0
    %3498 = vmatprep.subr.mxu0 0.0
    %3499 = vmatpush1.msra.mxu0 0.0
    %3500 = vmatprep.subr.mxu0 0.0
    %3501 = vmatpush1.msra.mxu0 0.0
    %3502 = vmatprep.subr.mxu0 0.0
    %3503 = vmatpush1.msra.mxu0 0.0
    %3504 = vmatprep.subr.mxu0 0.0
    %3505 = vmatpush1.msra.mxu0 0.0
    %3506 = vmatprep.subr.mxu0 0.0
    %3507 = vmatpush1.msra.mxu0 0.0
    %3508 = vmatprep.subr.mxu0 0.0
    %3509 = vmatpush1.msra.mxu0 0.0
    %3510 = vmatprep.subr.mxu0 0.0
    %3511 = vmatpush1.msra.mxu0 0.0
    %3512 = vmatprep.subr.mxu0 0.0
    %3513 = vmatpush1.msra.mxu0 0.0
    %3514 = vmatprep.subr.mxu0 0.0
    %3515 = vmatpush1.msra.mxu0 0.0
    %3516 = vmatprep.subr.mxu0 0.0
    %3517 = vmatpush1.msra.mxu0 0.0
    %3518 = vmatprep.subr.mxu0 0.0
    %3519 = vmatpush1.msra.mxu0 0.0
    %3520 = vmatprep.subr.mxu0 0.0
    %3521 = vmatpush1.msra.mxu0 0.0
    %3522 = vmatprep.subr.mxu0 0.0
    %3523 = vmatpush1.msra.mxu0 0.0
    %3524 = vmatprep.subr.mxu0 0.0
    %3525 = vmatpush1.msra.mxu0 0.0
    %3526 = vmatprep.mubr.f32.mxu0 0.0
    %3527 = vmatmul.mubr.f32.gmra.mrb[0].mxu0 %v3460
    %v3528 = vpop.f32.mrb[0].mxu0
    %v3529 = vadd.f32 0.0, %v3528
    %v3530 = vpop.f32.mrb[0].mxu0
    %3531 = vdwg.mxu0
    %v3532 = vadd.f32 %v3438, %v3529
    %v3533 = vmul.f32 %v3532, 0.5
    %v3534 = vtanh.pop %v3533
    %v3535 = vadd.f32 %v3534, 1.0
    %v3536 = vmul.f32 %v3535, 0.5
    %3538 = vrot.lane.b32.xlu0 %v3458, 16
    %v3539 = vpop.permute.xlu0 %3538
    %v3541 = vmul.f32 %v3536, %v3539
    %v3542 = vtanh.pop %v3532
    %3544 = vrot.lane.b32.xlu0 %v3542, 96
    %v3545 = vpop.permute.xlu0 %3544
    %v3547 = vmul.f32 %v3536, %v3545
    %3549 = vrot.lane.b32.xlu0 %v3547, 16
    %v3550 = vpop.permute.xlu0 %3549
    %v3552 = vadd.f32 %v3541, %v3550
    %v3553 = vtanh.pop %v3552
    %3555 = vrot.lane.b32.xlu0 %v3553, 32
    %v3556 = vpop.permute.xlu0 %3555
    %v3558 = vmul.f32 %v3536, %v3556
    %3560 = vrot.lane.b32.xlu0 %v3558, 80
    %v3561 = vpop.permute.xlu0 %3560
    %v3562 = vsel %vm2412, %v3561, 0
    %3564 = vmatprep.subr.mxu0 0.0
    %3565 = vmatpush1.msra.mxu0 %v3441
    %3566 = vmatprep.subr.mxu0 0.0
    %3567 = vmatpush1.msra.mxu0 %v3442
    %3568 = vmatprep.subr.mxu0 0.0
    %3569 = vmatpush1.msra.mxu0 0.0
    %3570 = vmatprep.subr.mxu0 0.0
    %3571 = vmatpush1.msra.mxu0 0.0
    %3572 = vmatprep.subr.mxu0 0.0
    %3573 = vmatpush1.msra.mxu0 0.0
    %3574 = vmatprep.subr.mxu0 0.0
    %3575 = vmatpush1.msra.mxu0 0.0
    %3576 = vmatprep.subr.mxu0 0.0
    %3577 = vmatpush1.msra.mxu0 0.0
    %3578 = vmatprep.subr.mxu0 0.0
    %3579 = vmatpush1.msra.mxu0 0.0
    %3580 = vmatprep.subr.mxu0 0.0
    %3581 = vmatpush1.msra.mxu0 0.0
    %3582 = vmatprep.subr.mxu0 0.0
    %3583 = vmatpush1.msra.mxu0 0.0
    %3584 = vmatprep.subr.mxu0 0.0
    %3585 = vmatpush1.msra.mxu0 0.0
    %3586 = vmatprep.subr.mxu0 0.0
    %3587 = vmatpush1.msra.mxu0 0.0
    %3588 = vmatprep.subr.mxu0 0.0
    %3589 = vmatpush1.msra.mxu0 0.0
    %3590 = vmatprep.subr.mxu0 0.0
    %3591 = vmatpush1.msra.mxu0 0.0
    %3592 = vmatprep.subr.mxu0 0.0
    %3593 = vmatpush1.msra.mxu0 0.0
    %3594 = vmatprep.subr.mxu0 0.0
    %3595 = vmatpush1.msra.mxu0 0.0
    %3596 = vmatprep.subr.mxu0 0.0
    %3597 = vmatpush1.msra.mxu0 0.0
    %3598 = vmatprep.subr.mxu0 0.0
    %3599 = vmatpush1.msra.mxu0 0.0
    %3600 = vmatprep.subr.mxu0 0.0
    %3601 = vmatpush1.msra.mxu0 0.0
    %3602 = vmatprep.subr.mxu0 0.0
    %3603 = vmatpush1.msra.mxu0 0.0
    %3604 = vmatprep.subr.mxu0 0.0
    %3605 = vmatpush1.msra.mxu0 0.0
    %3606 = vmatprep.subr.mxu0 0.0
    %3607 = vmatpush1.msra.mxu0 0.0
    %3608 = vmatprep.subr.mxu0 0.0
    %3609 = vmatpush1.msra.mxu0 0.0
    %3610 = vmatprep.subr.mxu0 0.0
    %3611 = vmatpush1.msra.mxu0 0.0
    %3612 = vmatprep.subr.mxu0 0.0
    %3613 = vmatpush1.msra.mxu0 0.0
    %3614 = vmatprep.subr.mxu0 0.0
    %3615 = vmatpush1.msra.mxu0 0.0
    %3616 = vmatprep.subr.mxu0 0.0
    %3617 = vmatpush1.msra.mxu0 0.0
    %3618 = vmatprep.subr.mxu0 0.0
    %3619 = vmatpush1.msra.mxu0 0.0
    %3620 = vmatprep.subr.mxu0 0.0
    %3621 = vmatpush1.msra.mxu0 0.0
    %3622 = vmatprep.subr.mxu0 0.0
    %3623 = vmatpush1.msra.mxu0 0.0
    %3624 = vmatprep.subr.mxu0 0.0
    %3625 = vmatpush1.msra.mxu0 0.0
    %3626 = vmatprep.subr.mxu0 0.0
    %3627 = vmatpush1.msra.mxu0 0.0
    %3628 = vmatprep.mubr.f32.mxu0 0.0
    %3629 = vmatmul.mubr.f32.gmra.mrb[0].mxu0 %v3562
    %v3630 = vpop.f32.mrb[0].mxu0
    %v3631 = vadd.f32 0.0, %v3630
    %v3632 = vpop.f32.mrb[0].mxu0
    %3633 = vdwg.mxu0
    %v3635 = vrot.slane %v3631, 6
    %v3637 = vadd.f32 %v3438, %v3635
    %v3638 = vmul.f32 %v3637, 0.5
    %v3639 = vtanh.pop %v3638
    %v3640 = vadd.f32 %v3639, 1.0
    %v3641 = vmul.f32 %v3640, 0.5
    %v3643 = vrot.slane %v3552, 6
    %v3645 = vmul.f32 %v3641, %v3643
    %v3646 = vtanh.pop %v3637
    %3648 = vrot.lane.b32.xlu0 %v3646, 96
    %v3649 = vpop.permute.xlu0 %3648
    %v3651 = vmul.f32 %v3641, %v3649
    %3653 = vrot.lane.b32.xlu0 %v3651, 16
    %v3654 = vpop.permute.xlu0 %3653
    %v3656 = vadd.f32 %v3645, %v3654
    %v3657 = vtanh.pop %v3656
    %3659 = vrot.lane.b32.xlu0 %v3657, 32
    %v3660 = vpop.permute.xlu0 %3659
    %v3662 = vmul.f32 %v3641, %v3660
    %v3664 = vrot.slane %v3662, 2
    %3665 = vrot.lane.b32.xlu0 %v3664, 80
    %v3666 = vpop.permute.xlu0 %3665
    %v3667 = vsel %vm2412, %v3666, 0
    %3669 = vmatprep.subr.mxu0 0.0
    %3670 = vmatpush1.msra.mxu0 %v3441
    %3671 = vmatprep.subr.mxu0 0.0
    %3672 = vmatpush1.msra.mxu0 %v3442
    %3673 = vmatprep.subr.mxu0 0.0
    %3674 = vmatpush1.msra.mxu0 0.0
    %3675 = vmatprep.subr.mxu0 0.0
    %3676 = vmatpush1.msra.mxu0 0.0
    %3677 = vmatprep.subr.mxu0 0.0
    %3678 = vmatpush1.msra.mxu0 0.0
    %3679 = vmatprep.subr.mxu0 0.0
    %3680 = vmatpush1.msra.mxu0 0.0
    %3681 = vmatprep.subr.mxu0 0.0
    %3682 = vmatpush1.msra.mxu0 0.0
    %3683 = vmatprep.subr.mxu0 0.0
    %3684 = vmatpush1.msra.mxu0 0.0
    %3685 = vmatprep.subr.mxu0 0.0
    %3686 = vmatpush1.msra.mxu0 0.0
    %3687 = vmatprep.subr.mxu0 0.0
    %3688 = vmatpush1.msra.mxu0 0.0
    %3689 = vmatprep.subr.mxu0 0.0
    %3690 = vmatpush1.msra.mxu0 0.0
    %3691 = vmatprep.subr.mxu0 0.0
    %3692 = vmatpush1.msra.mxu0 0.0
    %3693 = vmatprep.subr.mxu0 0.0
    %3694 = vmatpush1.msra.mxu0 0.0
    %3695 = vmatprep.subr.mxu0 0.0
    %3696 = vmatpush1.msra.mxu0 0.0
    %3697 = vmatprep.subr.mxu0 0.0
    %3698 = vmatpush1.msra.mxu0 0.0
    %3699 = vmatprep.subr.mxu0 0.0
    %3700 = vmatpush1.msra.mxu0 0.0
    %3701 = vmatprep.subr.mxu0 0.0
    %3702 = vmatpush1.msra.mxu0 0.0
    %3703 = vmatprep.subr.mxu0 0.0
    %3704 = vmatpush1.msra.mxu0 0.0
    %3705 = vmatprep.subr.mxu0 0.0
    %3706 = vmatpush1.msra.mxu0 0.0
    %3707 = vmatprep.subr.mxu0 0.0
    %3708 = vmatpush1.msra.mxu0 0.0
    %3709 = vmatprep.subr.mxu0 0.0
    %3710 = vmatpush1.msra.mxu0 0.0
    %3711 = vmatprep.subr.mxu0 0.0
    %3712 = vmatpush1.msra.mxu0 0.0
    %3713 = vmatprep.subr.mxu0 0.0
    %3714 = vmatpush1.msra.mxu0 0.0
    %3715 = vmatprep.subr.mxu0 0.0
    %3716 = vmatpush1.msra.mxu0 0.0
    %3717 = vmatprep.subr.mxu0 0.0
    %3718 = vmatpush1.msra.mxu0 0.0
    %3719 = vmatprep.subr.mxu0 0.0
    %3720 = vmatpush1.msra.mxu0 0.0
    %3721 = vmatprep.subr.mxu0 0.0
    %3722 = vmatpush1.msra.mxu0 0.0
    %3723 = vmatprep.subr.mxu0 0.0
    %3724 = vmatpush1.msra.mxu0 0.0
    %3725 = vmatprep.subr.mxu0 0.0
    %3726 = vmatpush1.msra.mxu0 0.0
    %3727 = vmatprep.subr.mxu0 0.0
    %3728 = vmatpush1.msra.mxu0 0.0
    %3729 = vmatprep.subr.mxu0 0.0
    %3730 = vmatpush1.msra.mxu0 0.0
    %3731 = vmatprep.subr.mxu0 0.0
    %3732 = vmatpush1.msra.mxu0 0.0
    %3733 = vmatprep.mubr.f32.mxu0 0.0
    %3734 = vmatmul.mubr.f32.gmra.mrb[0].mxu0 %v3667
    %v3735 = vpop.f32.mrb[0].mxu0
    %v3736 = vadd.f32 0.0, %v3735
    %v3737 = vpop.f32.mrb[0].mxu0
    %3738 = vdwg.mxu0
    %v3740 = vrot.slane %v3736, 4
    %v3742 = vadd.f32 %v3438, %v3740
    %v3743 = vmul.f32 %v3742, 0.5
    %v3744 = vtanh.pop %v3743
    %v3745 = vadd.f32 %v3744, 1.0
    %v3746 = vmul.f32 %v3745, 0.5
    %v3748 = vrot.slane %v3656, 6
    %v3750 = vmul.f32 %v3746, %v3748
    %v3751 = vtanh.pop %v3742
    %3753 = vrot.lane.b32.xlu0 %v3751, 96
    %v3754 = vpop.permute.xlu0 %3753
    %v3756 = vmul.f32 %v3746, %v3754
    %3758 = vrot.lane.b32.xlu0 %v3756, 16
    %v3759 = vpop.permute.xlu0 %3758
    %v3761 = vadd.f32 %v3750, %v3759
    %v3762 = vtanh.pop %v3761
    %3764 = vrot.lane.b32.xlu0 %v3762, 32
    %v3765 = vpop.permute.xlu0 %3764
    %v3767 = vmul.f32 %v3746, %v3765
    %v3769 = vrot.slane %v3767, 4
    %3770 = vrot.lane.b32.xlu0 %v3769, 80
    %v3771 = vpop.permute.xlu0 %3770
    %v3772 = vsel %vm2412, %v3771, 0
    %3774 = vmatprep.subr.mxu0 0.0
    %3775 = vmatpush1.msra.mxu0 %v3441
    %3776 = vmatprep.subr.mxu0 0.0
    %3777 = vmatpush1.msra.mxu0 %v3442
    %3778 = vmatprep.subr.mxu0 0.0
    %3779 = vmatpush1.msra.mxu0 0.0
    %3780 = vmatprep.subr.mxu0 0.0
    %3781 = vmatpush1.msra.mxu0 0.0
    %3782 = vmatprep.subr.mxu0 0.0
    %3783 = vmatpush1.msra.mxu0 0.0
    %3784 = vmatprep.subr.mxu0 0.0
    %3785 = vmatpush1.msra.mxu0 0.0
    %3786 = vmatprep.subr.mxu0 0.0
    %3787 = vmatpush1.msra.mxu0 0.0
    %3788 = vmatprep.subr.mxu0 0.0
    %3789 = vmatpush1.msra.mxu0 0.0
    %3790 = vmatprep.subr.mxu0 0.0
    %3791 = vmatpush1.msra.mxu0 0.0
    %3792 = vmatprep.subr.mxu0 0.0
    %3793 = vmatpush1.msra.mxu0 0.0
    %3794 = vmatprep.subr.mxu0 0.0
    %3795 = vmatpush1.msra.mxu0 0.0
    %3796 = vmatprep.subr.mxu0 0.0
    %3797 = vmatpush1.msra.mxu0 0.0
    %3798 = vmatprep.subr.mxu0 0.0
    %3799 = vmatpush1.msra.mxu0 0.0
    %3800 = vmatprep.subr.mxu0 0.0
    %3801 = vmatpush1.msra.mxu0 0.0
    %3802 = vmatprep.subr.mxu0 0.0
    %3803 = vmatpush1.msra.mxu0 0.0
    %3804 = vmatprep.subr.mxu0 0.0
    %3805 = vmatpush1.msra.mxu0 0.0
    %3806 = vmatprep.subr.mxu0 0.0
    %3807 = vmatpush1.msra.mxu0 0.0
    %3808 = vmatprep.subr.mxu0 0.0
    %3809 = vmatpush1.msra.mxu0 0.0
    %3810 = vmatprep.subr.mxu0 0.0
    %3811 = vmatpush1.msra.mxu0 0.0
    %3812 = vmatprep.subr.mxu0 0.0
    %3813 = vmatpush1.msra.mxu0 0.0
    %3814 = vmatprep.subr.mxu0 0.0
    %3815 = vmatpush1.msra.mxu0 0.0
    %3816 = vmatprep.subr.mxu0 0.0
    %3817 = vmatpush1.msra.mxu0 0.0
    %3818 = vmatprep.subr.mxu0 0.0
    %3819 = vmatpush1.msra.mxu0 0.0
    %3820 = vmatprep.subr.mxu0 0.0
    %3821 = vmatpush1.msra.mxu0 0.0
    %3822 = vmatprep.subr.mxu0 0.0
    %3823 = vmatpush1.msra.mxu0 0.0
    %3824 = vmatprep.subr.mxu0 0.0
    %3825 = vmatpush1.msra.mxu0 0.0
    %3826 = vmatprep.subr.mxu0 0.0
    %3827 = vmatpush1.msra.mxu0 0.0
    %3828 = vmatprep.subr.mxu0 0.0
    %3829 = vmatpush1.msra.mxu0 0.0
    %3830 = vmatprep.subr.mxu0 0.0
    %3831 = vmatpush1.msra.mxu0 0.0
    %3832 = vmatprep.subr.mxu0 0.0
    %3833 = vmatpush1.msra.mxu0 0.0
    %3834 = vmatprep.subr.mxu0 0.0
    %3835 = vmatpush1.msra.mxu0 0.0
    %3836 = vmatprep.subr.mxu0 0.0
    %3837 = vmatpush1.msra.mxu0 0.0
    %3838 = vmatprep.mubr.f32.mxu0 0.0
    %3839 = vmatmul.mubr.f32.gmra.mrb[0].mxu0 %v3772
    %v3840 = vpop.f32.mrb[0].mxu0
    %v3841 = vadd.f32 0.0, %v3840
    %v3842 = vpop.f32.mrb[0].mxu0
    %3843 = vdwg.mxu0
    %v3845 = vrot.slane %v3841, 2
    %v3847 = vadd.f32 %v3438, %v3845
    %v3848 = vmul.f32 %v3847, 0.5
    %v3849 = vtanh.pop %v3848
    %v3850 = vadd.f32 %v3849, 1.0
    %v3851 = vmul.f32 %v3850, 0.5
    %v3853 = vrot.slane %v3761, 6
    %v3855 = vmul.f32 %v3851, %v3853
    %v3856 = vtanh.pop %v3847
    %3858 = vrot.lane.b32.xlu0 %v3856, 96
    %v3859 = vpop.permute.xlu0 %3858
    %v3861 = vmul.f32 %v3851, %v3859
    %3863 = vrot.lane.b32.xlu0 %v3861, 16
    %v3864 = vpop.permute.xlu0 %3863
    %v3866 = vadd.f32 %v3855, %v3864
    %v3867 = vtanh.pop %v3866
    %3869 = vrot.lane.b32.xlu0 %v3867, 32
    %v3870 = vpop.permute.xlu0 %3869
    %v3872 = vmul.f32 %v3851, %v3870
    %v3874 = vrot.slane %v3294, 1
    %v3876 = vrot.slane %v3294, 2
    %v3878 = vrot.slane %v3294, 3
    %v3881 = vrot.slane %v3282, 4
    %v3883 = vrot.slane %v3294, 4
    %v3885 = vrot.slane %v3294, 5
    %v3887 = vrot.slane %v3294, 6
    %v3889 = vrot.slane %v3294, 7
    %v3891 = vsel %vm2162, %v3294, %v3874
    %v3892 = vsel %vm2041, %v3891, %v3876
    %v3893 = vsel %vm1385, %v3892, %v3878
    %v3894 = vsel %vm249, %v3893, %v3881
    %v3895 = vsel %vm949, %v3894, %v3883
    %v3896 = vsel %vm749, %v3895, %v3885
    %v3897 = vsel %vm405, %v3896, %v3887
    %v3898 = vsel %vm2162, %v3889, %v3282
    %v3899 = vld [vmem:[%s18] sm:$0xff]
    %v3900 = vld [vmem:[%s18 + $0x8] sm:$0xff]
    %v3901 = vld [vmem:[%s18 + $0x10] sm:$0xff]
    %v3902 = vld [vmem:[%s18 + $0x18] sm:$0xff]
    %v3904 = vsel %vm431, %v3897, 0
    %v3907 = vsel %vm431, %v3898, 0
    %3909 = vmatprep.subr.mxu0 0.0
    %3910 = vmatpush1.msra.mxu0 %v3899
    %3911 = vmatprep.subr.mxu0 0.0
    %3912 = vmatpush1.msra.mxu0 %v3900
    %3913 = vmatprep.subr.mxu0 0.0
    %3914 = vmatpush1.msra.mxu0 %v3901
    %3915 = vmatprep.subr.mxu0 0.0
    %3916 = vmatpush1.msra.mxu0 %v3902
    %3917 = vmatprep.subr.mxu0 0.0
    %3918 = vmatpush1.msra.mxu0 0.0
    %3919 = vmatprep.subr.mxu0 0.0
    %3920 = vmatpush1.msra.mxu0 0.0
    %3921 = vmatprep.subr.mxu0 0.0
    %3922 = vmatpush1.msra.mxu0 0.0
    %3923 = vmatprep.subr.mxu0 0.0
    %3924 = vmatpush1.msra.mxu0 0.0
    %3925 = vmatprep.subr.mxu0 0.0
    %3926 = vmatpush1.msra.mxu0 0.0
    %3927 = vmatprep.subr.mxu0 0.0
    %3928 = vmatpush1.msra.mxu0 0.0
    %3929 = vmatprep.subr.mxu0 0.0
    %3930 = vmatpush1.msra.mxu0 0.0
    %3931 = vmatprep.subr.mxu0 0.0
    %3932 = vmatpush1.msra.mxu0 0.0
    %3933 = vmatprep.subr.mxu0 0.0
    %3934 = vmatpush1.msra.mxu0 0.0
    %3935 = vmatprep.subr.mxu0 0.0
    %3936 = vmatpush1.msra.mxu0 0.0
    %3937 = vmatprep.subr.mxu0 0.0
    %3938 = vmatpush1.msra.mxu0 0.0
    %3939 = vmatprep.subr.mxu0 0.0
    %3940 = vmatpush1.msra.mxu0 0.0
    %3941 = vmatprep.subr.mxu0 0.0
    %3942 = vmatpush1.msra.mxu0 0.0
    %3943 = vmatprep.subr.mxu0 0.0
    %3944 = vmatpush1.msra.mxu0 0.0
    %3945 = vmatprep.subr.mxu0 0.0
    %3946 = vmatpush1.msra.mxu0 0.0
    %3947 = vmatprep.subr.mxu0 0.0
    %3948 = vmatpush1.msra.mxu0 0.0
    %3949 = vmatprep.subr.mxu0 0.0
    %3950 = vmatpush1.msra.mxu0 0.0
    %3951 = vmatprep.subr.mxu0 0.0
    %3952 = vmatpush1.msra.mxu0 0.0
    %3953 = vmatprep.subr.mxu0 0.0
    %3954 = vmatpush1.msra.mxu0 0.0
    %3955 = vmatprep.subr.mxu0 0.0
    %3956 = vmatpush1.msra.mxu0 0.0
    %3957 = vmatprep.subr.mxu0 0.0
    %3958 = vmatpush1.msra.mxu0 0.0
    %3959 = vmatprep.subr.mxu0 0.0
    %3960 = vmatpush1.msra.mxu0 0.0
    %3961 = vmatprep.subr.mxu0 0.0
    %3962 = vmatpush1.msra.mxu0 0.0
    %3963 = vmatprep.subr.mxu0 0.0
    %3964 = vmatpush1.msra.mxu0 0.0
    %3965 = vmatprep.subr.mxu0 0.0
    %3966 = vmatpush1.msra.mxu0 0.0
    %3967 = vmatprep.subr.mxu0 0.0
    %3968 = vmatpush1.msra.mxu0 0.0
    %3969 = vmatprep.subr.mxu0 0.0
    %3970 = vmatpush1.msra.mxu0 0.0
    %3971 = vmatprep.subr.mxu0 0.0
    %3972 = vmatpush1.msra.mxu0 0.0
    %3973 = vmatprep.mubr.f32.mxu0 0.0
    %3974 = vmatmul.mubr.f32.gmra.mrb[0].mxu0 %v3904
    %v3975 = vpop.f32.mrb[0].mxu0
    %v3976 = vadd.f32 0.0, %v3975
    %v3977 = vpop.f32.mrb[0].mxu0
    %3978 = vmatprep.mubr.f32.mxu0 0.0
    %3979 = vmatmul.mubr.f32.gmra.mrb[0].mxu0 %v3907
    %v3980 = vpop.f32.mrb[0].mxu0
    %v3981 = vadd.f32 0.0, %v3980
    %v3982 = vpop.f32.mrb[0].mxu0
    %3983 = vdwg.mxu0
    %v3984 = vld [vmem:[%s21] sm:$0xff]
    %v3985 = vld [vmem:[%s21 + $0x8] sm:$0xff]
    %v3986 = vld [vmem:[%s21 + $0x10] sm:$0xff]
    %v3987 = vld [vmem:[%s21 + $0x18] sm:$0xff]
    %3988 = vmatprep.subr.mxu0 0.0
    %3989 = vmatpush1.msra.mxu0 %v3984
    %3990 = vmatprep.subr.mxu0 0.0
    %3991 = vmatpush1.msra.mxu0 %v3985
    %3992 = vmatprep.subr.mxu0 0.0
    %3993 = vmatpush1.msra.mxu0 %v3986
    %3994 = vmatprep.subr.mxu0 0.0
    %3995 = vmatpush1.msra.mxu0 %v3987
    %3996 = vmatprep.subr.mxu0 0.0
    %3997 = vmatpush1.msra.mxu0 0.0
    %3998 = vmatprep.subr.mxu0 0.0
    %3999 = vmatpush1.msra.mxu0 0.0
    %4000 = vmatprep.subr.mxu0 0.0
    %4001 = vmatpush1.msra.mxu0 0.0
    %4002 = vmatprep.subr.mxu0 0.0
    %4003 = vmatpush1.msra.mxu0 0.0
    %4004 = vmatprep.subr.mxu0 0.0
    %4005 = vmatpush1.msra.mxu0 0.0
    %4006 = vmatprep.subr.mxu0 0.0
    %4007 = vmatpush1.msra.mxu0 0.0
    %4008 = vmatprep.subr.mxu0 0.0
    %4009 = vmatpush1.msra.mxu0 0.0
    %4010 = vmatprep.subr.mxu0 0.0
    %4011 = vmatpush1.msra.mxu0 0.0
    %4012 = vmatprep.subr.mxu0 0.0
    %4013 = vmatpush1.msra.mxu0 0.0
    %4014 = vmatprep.subr.mxu0 0.0
    %4015 = vmatpush1.msra.mxu0 0.0
    %4016 = vmatprep.subr.mxu0 0.0
    %4017 = vmatpush1.msra.mxu0 0.0
    %4018 = vmatprep.subr.mxu0 0.0
    %4019 = vmatpush1.msra.mxu0 0.0
    %4020 = vmatprep.subr.mxu0 0.0
    %4021 = vmatpush1.msra.mxu0 0.0
    %4022 = vmatprep.subr.mxu0 0.0
    %4023 = vmatpush1.msra.mxu0 0.0
    %4024 = vmatprep.subr.mxu0 0.0
    %4025 = vmatpush1.msra.mxu0 0.0
    %4026 = vmatprep.subr.mxu0 0.0
    %4027 = vmatpush1.msra.mxu0 0.0
    %4028 = vmatprep.subr.mxu0 0.0
    %4029 = vmatpush1.msra.mxu0 0.0
    %4030 = vmatprep.subr.mxu0 0.0
    %4031 = vmatpush1.msra.mxu0 0.0
    %4032 = vmatprep.subr.mxu0 0.0
    %4033 = vmatpush1.msra.mxu0 0.0
    %4034 = vmatprep.subr.mxu0 0.0
    %4035 = vmatpush1.msra.mxu0 0.0
    %4036 = vmatprep.subr.mxu0 0.0
    %4037 = vmatpush1.msra.mxu0 0.0
    %4038 = vmatprep.subr.mxu0 0.0
    %4039 = vmatpush1.msra.mxu0 0.0
    %4040 = vmatprep.subr.mxu0 0.0
    %4041 = vmatpush1.msra.mxu0 0.0
    %4042 = vmatprep.subr.mxu0 0.0
    %4043 = vmatpush1.msra.mxu0 0.0
    %4044 = vmatprep.subr.mxu0 0.0
    %4045 = vmatpush1.msra.mxu0 0.0
    %4046 = vmatprep.subr.mxu0 0.0
    %4047 = vmatpush1.msra.mxu0 0.0
    %4048 = vmatprep.subr.mxu0 0.0
    %4049 = vmatpush1.msra.mxu0 0.0
    %4050 = vmatprep.subr.mxu0 0.0
    %4051 = vmatpush1.msra.mxu0 0.0
    %4052 = vmatprep.mubr.f32.mxu0 0.0
    %4053 = vmatmul.mubr.f32.gmra.mrb[0].mxu0 %v3904
    %v4054 = vpop.f32.mrb[0].mxu0
    %v4055 = vadd.f32 0.0, %v4054
    %v4056 = vpop.f32.mrb[0].mxu0
    %4057 = vmatprep.mubr.f32.mxu0 0.0
    %4058 = vmatmul.mubr.f32.gmra.mrb[0].mxu0 %v3907
    %v4059 = vpop.f32.mrb[0].mxu0
    %v4060 = vadd.f32 0.0, %v4059
    %v4061 = vpop.f32.mrb[0].mxu0
    %4062 = vdwg.mxu0
    %v4063 = vld [vmem:[%s20] sm:$0x1]
    %v4064 = vld [vmem:[%s23] sm:$0x1]
    %v4065 = vrot.slane %v3662, 1
    %v4067 = vrot.slane %v3767, 2
    %v4070 = vrot.slane %v3872, 3
    %v4072 = vsel %vm2162, %v3558, %v4065
    %v4073 = vsel %vm2041, %v4072, %v4067
    %v4074 = vsel %vm1385, %v4073, %v4070
    %s4075 = sld [smem:[#allocation3]]
    %v4076 = vstv %s4075
    %vm4077 = vcmp.lt.s32.totalorder %v117, %v4076
    %v4078 = vld [vmem:[%s22] sm:$0xff]
    %v4079 = vld [vmem:[%s22 + $0x8] sm:$0xff]
    %4081 = vrot.lane.b32.xlu0 %v4074, 80
    %v4082 = vpop.permute.xlu0 %4081
    %v4083 = vsel %vm2412, %v4082, 0
    %4085 = vmatprep.subr.mxu0 0.0
    %4086 = vmatpush1.msra.mxu0 %v4078
    %4087 = vmatprep.subr.mxu0 0.0
    %4088 = vmatpush1.msra.mxu0 %v4079
    %4089 = vmatprep.subr.mxu0 0.0
    %4090 = vmatpush1.msra.mxu0 0.0
    %4091 = vmatprep.subr.mxu0 0.0
    %4092 = vmatpush1.msra.mxu0 0.0
    %4093 = vmatprep.subr.mxu0 0.0
    %4094 = vmatpush1.msra.mxu0 0.0
    %4095 = vmatprep.subr.mxu0 0.0
    %4096 = vmatpush1.msra.mxu0 0.0
    %4097 = vmatprep.subr.mxu0 0.0
    %4098 = vmatpush1.msra.mxu0 0.0
    %4099 = vmatprep.subr.mxu0 0.0
    %4100 = vmatpush1.msra.mxu0 0.0
    %4101 = vmatprep.subr.mxu0 0.0
    %4102 = vmatpush1.msra.mxu0 0.0
    %4103 = vmatprep.subr.mxu0 0.0
    %4104 = vmatpush1.msra.mxu0 0.0
    %4105 = vmatprep.subr.mxu0 0.0
    %4106 = vmatpush1.msra.mxu0 0.0
    %4107 = vmatprep.subr.mxu0 0.0
    %4108 = vmatpush1.msra.mxu0 0.0
    %4109 = vmatprep.subr.mxu0 0.0
    %4110 = vmatpush1.msra.mxu0 0.0
    %4111 = vmatprep.subr.mxu0 0.0
    %4112 = vmatpush1.msra.mxu0 0.0
    %4113 = vmatprep.subr.mxu0 0.0
    %4114 = vmatpush1.msra.mxu0 0.0
    %4115 = vmatprep.subr.mxu0 0.0
    %4116 = vmatpush1.msra.mxu0 0.0
    %4117 = vmatprep.subr.mxu0 0.0
    %4118 = vmatpush1.msra.mxu0 0.0
    %4119 = vmatprep.subr.mxu0 0.0
    %4120 = vmatpush1.msra.mxu0 0.0
    %4121 = vmatprep.subr.mxu0 0.0
    %4122 = vmatpush1.msra.mxu0 0.0
    %4123 = vmatprep.subr.mxu0 0.0
    %4124 = vmatpush1.msra.mxu0 0.0
    %4125 = vmatprep.subr.mxu0 0.0
    %4126 = vmatpush1.msra.mxu0 0.0
    %4127 = vmatprep.subr.mxu0 0.0
    %4128 = vmatpush1.msra.mxu0 0.0
    %4129 = vmatprep.subr.mxu0 0.0
    %4130 = vmatpush1.msra.mxu0 0.0
    %4131 = vmatprep.subr.mxu0 0.0
    %4132 = vmatpush1.msra.mxu0 0.0
    %4133 = vmatprep.subr.mxu0 0.0
    %4134 = vmatpush1.msra.mxu0 0.0
    %4135 = vmatprep.subr.mxu0 0.0
    %4136 = vmatpush1.msra.mxu0 0.0
    %4137 = vmatprep.subr.mxu0 0.0
    %4138 = vmatpush1.msra.mxu0 0.0
    %4139 = vmatprep.subr.mxu0 0.0
    %4140 = vmatpush1.msra.mxu0 0.0
    %4141 = vmatprep.subr.mxu0 0.0
    %4142 = vmatpush1.msra.mxu0 0.0
    %4143 = vmatprep.subr.mxu0 0.0
    %4144 = vmatpush1.msra.mxu0 0.0
    %4145 = vmatprep.subr.mxu0 0.0
    %4146 = vmatpush1.msra.mxu0 0.0
    %4147 = vmatprep.subr.mxu0 0.0
    %4148 = vmatpush1.msra.mxu0 0.0
    %4149 = vmatprep.mubr.f32.mxu0 0.0
    %4150 = vmatmul.mubr.f32.gmra.mrb[0].mxu0 %v4083
    %v4151 = vpop.f32.mrb[0].mxu0
    %v4152 = vadd.f32 0.0, %v4151
    %v4153 = vpop.f32.mrb[0].mxu0
    %4154 = vdwg.mxu0
    %v4157 = vunpack.c.l.s4 1966171168
    %v4158 = vunpack.c.0.s8 %v4157
    %v4159 = vlaneseq
    %v4160 = vshrl.u32 %v4159, 7
    %v4161 = vsub.s32 %v4158, %v4160
    %v4162 = vrot.slane %v4152, %v4161
    %v4163 = vcombine.high %v4162, %v4162
    %v4165 = vunpack.c.l.s4 1966171168
    %v4166 = vunpack.c.0.s8 %v4165
    %v4167 = vlaneseq
    %v4168 = vshrl.u32 %v4167, 7
    %v4169 = vsub.s32 %v4166, %v4168
    %v4170 = vrot.slane %v4162, %v4169
    %v4172 = vunpack.c.l.s4 1966171168
    %v4173 = vunpack.c.0.s8 %v4172
    %v4174 = vlaneseq
    %v4175 = vshrl.u32 %v4174, 7
    %v4176 = vsub.s32 %v4173, %v4175
    %v4177 = vrot.slane %v4163, %v4176
    %v4178 = vcombine.high %v4170, %v4170
    %v4179 = vcombine.high %v4177, %v4177
    %v4180 = vlaneseq
    %v4181 = vshrl.u32 %v4180, 7
    %v4182 = vsub.s32 0, %v4181
    %v4183 = vrot.slane %v4170, %v4182
    %v4184 = vlaneseq
    %v4185 = vshrl.u32 %v4184, 7
    %v4186 = vsub.s32 0, %v4185
    %v4187 = vrot.slane %v4177, %v4186
    %v4188 = vlaneseq
    %v4189 = vshrl.u32 %v4188, 7
    %v4190 = vsub.s32 0, %v4189
    %v4191 = vrot.slane %v4178, %v4190
    %v4192 = vlaneseq
    %v4193 = vshrl.u32 %v4192, 7
    %v4194 = vsub.s32 0, %v4193
    %v4195 = vrot.slane %v4179, %v4194
    %v4200 = vadd.f32 %v4183, %v4055
    %v4201 = vadd.f32 %v4187, %v4055
    %v4202 = vadd.f32 %v4191, %v4055
    %v4203 = vadd.f32 %v4195, %v4055
    %v4204 = vtanh.pop %v4200
    %v4205 = vtanh.pop %v4201
    %v4206 = vtanh.pop %v4202
    %v4207 = vtanh.pop %v4203
    %v4209 = vlaneseq
    %v4210 = vshrl.u32 %v4209, 7
    %v4211 = vsub.s32 0, %v4210
    %v4212 = vrot.slane %v4064, %v4211
    %v4214 = vmul.f32 %v4204, %v4212
    %v4215 = vmul.f32 %v4205, %v4212
    %v4216 = vmul.f32 %v4206, %v4212
    %v4217 = vmul.f32 %v4207, %v4212
    %vm4218 = vcmask 126976
    %v4219 = vsel %vm4218, %v4214, 0.0
    %4220 = vadd.xlane.f32.xlu0 %v4219
    %v4221 = vpop.xlane.xlu0 %4220
    %v4222 = vsel %vm4218, %v4215, 0.0
    %4223 = vadd.xlane.f32.xlu0 %v4222
    %v4224 = vpop.xlane.xlu0 %4223
    %v4225 = vsel %vm4218, %v4216, 0.0
    %4226 = vadd.xlane.f32.xlu0 %v4225
    %v4227 = vpop.xlane.xlu0 %4226
    %v4228 = vsel %vm4218, %v4217, 0.0
    %4229 = vadd.xlane.f32.xlu0 %v4228
    %v4230 = vpop.xlane.xlu0 %4229
    %v4235 = vlaneseq
    %v4236 = vshrl.u32 %v4235, 7
    %v4237 = vsub.s32 %v117, %v4236
    %v4238 = vrot.slane %v4221, %v4237
    %v4239 = vlaneseq
    %v4240 = vshrl.u32 %v4239, 7
    %v4241 = vsub.s32 %v117, %v4240
    %v4242 = vrot.slane %v4224, %v4241
    %v4243 = vlaneseq
    %v4244 = vshrl.u32 %v4243, 7
    %v4245 = vsub.s32 %v117, %v4244
    %v4246 = vrot.slane %v4227, %v4245
    %v4247 = vlaneseq
    %v4248 = vshrl.u32 %v4247, 7
    %v4249 = vsub.s32 %v117, %v4248
    %v4250 = vrot.slane %v4230, %v4249
    %vm4251 = vcmask 1041409
    %v4252 = vsel %vm4251, %v4242, %v4238
    %vm4253 = vcmask 1042434
    %v4254 = vsel %vm4253, %v4246, %v4252
    %vm4255 = vcmask 1043459
    %v4256 = vsel %vm4255, %v4250, %v4254
    %v4258 = vsel %vm4077, %v4256, -1e+18
    %vm4259 = vcmask 35840
    %v4260 = vsel %vm4259, %v4258, -inf
    %4261 = vmax.xlane.f32.xlu0 %v4260
    %v4262 = vpop.xlane.xlu0 %4261
    %v4263 = vsub.f32 %v4258, %v4262
    %v4264 = vmul.f32 %v4263, 1.442695
    %v4265 = vpow.pop %v4264
    %v4266 = vsel %vm4259, %v4265, 0.0
    %4267 = vadd.xlane.f32.xlu0 %v4266
    %v4268 = vpop.xlane.xlu0 %4267
    %v4269 = vrcp.pop %v4268
    %v4270 = vmul.f32 %v4265, %v4269
    %vm4271 = vcmask 39936
    %v4273 = vsel %vm4271, %v4270, 0
    %v4276 = vsel %vm949, %v4055, 0
    %4278 = vmatprep.subr.mxu0 0.0
    %4279 = vmatpush1.msra.mxu0 %v4276
    %4280 = vmatprep.subr.mxu0 0.0
    %4281 = vmatpush1.msra.mxu0 0.0
    %4282 = vmatprep.subr.mxu0 0.0
    %4283 = vmatpush1.msra.mxu0 0.0
    %4284 = vmatprep.subr.mxu0 0.0
    %4285 = vmatpush1.msra.mxu0 0.0
    %4286 = vmatprep.subr.mxu0 0.0
    %4287 = vmatpush1.msra.mxu0 0.0
    %4288 = vmatprep.subr.mxu0 0.0
    %4289 = vmatpush1.msra.mxu0 0.0
    %4290 = vmatprep.subr.mxu0 0.0
    %4291 = vmatpush1.msra.mxu0 0.0
    %4292 = vmatprep.subr.mxu0 0.0
    %4293 = vmatpush1.msra.mxu0 0.0
    %4294 = vmatprep.subr.mxu0 0.0
    %4295 = vmatpush1.msra.mxu0 0.0
    %4296 = vmatprep.subr.mxu0 0.0
    %4297 = vmatpush1.msra.mxu0 0.0
    %4298 = vmatprep.subr.mxu0 0.0
    %4299 = vmatpush1.msra.mxu0 0.0
    %4300 = vmatprep.subr.mxu0 0.0
    %4301 = vmatpush1.msra.mxu0 0.0
    %4302 = vmatprep.subr.mxu0 0.0
    %4303 = vmatpush1.msra.mxu0 0.0
    %4304 = vmatprep.subr.mxu0 0.0
    %4305 = vmatpush1.msra.mxu0 0.0
    %4306 = vmatprep.subr.mxu0 0.0
    %4307 = vmatpush1.msra.mxu0 0.0
    %4308 = vmatprep.subr.mxu0 0.0
    %4309 = vmatpush1.msra.mxu0 0.0
    %4310 = vmatprep.subr.mxu0 0.0
    %4311 = vmatpush1.msra.mxu0 0.0
    %4312 = vmatprep.subr.mxu0 0.0
    %4313 = vmatpush1.msra.mxu0 0.0
    %4314 = vmatprep.subr.mxu0 0.0
    %4315 = vmatpush1.msra.mxu0 0.0
    %4316 = vmatprep.subr.mxu0 0.0
    %4317 = vmatpush1.msra.mxu0 0.0
    %4318 = vmatprep.subr.mxu0 0.0
    %4319 = vmatpush1.msra.mxu0 0.0
    %4320 = vmatprep.subr.mxu0 0.0
    %4321 = vmatpush1.msra.mxu0 0.0
    %4322 = vmatprep.subr.mxu0 0.0
    %4323 = vmatpush1.msra.mxu0 0.0
    %4324 = vmatprep.subr.mxu0 0.0
    %4325 = vmatpush1.msra.mxu0 0.0
    %4326 = vmatprep.subr.mxu0 0.0
    %4327 = vmatpush1.msra.mxu0 0.0
    %4328 = vmatprep.subr.mxu0 0.0
    %4329 = vmatpush1.msra.mxu0 0.0
    %4330 = vmatprep.subr.mxu0 0.0
    %4331 = vmatpush1.msra.mxu0 0.0
    %4332 = vmatprep.subr.mxu0 0.0
    %4333 = vmatpush1.msra.mxu0 0.0
    %4334 = vmatprep.subr.mxu0 0.0
    %4335 = vmatpush1.msra.mxu0 0.0
    %4336 = vmatprep.subr.mxu0 0.0
    %4337 = vmatpush1.msra.mxu0 0.0
    %4338 = vmatprep.subr.mxu0 0.0
    %4339 = vmatpush1.msra.mxu0 0.0
    %4340 = vmatprep.subr.mxu0 0.0
    %4341 = vmatpush1.msra.mxu0 0.0
    %4342 = vmatprep.mubr.f32.mxu0 0.0
    %4343 = vmatmul.mubr.f32.gmra.mrb[0].mxu0 %v4273
    %v4344 = vpop.f32.mrb[0].mxu0
    %v4345 = vadd.f32 0.0, %v4344
    %v4346 = vpop.f32.mrb[0].mxu0
    %4347 = vdwg.mxu0
    %v4348 = vld [vmem:[%s19] sm:$0xff]
    %v4349 = vld [vmem:[%s19 + $0x8] sm:$0xff]
    %v4351 = vsel %vm2412, %v4345, 0
    %4353 = vmatprep.subr.mxu0 0.0
    %4354 = vmatpush1.msra.mxu0 %v4348
    %4355 = vmatprep.subr.mxu0 0.0
    %4356 = vmatpush1.msra.mxu0 %v4349
    %4357 = vmatprep.subr.mxu0 0.0
    %4358 = vmatpush1.msra.mxu0 0.0
    %4359 = vmatprep.subr.mxu0 0.0
    %4360 = vmatpush1.msra.mxu0 0.0
    %4361 = vmatprep.subr.mxu0 0.0
    %4362 = vmatpush1.msra.mxu0 0.0
    %4363 = vmatprep.subr.mxu0 0.0
    %4364 = vmatpush1.msra.mxu0 0.0
    %4365 = vmatprep.subr.mxu0 0.0
    %4366 = vmatpush1.msra.mxu0 0.0
    %4367 = vmatprep.subr.mxu0 0.0
    %4368 = vmatpush1.msra.mxu0 0.0
    %4369 = vmatprep.subr.mxu0 0.0
    %4370 = vmatpush1.msra.mxu0 0.0
    %4371 = vmatprep.subr.mxu0 0.0
    %4372 = vmatpush1.msra.mxu0 0.0
    %4373 = vmatprep.subr.mxu0 0.0
    %4374 = vmatpush1.msra.mxu0 0.0
    %4375 = vmatprep.subr.mxu0 0.0
    %4376 = vmatpush1.msra.mxu0 0.0
    %4377 = vmatprep.subr.mxu0 0.0
    %4378 = vmatpush1.msra.mxu0 0.0
    %4379 = vmatprep.subr.mxu0 0.0
    %4380 = vmatpush1.msra.mxu0 0.0
    %4381 = vmatprep.subr.mxu0 0.0
    %4382 = vmatpush1.msra.mxu0 0.0
    %4383 = vmatprep.subr.mxu0 0.0
    %4384 = vmatpush1.msra.mxu0 0.0
    %4385 = vmatprep.subr.mxu0 0.0
    %4386 = vmatpush1.msra.mxu0 0.0
    %4387 = vmatprep.subr.mxu0 0.0
    %4388 = vmatpush1.msra.mxu0 0.0
    %4389 = vmatprep.subr.mxu0 0.0
    %4390 = vmatpush1.msra.mxu0 0.0
    %4391 = vmatprep.subr.mxu0 0.0
    %4392 = vmatpush1.msra.mxu0 0.0
    %4393 = vmatprep.subr.mxu0 0.0
    %4394 = vmatpush1.msra.mxu0 0.0
    %4395 = vmatprep.subr.mxu0 0.0
    %4396 = vmatpush1.msra.mxu0 0.0
    %4397 = vmatprep.subr.mxu0 0.0
    %4398 = vmatpush1.msra.mxu0 0.0
    %4399 = vmatprep.subr.mxu0 0.0
    %4400 = vmatpush1.msra.mxu0 0.0
    %4401 = vmatprep.subr.mxu0 0.0
    %4402 = vmatpush1.msra.mxu0 0.0
    %4403 = vmatprep.subr.mxu0 0.0
    %4404 = vmatpush1.msra.mxu0 0.0
    %4405 = vmatprep.subr.mxu0 0.0
    %4406 = vmatpush1.msra.mxu0 0.0
    %4407 = vmatprep.subr.mxu0 0.0
    %4408 = vmatpush1.msra.mxu0 0.0
    %4409 = vmatprep.subr.mxu0 0.0
    %4410 = vmatpush1.msra.mxu0 0.0
    %4411 = vmatprep.subr.mxu0 0.0
    %4412 = vmatpush1.msra.mxu0 0.0
    %4413 = vmatprep.subr.mxu0 0.0
    %4414 = vmatpush1.msra.mxu0 0.0
    %4415 = vmatprep.subr.mxu0 0.0
    %4416 = vmatpush1.msra.mxu0 0.0
    %4417 = vmatprep.mubr.f32.mxu0 0.0
    %4418 = vmatmul.mubr.f32.gmra.mrb[0].mxu0 %v4351
    %v4419 = vpop.f32.mrb[0].mxu0
    %v4420 = vadd.f32 0.0, %v4419
    %v4421 = vpop.f32.mrb[0].mxu0
    %4422 = vdwg.mxu0
    %v4425 = vunpack.c.l.s4 1966171168
    %v4426 = vunpack.c.0.s8 %v4425
    %v4427 = vlaneseq
    %v4428 = vshrl.u32 %v4427, 7
    %v4429 = vsub.s32 %v4426, %v4428
    %v4430 = vrot.slane %v4420, %v4429
    %v4431 = vcombine.high %v4430, %v4430
    %v4433 = vunpack.c.l.s4 1966171168
    %v4434 = vunpack.c.0.s8 %v4433
    %v4435 = vlaneseq
    %v4436 = vshrl.u32 %v4435, 7
    %v4437 = vsub.s32 %v4434, %v4436
    %v4438 = vrot.slane %v4430, %v4437
    %v4440 = vunpack.c.l.s4 1966171168
    %v4441 = vunpack.c.0.s8 %v4440
    %v4442 = vlaneseq
    %v4443 = vshrl.u32 %v4442, 7
    %v4444 = vsub.s32 %v4441, %v4443
    %v4445 = vrot.slane %v4431, %v4444
    %v4446 = vcombine.high %v4438, %v4438
    %v4447 = vcombine.high %v4445, %v4445
    %v4448 = vlaneseq
    %v4449 = vshrl.u32 %v4448, 7
    %v4450 = vsub.s32 0, %v4449
    %v4451 = vrot.slane %v4438, %v4450
    %v4452 = vlaneseq
    %v4453 = vshrl.u32 %v4452, 7
    %v4454 = vsub.s32 0, %v4453
    %v4455 = vrot.slane %v4445, %v4454
    %v4456 = vlaneseq
    %v4457 = vshrl.u32 %v4456, 7
    %v4458 = vsub.s32 0, %v4457
    %v4459 = vrot.slane %v4446, %v4458
    %v4460 = vlaneseq
    %v4461 = vshrl.u32 %v4460, 7
    %v4462 = vsub.s32 0, %v4461
    %v4463 = vrot.slane %v4447, %v4462
    %v4468 = vadd.f32 %v4451, %v3976
    %v4469 = vadd.f32 %v4455, %v3976
    %v4470 = vadd.f32 %v4459, %v3976
    %v4471 = vadd.f32 %v4463, %v3976
    %v4472 = vtanh.pop %v4468
    %v4473 = vtanh.pop %v4469
    %v4474 = vtanh.pop %v4470
    %v4475 = vtanh.pop %v4471
    %v4477 = vlaneseq
    %v4478 = vshrl.u32 %v4477, 7
    %v4479 = vsub.s32 0, %v4478
    %v4480 = vrot.slane %v4063, %v4479
    %v4482 = vmul.f32 %v4472, %v4480
    %v4483 = vmul.f32 %v4473, %v4480
    %v4484 = vmul.f32 %v4474, %v4480
    %v4485 = vmul.f32 %v4475, %v4480
    %v4486 = vsel %vm4218, %v4482, 0.0
    %4487 = vadd.xlane.f32.xlu0 %v4486
    %v4488 = vpop.xlane.xlu0 %4487
    %v4489 = vsel %vm4218, %v4483, 0.0
    %4490 = vadd.xlane.f32.xlu0 %v4489
    %v4491 = vpop.xlane.xlu0 %4490
    %v4492 = vsel %vm4218, %v4484, 0.0
    %4493 = vadd.xlane.f32.xlu0 %v4492
    %v4494 = vpop.xlane.xlu0 %4493
    %v4495 = vsel %vm4218, %v4485, 0.0
    %4496 = vadd.xlane.f32.xlu0 %v4495
    %v4497 = vpop.xlane.xlu0 %4496
    %v4498 = vrot.slane %v3558, 1
    %v4501 = vrot.slane %v3767, 3
    %v4503 = vrot.slane %v3872, 4
    %v4505 = vsel %vm2162, %v4498, %v3664
    %v4506 = vsel %vm2041, %v4505, %v4501
    %v4507 = vsel %vm1385, %v4506, %v4503
    %s4508 = sld [smem:[#allocation3 + $0x1]]
    %v4509 = vstv %s4508
    %vm4510 = vcmp.lt.s32.totalorder %v117, %v4509
    %4512 = vrot.lane.b32.xlu0 %v4507, 80
    %v4513 = vpop.permute.xlu0 %4512
    %v4514 = vsel %vm2412, %v4513, 0
    %4516 = vmatprep.subr.mxu0 0.0
    %4517 = vmatpush1.msra.mxu0 %v4078
    %4518 = vmatprep.subr.mxu0 0.0
    %4519 = vmatpush1.msra.mxu0 %v4079
    %4520 = vmatprep.subr.mxu0 0.0
    %4521 = vmatpush1.msra.mxu0 0.0
    %4522 = vmatprep.subr.mxu0 0.0
    %4523 = vmatpush1.msra.mxu0 0.0
    %4524 = vmatprep.subr.mxu0 0.0
    %4525 = vmatpush1.msra.mxu0 0.0
    %4526 = vmatprep.subr.mxu0 0.0
    %4527 = vmatpush1.msra.mxu0 0.0
    %4528 = vmatprep.subr.mxu0 0.0
    %4529 = vmatpush1.msra.mxu0 0.0
    %4530 = vmatprep.subr.mxu0 0.0
    %4531 = vmatpush1.msra.mxu0 0.0
    %4532 = vmatprep.subr.mxu0 0.0
    %4533 = vmatpush1.msra.mxu0 0.0
    %4534 = vmatprep.subr.mxu0 0.0
    %4535 = vmatpush1.msra.mxu0 0.0
    %4536 = vmatprep.subr.mxu0 0.0
    %4537 = vmatpush1.msra.mxu0 0.0
    %4538 = vmatprep.subr.mxu0 0.0
    %4539 = vmatpush1.msra.mxu0 0.0
    %4540 = vmatprep.subr.mxu0 0.0
    %4541 = vmatpush1.msra.mxu0 0.0
    %4542 = vmatprep.subr.mxu0 0.0
    %4543 = vmatpush1.msra.mxu0 0.0
    %4544 = vmatprep.subr.mxu0 0.0
    %4545 = vmatpush1.msra.mxu0 0.0
    %4546 = vmatprep.subr.mxu0 0.0
    %4547 = vmatpush1.msra.mxu0 0.0
    %4548 = vmatprep.subr.mxu0 0.0
    %4549 = vmatpush1.msra.mxu0 0.0
    %4550 = vmatprep.subr.mxu0 0.0
    %4551 = vmatpush1.msra.mxu0 0.0
    %4552 = vmatprep.subr.mxu0 0.0
    %4553 = vmatpush1.msra.mxu0 0.0
    %4554 = vmatprep.subr.mxu0 0.0
    %4555 = vmatpush1.msra.mxu0 0.0
    %4556 = vmatprep.subr.mxu0 0.0
    %4557 = vmatpush1.msra.mxu0 0.0
    %4558 = vmatprep.subr.mxu0 0.0
    %4559 = vmatpush1.msra.mxu0 0.0
    %4560 = vmatprep.subr.mxu0 0.0
    %4561 = vmatpush1.msra.mxu0 0.0
    %4562 = vmatprep.subr.mxu0 0.0
    %4563 = vmatpush1.msra.mxu0 0.0
    %4564 = vmatprep.subr.mxu0 0.0
    %4565 = vmatpush1.msra.mxu0 0.0
    %4566 = vmatprep.subr.mxu0 0.0
    %4567 = vmatpush1.msra.mxu0 0.0
    %4568 = vmatprep.subr.mxu0 0.0
    %4569 = vmatpush1.msra.mxu0 0.0
    %4570 = vmatprep.subr.mxu0 0.0
    %4571 = vmatpush1.msra.mxu0 0.0
    %4572 = vmatprep.subr.mxu0 0.0
    %4573 = vmatpush1.msra.mxu0 0.0
    %4574 = vmatprep.subr.mxu0 0.0
    %4575 = vmatpush1.msra.mxu0 0.0
    %4576 = vmatprep.subr.mxu0 0.0
    %4577 = vmatpush1.msra.mxu0 0.0
    %4578 = vmatprep.subr.mxu0 0.0
    %4579 = vmatpush1.msra.mxu0 0.0
    %4580 = vmatprep.mubr.f32.mxu0 0.0
    %4581 = vmatmul.mubr.f32.gmra.mrb[0].mxu0 %v4514
    %v4582 = vpop.f32.mrb[0].mxu0
    %v4583 = vadd.f32 0.0, %v4582
    %v4584 = vpop.f32.mrb[0].mxu0
    %4585 = vdwg.mxu0
    %v4588 = vunpack.c.l.s4 1966171168
    %v4589 = vunpack.c.0.s8 %v4588
    %v4590 = vlaneseq
    %v4591 = vshrl.u32 %v4590, 7
    %v4592 = vsub.s32 %v4589, %v4591
    %v4593 = vrot.slane %v4583, %v4592
    %v4594 = vcombine.high %v4593, %v4593
    %v4596 = vunpack.c.l.s4 1966171168
    %v4597 = vunpack.c.0.s8 %v4596
    %v4598 = vlaneseq
    %v4599 = vshrl.u32 %v4598, 7
    %v4600 = vsub.s32 %v4597, %v4599
    %v4601 = vrot.slane %v4593, %v4600
    %v4603 = vunpack.c.l.s4 1966171168
    %v4604 = vunpack.c.0.s8 %v4603
    %v4605 = vlaneseq
    %v4606 = vshrl.u32 %v4605, 7
    %v4607 = vsub.s32 %v4604, %v4606
    %v4608 = vrot.slane %v4594, %v4607
    %v4609 = vcombine.high %v4601, %v4601
    %v4610 = vcombine.high %v4608, %v4608
    %v4611 = vlaneseq
    %v4612 = vshrl.u32 %v4611, 7
    %v4613 = vsub.s32 0, %v4612
    %v4614 = vrot.slane %v4601, %v4613
    %v4615 = vlaneseq
    %v4616 = vshrl.u32 %v4615, 7
    %v4617 = vsub.s32 0, %v4616
    %v4618 = vrot.slane %v4608, %v4617
    %v4619 = vlaneseq
    %v4620 = vshrl.u32 %v4619, 7
    %v4621 = vsub.s32 0, %v4620
    %v4622 = vrot.slane %v4609, %v4621
    %v4623 = vlaneseq
    %v4624 = vshrl.u32 %v4623, 7
    %v4625 = vsub.s32 0, %v4624
    %v4626 = vrot.slane %v4610, %v4625
    %v4631 = vadd.f32 %v4614, %v4055
    %v4632 = vadd.f32 %v4614, %v4060
    %v4633 = vadd.f32 %v4618, %v4055
    %v4634 = vadd.f32 %v4618, %v4060
    %v4635 = vadd.f32 %v4622, %v4055
    %v4636 = vadd.f32 %v4622, %v4060
    %v4637 = vadd.f32 %v4626, %v4055
    %v4638 = vadd.f32 %v4626, %v4060
    %v4639 = vtanh.pop %v4631
    %v4640 = vtanh.pop %v4632
    %v4641 = vtanh.pop %v4633
    %v4642 = vtanh.pop %v4634
    %v4643 = vtanh.pop %v4635
    %v4644 = vtanh.pop %v4636
    %v4645 = vtanh.pop %v4637
    %v4646 = vtanh.pop %v4638
    %v4647 = vmul.f32 %v4639, %v4212
    %v4648 = vmul.f32 %v4640, %v4212
    %v4649 = vmul.f32 %v4641, %v4212
    %v4650 = vmul.f32 %v4642, %v4212
    %v4651 = vmul.f32 %v4643, %v4212
    %v4652 = vmul.f32 %v4644, %v4212
    %v4653 = vmul.f32 %v4645, %v4212
    %v4654 = vmul.f32 %v4646, %v4212
    %vm4655 = vcmask 130053
    %v4656 = vsel %vm4655, %v4647, 0.0
    %4657 = vadd.xlane.f32.xlu0 %v4656
    %v4658 = vpop.xlane.xlu0 %4657
    %vm4659 = vcmask 123904
    %v4660 = vsel %vm4659, %v4648, 0.0
    %4661 = vadd.xlane.f32.xlu0 %v4660
    %v4662 = vpop.xlane.xlu0 %4661
    %v4663 = vsel %vm4655, %v4649, 0.0
    %4664 = vadd.xlane.f32.xlu0 %v4663
    %v4665 = vpop.xlane.xlu0 %4664
    %v4666 = vsel %vm4659, %v4650, 0.0
    %4667 = vadd.xlane.f32.xlu0 %v4666
    %v4668 = vpop.xlane.xlu0 %4667
    %v4669 = vsel %vm4655, %v4651, 0.0
    %4670 = vadd.xlane.f32.xlu0 %v4669
    %v4671 = vpop.xlane.xlu0 %4670
    %v4672 = vsel %vm4659, %v4652, 0.0
    %4673 = vadd.xlane.f32.xlu0 %v4672
    %v4674 = vpop.xlane.xlu0 %4673
    %v4675 = vsel %vm4655, %v4653, 0.0
    %4676 = vadd.xlane.f32.xlu0 %v4675
    %v4677 = vpop.xlane.xlu0 %4676
    %v4678 = vsel %vm4659, %v4654, 0.0
    %4679 = vadd.xlane.f32.xlu0 %v4678
    %v4680 = vpop.xlane.xlu0 %4679
    %v4689 = vadd.s32 %v117, 5
    %v4690 = vlaneseq
    %v4691 = vshrl.u32 %v4690, 7
    %v4692 = vsub.s32 %v4689, %v4691
    %v4693 = vrot.slane %v4658, %v4692
    %v4694 = vadd.s32 %v117, 4294967293
    %v4695 = vlaneseq
    %v4696 = vshrl.u32 %v4695, 7
    %v4697 = vsub.s32 %v4694, %v4696
    %v4698 = vrot.slane %v4662, %v4697
    %vm4699 = vcmask 89112
    %v4700 = vsel %vm4699, %v4698, %v4693
    %v4701 = vlaneseq
    %v4702 = vshrl.u32 %v4701, 7
    %v4703 = vsub.s32 %v4689, %v4702
    %v4704 = vrot.slane %v4665, %v4703
    %v4705 = vlaneseq
    %v4706 = vshrl.u32 %v4705, 7
    %v4707 = vsub.s32 %v4694, %v4706
    %v4708 = vrot.slane %v4668, %v4707
    %v4709 = vsel %vm4699, %v4708, %v4704
    %v4710 = vlaneseq
    %v4711 = vshrl.u32 %v4710, 7
    %v4712 = vsub.s32 %v4689, %v4711
    %v4713 = vrot.slane %v4671, %v4712
    %v4714 = vlaneseq
    %v4715 = vshrl.u32 %v4714, 7
    %v4716 = vsub.s32 %v4694, %v4715
    %v4717 = vrot.slane %v4674, %v4716
    %v4718 = vsel %vm4699, %v4717, %v4713
    %v4719 = vlaneseq
    %v4720 = vshrl.u32 %v4719, 7
    %v4721 = vsub.s32 %v4689, %v4720
    %v4722 = vrot.slane %v4677, %v4721
    %v4723 = vlaneseq
    %v4724 = vshrl.u32 %v4723, 7
    %v4725 = vsub.s32 %v4694, %v4724
    %v4726 = vrot.slane %v4680, %v4725
    %v4727 = vsel %vm4699, %v4726, %v4722
    %v4728 = vsel %vm4251, %v4709, %v4700
    %v4729 = vsel %vm4253, %v4718, %v4728
    %v4730 = vsel %vm4255, %v4727, %v4729
    %v4732 = vsel %vm4510, %v4730, -1e+18
    %v4733 = vsel %vm4259, %v4732, -inf
    %4734 = vmax.xlane.f32.xlu0 %v4733
    %v4735 = vpop.xlane.xlu0 %4734
    %v4736 = vsub.f32 %v4732, %v4735
    %v4737 = vmul.f32 %v4736, 1.442695
    %v4738 = vpow.pop %v4737
    %v4739 = vsel %vm4259, %v4738, 0.0
    %4740 = vadd.xlane.f32.xlu0 %v4739
    %v4741 = vpop.xlane.xlu0 %4740
    %v4742 = vrcp.pop %v4741
    %v4743 = vmul.f32 %v4738, %v4742
    %v4745 = vrot.slane %v4055, 5
    %v4746 = vrot.slane %v4060, 5
    %v4747 = vsel %vm1385, %v4745, %v4746
    %v4749 = vsel %vm4271, %v4743, 0
    %v4751 = vsel %vm949, %v4747, 0
    %4753 = vmatprep.subr.mxu0 0.0
    %4754 = vmatpush1.msra.mxu0 %v4751
    %4755 = vmatprep.subr.mxu0 0.0
    %4756 = vmatpush1.msra.mxu0 0.0
    %4757 = vmatprep.subr.mxu0 0.0
    %4758 = vmatpush1.msra.mxu0 0.0
    %4759 = vmatprep.subr.mxu0 0.0
    %4760 = vmatpush1.msra.mxu0 0.0
    %4761 = vmatprep.subr.mxu0 0.0
    %4762 = vmatpush1.msra.mxu0 0.0
    %4763 = vmatprep.subr.mxu0 0.0
    %4764 = vmatpush1.msra.mxu0 0.0
    %4765 = vmatprep.subr.mxu0 0.0
    %4766 = vmatpush1.msra.mxu0 0.0
    %4767 = vmatprep.subr.mxu0 0.0
    %4768 = vmatpush1.msra.mxu0 0.0
    %4769 = vmatprep.subr.mxu0 0.0
    %4770 = vmatpush1.msra.mxu0 0.0
    %4771 = vmatprep.subr.mxu0 0.0
    %4772 = vmatpush1.msra.mxu0 0.0
    %4773 = vmatprep.subr.mxu0 0.0
    %4774 = vmatpush1.msra.mxu0 0.0
    %4775 = vmatprep.subr.mxu0 0.0
    %4776 = vmatpush1.msra.mxu0 0.0
    %4777 = vmatprep.subr.mxu0 0.0
    %4778 = vmatpush1.msra.mxu0 0.0
    %4779 = vmatprep.subr.mxu0 0.0
    %4780 = vmatpush1.msra.mxu0 0.0
    %4781 = vmatprep.subr.mxu0 0.0
    %4782 = vmatpush1.msra.mxu0 0.0
    %4783 = vmatprep.subr.mxu0 0.0
    %4784 = vmatpush1.msra.mxu0 0.0
    %4785 = vmatprep.subr.mxu0 0.0
    %4786 = vmatpush1.msra.mxu0 0.0
    %4787 = vmatprep.subr.mxu0 0.0
    %4788 = vmatpush1.msra.mxu0 0.0
    %4789 = vmatprep.subr.mxu0 0.0
    %4790 = vmatpush1.msra.mxu0 0.0
    %4791 = vmatprep.subr.mxu0 0.0
    %4792 = vmatpush1.msra.mxu0 0.0
    %4793 = vmatprep.subr.mxu0 0.0
    %4794 = vmatpush1.msra.mxu0 0.0
    %4795 = vmatprep.subr.mxu0 0.0
    %4796 = vmatpush1.msra.mxu0 0.0
    %4797 = vmatprep.subr.mxu0 0.0
    %4798 = vmatpush1.msra.mxu0 0.0
    %4799 = vmatprep.subr.mxu0 0.0
    %4800 = vmatpush1.msra.mxu0 0.0
    %4801 = vmatprep.subr.mxu0 0.0
    %4802 = vmatpush1.msra.mxu0 0.0
    %4803 = vmatprep.subr.mxu0 0.0
    %4804 = vmatpush1.msra.mxu0 0.0
    %4805 = vmatprep.subr.mxu0 0.0
    %4806 = vmatpush1.msra.mxu0 0.0
    %4807 = vmatprep.subr.mxu0 0.0
    %4808 = vmatpush1.msra.mxu0 0.0
    %4809 = vmatprep.subr.mxu0 0.0
    %4810 = vmatpush1.msra.mxu0 0.0
    %4811 = vmatprep.subr.mxu0 0.0
    %4812 = vmatpush1.msra.mxu0 0.0
    %4813 = vmatprep.subr.mxu0 0.0
    %4814 = vmatpush1.msra.mxu0 0.0
    %4815 = vmatprep.subr.mxu0 0.0
    %4816 = vmatpush1.msra.mxu0 0.0
    %4817 = vmatprep.mubr.f32.mxu0 0.0
    %4818 = vmatmul.mubr.f32.gmra.mrb[0].mxu0 %v4749
    %v4819 = vpop.f32.mrb[0].mxu0
    %v4820 = vadd.f32 0.0, %v4819
    %v4821 = vpop.f32.mrb[0].mxu0
    %4822 = vdwg.mxu0
    %v4824 = vsel %vm2412, %v4820, 0
    %4826 = vmatprep.subr.mxu0 0.0
    %4827 = vmatpush1.msra.mxu0 %v4348
    %4828 = vmatprep.subr.mxu0 0.0
    %4829 = vmatpush1.msra.mxu0 %v4349
    %4830 = vmatprep.subr.mxu0 0.0
    %4831 = vmatpush1.msra.mxu0 0.0
    %4832 = vmatprep.subr.mxu0 0.0
    %4833 = vmatpush1.msra.mxu0 0.0
    %4834 = vmatprep.subr.mxu0 0.0
    %4835 = vmatpush1.msra.mxu0 0.0
    %4836 = vmatprep.subr.mxu0 0.0
    %4837 = vmatpush1.msra.mxu0 0.0
    %4838 = vmatprep.subr.mxu0 0.0
    %4839 = vmatpush1.msra.mxu0 0.0
    %4840 = vmatprep.subr.mxu0 0.0
    %4841 = vmatpush1.msra.mxu0 0.0
    %4842 = vmatprep.subr.mxu0 0.0
    %4843 = vmatpush1.msra.mxu0 0.0
    %4844 = vmatprep.subr.mxu0 0.0
    %4845 = vmatpush1.msra.mxu0 0.0
    %4846 = vmatprep.subr.mxu0 0.0
    %4847 = vmatpush1.msra.mxu0 0.0
    %4848 = vmatprep.subr.mxu0 0.0
    %4849 = vmatpush1.msra.mxu0 0.0
    %4850 = vmatprep.subr.mxu0 0.0
    %4851 = vmatpush1.msra.mxu0 0.0
    %4852 = vmatprep.subr.mxu0 0.0
    %4853 = vmatpush1.msra.mxu0 0.0
    %4854 = vmatprep.subr.mxu0 0.0
    %4855 = vmatpush1.msra.mxu0 0.0
    %4856 = vmatprep.subr.mxu0 0.0
    %4857 = vmatpush1.msra.mxu0 0.0
    %4858 = vmatprep.subr.mxu0 0.0
    %4859 = vmatpush1.msra.mxu0 0.0
    %4860 = vmatprep.subr.mxu0 0.0
    %4861 = vmatpush1.msra.mxu0 0.0
    %4862 = vmatprep.subr.mxu0 0.0
    %4863 = vmatpush1.msra.mxu0 0.0
    %4864 = vmatprep.subr.mxu0 0.0
    %4865 = vmatpush1.msra.mxu0 0.0
    %4866 = vmatprep.subr.mxu0 0.0
    %4867 = vmatpush1.msra.mxu0 0.0
    %4868 = vmatprep.subr.mxu0 0.0
    %4869 = vmatpush1.msra.mxu0 0.0
    %4870 = vmatprep.subr.mxu0 0.0
    %4871 = vmatpush1.msra.mxu0 0.0
    %4872 = vmatprep.subr.mxu0 0.0
    %4873 = vmatpush1.msra.mxu0 0.0
    %4874 = vmatprep.subr.mxu0 0.0
    %4875 = vmatpush1.msra.mxu0 0.0
    %4876 = vmatprep.subr.mxu0 0.0
    %4877 = vmatpush1.msra.mxu0 0.0
    %4878 = vmatprep.subr.mxu0 0.0
    %4879 = vmatpush1.msra.mxu0 0.0
    %4880 = vmatprep.subr.mxu0 0.0
    %4881 = vmatpush1.msra.mxu0 0.0
    %4882 = vmatprep.subr.mxu0 0.0
    %4883 = vmatpush1.msra.mxu0 0.0
    %4884 = vmatprep.subr.mxu0 0.0
    %4885 = vmatpush1.msra.mxu0 0.0
    %4886 = vmatprep.subr.mxu0 0.0
    %4887 = vmatpush1.msra.mxu0 0.0
    %4888 = vmatprep.subr.mxu0 0.0
    %4889 = vmatpush1.msra.mxu0 0.0
    %4890 = vmatprep.mubr.f32.mxu0 0.0
    %4891 = vmatmul.mubr.f32.gmra.mrb[0].mxu0 %v4824
    %v4892 = vpop.f32.mrb[0].mxu0
    %v4893 = vadd.f32 0.0, %v4892
    %v4894 = vpop.f32.mrb[0].mxu0
    %4895 = vdwg.mxu0
    %v4898 = vunpack.c.l.s4 1966171168
    %v4899 = vunpack.c.0.s8 %v4898
    %v4900 = vlaneseq
    %v4901 = vshrl.u32 %v4900, 7
    %v4902 = vsub.s32 %v4899, %v4901
    %v4903 = vrot.slane %v4893, %v4902
    %v4904 = vcombine.high %v4903, %v4903
    %v4906 = vunpack.c.l.s4 1966171168
    %v4907 = vunpack.c.0.s8 %v4906
    %v4908 = vlaneseq
    %v4909 = vshrl.u32 %v4908, 7
    %v4910 = vsub.s32 %v4907, %v4909
    %v4911 = vrot.slane %v4903, %v4910
    %v4913 = vunpack.c.l.s4 1966171168
    %v4914 = vunpack.c.0.s8 %v4913
    %v4915 = vlaneseq
    %v4916 = vshrl.u32 %v4915, 7
    %v4917 = vsub.s32 %v4914, %v4916
    %v4918 = vrot.slane %v4904, %v4917
    %v4919 = vcombine.high %v4911, %v4911
    %v4920 = vcombine.high %v4918, %v4918
    %v4921 = vlaneseq
    %v4922 = vshrl.u32 %v4921, 7
    %v4923 = vsub.s32 0, %v4922
    %v4924 = vrot.slane %v4911, %v4923
    %v4925 = vlaneseq
    %v4926 = vshrl.u32 %v4925, 7
    %v4927 = vsub.s32 0, %v4926
    %v4928 = vrot.slane %v4918, %v4927
    %v4929 = vlaneseq
    %v4930 = vshrl.u32 %v4929, 7
    %v4931 = vsub.s32 0, %v4930
    %v4932 = vrot.slane %v4919, %v4931
    %v4933 = vlaneseq
    %v4934 = vshrl.u32 %v4933, 7
    %v4935 = vsub.s32 0, %v4934
    %v4936 = vrot.slane %v4920, %v4935
    %v4941 = vadd.f32 %v4924, %v3976
    %v4942 = vadd.f32 %v4924, %v3981
    %v4943 = vadd.f32 %v4928, %v3976
    %v4944 = vadd.f32 %v4928, %v3981
    %v4945 = vadd.f32 %v4932, %v3976
    %v4946 = vadd.f32 %v4932, %v3981
    %v4947 = vadd.f32 %v4936, %v3976
    %v4948 = vadd.f32 %v4936, %v3981
    %v4949 = vtanh.pop %v4941
    %v4950 = vtanh.pop %v4942
    %v4951 = vtanh.pop %v4943
    %v4952 = vtanh.pop %v4944
    %v4953 = vtanh.pop %v4945
    %v4954 = vtanh.pop %v4946
    %v4955 = vtanh.pop %v4947
    %v4956 = vtanh.pop %v4948
    %v4957 = vmul.f32 %v4949, %v4480
    %v4958 = vmul.f32 %v4950, %v4480
    %v4959 = vmul.f32 %v4951, %v4480
    %v4960 = vmul.f32 %v4952, %v4480
    %v4961 = vmul.f32 %v4953, %v4480
    %v4962 = vmul.f32 %v4954, %v4480
    %v4963 = vmul.f32 %v4955, %v4480
    %v4964 = vmul.f32 %v4956, %v4480
    %v4965 = vsel %vm4655, %v4957, 0.0
    %4966 = vadd.xlane.f32.xlu0 %v4965
    %v4967 = vpop.xlane.xlu0 %4966
    %v4968 = vsel %vm4659, %v4958, 0.0
    %4969 = vadd.xlane.f32.xlu0 %v4968
    %v4970 = vpop.xlane.xlu0 %4969
    %v4971 = vsel %vm4655, %v4959, 0.0
    %4972 = vadd.xlane.f32.xlu0 %v4971
    %v4973 = vpop.xlane.xlu0 %4972
    %v4974 = vsel %vm4659, %v4960, 0.0
    %4975 = vadd.xlane.f32.xlu0 %v4974
    %v4976 = vpop.xlane.xlu0 %4975
    %v4977 = vsel %vm4655, %v4961, 0.0
    %4978 = vadd.xlane.f32.xlu0 %v4977
    %v4979 = vpop.xlane.xlu0 %4978
    %v4980 = vsel %vm4659, %v4962, 0.0
    %4981 = vadd.xlane.f32.xlu0 %v4980
    %v4982 = vpop.xlane.xlu0 %4981
    %v4983 = vsel %vm4655, %v4963, 0.0
    %4984 = vadd.xlane.f32.xlu0 %v4983
    %v4985 = vpop.xlane.xlu0 %4984
    %v4986 = vsel %vm4659, %v4964, 0.0
    %4987 = vadd.xlane.f32.xlu0 %v4986
    %v4988 = vpop.xlane.xlu0 %4987
    %v4993 = vlaneseq
    %v4994 = vshrl.u32 %v4993, 7
    %v4995 = vsub.s32 %v117, %v4994
    %v4996 = vrot.slane %v4488, %v4995
    %v4997 = vlaneseq
    %v4998 = vshrl.u32 %v4997, 7
    %v4999 = vsub.s32 %v117, %v4998
    %v5000 = vrot.slane %v4491, %v4999
    %v5001 = vlaneseq
    %v5002 = vshrl.u32 %v5001, 7
    %v5003 = vsub.s32 %v117, %v5002
    %v5004 = vrot.slane %v4494, %v5003
    %v5005 = vlaneseq
    %v5006 = vshrl.u32 %v5005, 7
    %v5007 = vsub.s32 %v117, %v5006
    %v5008 = vrot.slane %v4497, %v5007
    %v5009 = vsel %vm4251, %v5000, %v4996
    %v5010 = vsel %vm4253, %v5004, %v5009
    %v5011 = vsel %vm4255, %v5008, %v5010
    %v5021 = vlaneseq
    %v5022 = vshrl.u32 %v5021, 7
    %v5023 = vsub.s32 %v4689, %v5022
    %v5024 = vrot.slane %v4967, %v5023
    %v5025 = vlaneseq
    %v5026 = vshrl.u32 %v5025, 7
    %v5027 = vsub.s32 %v4694, %v5026
    %v5028 = vrot.slane %v4970, %v5027
    %v5029 = vsel %vm4699, %v5028, %v5024
    %v5030 = vlaneseq
    %v5031 = vshrl.u32 %v5030, 7
    %v5032 = vsub.s32 %v4689, %v5031
    %v5033 = vrot.slane %v4973, %v5032
    %v5034 = vlaneseq
    %v5035 = vshrl.u32 %v5034, 7
    %v5036 = vsub.s32 %v4694, %v5035
    %v5037 = vrot.slane %v4976, %v5036
    %v5038 = vsel %vm4699, %v5037, %v5033
    %v5039 = vlaneseq
    %v5040 = vshrl.u32 %v5039, 7
    %v5041 = vsub.s32 %v4689, %v5040
    %v5042 = vrot.slane %v4979, %v5041
    %v5043 = vlaneseq
    %v5044 = vshrl.u32 %v5043, 7
    %v5045 = vsub.s32 %v4694, %v5044
    %v5046 = vrot.slane %v4982, %v5045
    %v5047 = vsel %vm4699, %v5046, %v5042
    %v5048 = vlaneseq
    %v5049 = vshrl.u32 %v5048, 7
    %v5050 = vsub.s32 %v4689, %v5049
    %v5051 = vrot.slane %v4985, %v5050
    %v5052 = vlaneseq
    %v5053 = vshrl.u32 %v5052, 7
    %v5054 = vsub.s32 %v4694, %v5053
    %v5055 = vrot.slane %v4988, %v5054
    %v5056 = vsel %vm4699, %v5055, %v5051
    %vm5057 = vcmask 1045509
    %v5058 = vsel %vm5057, %v5038, %v5029
    %vm5059 = vcmask 1046534
    %v5060 = vsel %vm5059, %v5047, %v5058
    %vm5061 = vcmask 1047559
    %v5062 = vsel %vm5061, %v5056, %v5060
    %v5064 = vsel %vm249, %v5011, %v5062
    %5065 = vst.msk [vmem:[#allocation8] sm:$0xff] %vm4271, %v5064
    // Predicated region
    $region106: #{ptr_extract_summ_forward.1} parent=1 // pred_check
      _
    $region107: #{ptr_extract_summ_forward.1} parent=1 // pred_check_branch
      %5067 = sbr.rel (0) target = $region109
    $region108: #{ptr_extract_summ_forward.1} parent=1 // pred_region
      %s5069 = ssub.s32 128, 128
      %5070 = vsyncadd [#allocation4], %s5069
      %s5072 = sshll.u32 [#allocation8], 4
      %s5073 = int_to_ptr.vmem [resolvable:$true] %s5072
      %5075 = dma.vmem_to_hbm [thread:$0]  %s5073, 128, %s24, [#allocation4]
    $region109: #{ptr_extract_summ_forward.1} parent=1 // pred_fallthru
      _
    // Predicated region
    $region110: #{ptr_extract_summ_forward.1} parent=1 // pred_check
      _
    $region111: #{ptr_extract_summ_forward.1} parent=1 // pred_check_branch
      %5077 = sbr.rel (0) target = $region113
    $region112: #{ptr_extract_summ_forward.1} parent=1 // pred_region
      %5078 = dma.done [#allocation4], 128
    $region113: #{ptr_extract_summ_forward.1} parent=1 // pred_fallthru
      _
    %5079 = vsyncpa [#allocation4], 1
    %5080 = vsyncpa [#allocation5], 1
    %5081 = vsyncpa [#allocation7], 1

</llo_original>
